<compile_context>
chip_gen: v5e
topology: v5e:2x2
jax: 0.10.0
libtpu: 0.0.40
codegen_flags: <defaults>
</compile_context>

<pallas_src>
import math
import jax
import jax.numpy as jnp
from jax.experimental import pallas as pl

# ---------------- hyperparameters (small, consistent with the module) --------
B = 2          # batch
S = 8          # seq_max_len (segment_size=None -> no padding)
D = 32         # d_model
H = 4          # nhead
DH = D // H    # per-head dim
FF = 64        # dim_feedforward
DE = 16        # d_embedding
N_LAYERS = 2   # enc_layers (kept small)
EPS = 1e-5     # layer_norm_eps
BH = B * H     # fused batch*head dim used inside attention
N = B * S      # flattened token count


def _layernorm(x, gamma, beta, eps):
    mu = jnp.mean(x, axis=-1, keepdims=True)
    var = jnp.mean((x - mu) ** 2, axis=-1, keepdims=True)
    return (x - mu) * jax.lax.rsqrt(var + eps) * gamma + beta


# ---------------- fused Pallas kernel -----------------------------------------
def fused_forward_kernel(x_ref, pos_ref,
                         wq_ref, wk_ref, wv_ref, bq_ref, bk_ref, bv_ref,
                         wo_ref, bo_ref, g1_ref, be1_ref,
                         w1_ref, b1_ref, w2_ref, b2_ref, g2_ref, be2_ref,
                         rw1_ref, rb1_ref, rw2_ref, rb2_ref,
                         o_ref):
    scale = 1.0 / math.sqrt(DH)

    # TrainableEmbedding: src + learned positional embedding (dropout no-op).
    x = x_ref[...] + pos_ref[...]                              # (N, D) tokens

    for l in range(N_LAYERS):                                  # static unroll
        # ---- multi-head self-attention, batched over (B*H) -------------------
        # Replicate tokens per head (leading-dim only broadcast/reshape; the
        # per-head weight split was done at trace time, so no lane slicing).
        xh = jnp.broadcast_to(x.reshape(B, 1, S, D),
                              (B, H, S, D)).reshape(BH, S, D)
        q = jnp.einsum('nsd,nde->nse', xh, wq_ref[l],
                       preferred_element_type=jnp.float32) + bq_ref[l]
        k = jnp.einsum('nsd,nde->nse', xh, wk_ref[l],
                       preferred_element_type=jnp.float32) + bk_ref[l]
        v = jnp.einsum('nsd,nde->nse', xh, wv_ref[l],
                       preferred_element_type=jnp.float32) + bv_ref[l]

        s = jnp.einsum('nqe,nke->nqk', q, k,
                       preferred_element_type=jnp.float32) * scale   # (BH,S,S)
        m = jnp.max(s, axis=-1, keepdims=True)
        e = jnp.exp(s - m)
        p = e * pl.reciprocal(jnp.sum(e, axis=-1, keepdims=True), approx=True)
        ctx = jnp.einsum('nqk,nke->nqe', p, v,
                         preferred_element_type=jnp.float32)          # (BH,S,DH)

        # Concat-free output projection: per-head matmul, summed over heads
        # (sum over a leading axis -> plain VALU adds, no lane shuffles).
        proj = jnp.einsum('nqe,nef->nqf', ctx, wo_ref[l],
                          preferred_element_type=jnp.float32)         # (BH,S,D)
        attn = proj.reshape(B, H, S, D).sum(axis=1).reshape(N, D) + bo_ref[l]

        # ---- residual + LayerNorm1 (post-norm) --------------------------------
        x = _layernorm(x + attn, g1_ref[l], be1_ref[l], EPS)

        # ---- feed-forward: linear2(relu(linear1(x))) --------------------------
        hdd = jnp.maximum(
            jnp.dot(x, w1_ref[l], preferred_element_type=jnp.float32) + b1_ref[l],
            0.0)
        ff = jnp.dot(hdd, w2_ref[l], preferred_element_type=jnp.float32) + b2_ref[l]

        # ---- residual + LayerNorm2 --------------------------------------------
        x = _layernorm(x + ff, g2_ref[l], be2_ref[l], EPS)

    # ---- readout MLP on flattened (B, S*D): Linear -> ReLU -> Linear ----------
    # flat_x @ W1 == sum_s x[:, s, :] @ W1r[s]  (W1 reshaped to (S, D, DE) at
    # trace time), so no lane-crossing (N, D) -> (B, S*D) reshape in-kernel.
    x3 = x.reshape(B, S, D)
    h = jnp.zeros((B, DE), jnp.float32) + rb1_ref[...]
    for si in range(S):
        h = h + jnp.dot(x3[:, si, :], rw1_ref[si],
                        preferred_element_type=jnp.float32)
    h = jnp.maximum(h, 0.0)
    o_ref[...] = jnp.dot(h, rw2_ref[...],
                         preferred_element_type=jnp.float32) + rb2_ref[...]


# ---------------- trace-time weight re-layout (outside the kernel) ------------
def prepare_kernel_params(params):
    """Done once, outside the kernel:
       - positional embedding tiled token-major to (N, D)
       - Wq/Wk/Wv/Wo split per head (and tiled over B) so attention is a single
         batched-(B*H) einsum chain with no in-kernel lane slicing
       - readout W1 reshaped to (S, D, DE) to avoid an in-kernel flatten.
       All per-layer tensors are stacked with a leading layer axis."""
    pos2 = jnp.tile(params["pos"], (B, 1))                     # (N, D)

    def per_layer(lp):
        wq, wk, wv = (lp["wqkv"][:, :D], lp["wqkv"][:, D:2 * D], lp["wqkv"][:, 2 * D:])
        bq, bk, bv = (lp["bqkv"][0, :D], lp["bqkv"][0, D:2 * D], lp["bqkv"][0, 2 * D:])

        def heads(w):      # (D, D) -> (B*H, D, DH)
            return jnp.tile(jnp.transpose(w.reshape(D, H, DH), (1, 0, 2)), (B, 1, 1))

        def hbias(b_):     # (D,)   -> (B*H, 1, DH)
            return jnp.tile(b_.reshape(H, 1, DH), (B, 1, 1))

        return dict(
            wq=heads(wq), wk=heads(wk), wv=heads(wv),
            bq=hbias(bq), bk=hbias(bk), bv=hbias(bv),
            wo=jnp.tile(lp["wo"].reshape(H, DH, D), (B, 1, 1)),   # (B*H, DH, D)
            bo=lp["bo"], g1=lp["g1"], be1=lp["be1"],
            w1=lp["w1"], b1=lp["b1"], w2=lp["w2"], b2=lp["b2"],
            g2=lp["g2"], be2=lp["be2"])

    per = [per_layer(lp) for lp in params["layers"]]
    stacked = {k: jnp.stack([p[k] for p in per], axis=0) for k in per[0]}

    rp = params["readout"]
    kp = dict(pos=pos2,
              rw1=rp["w1"].reshape(S, D, DE), rb1=rp["b1"],
              rw2=rp["w2"], rb2=rp["b2"])
    kp.update(stacked)
    return kp


@jax.jit
def attention_transformer_encoder(src, kp):
    x2 = src.reshape(N, D)   # token-major; tile-aligned (no data movement)
    return pl.pallas_call(
        fused_forward_kernel,
        out_shape=jax.ShapeDtypeStruct((B, DE), jnp.float32),
    )(x2, kp["pos"],
      kp["wq"], kp["wk"], kp["wv"], kp["bq"], kp["bk"], kp["bv"],
      kp["wo"], kp["bo"], kp["g1"], kp["be1"],
      kp["w1"], kp["b1"], kp["w2"], kp["b2"], kp["g2"], kp["be2"],
      kp["rw1"], kp["rb1"], kp["rw2"], kp["rb2"])


# ---------------- pure-JAX reference (model semantics, f32) --------------------
def reference_forward(src, params):
    x = src + params["pos"][None]
    for lp in params["layers"]:
        qkv = x @ lp["wqkv"] + lp["bqkv"]
        q, k, v = qkv[..., :D], qkv[..., D:2 * D], qkv[..., 2 * D:]
        qh = q.reshape(B, S, H, DH).transpose(0, 2, 1, 3)
        kh = k.reshape(B, S, H, DH).transpose(0, 2, 1, 3)
        vh = v.reshape(B, S, H, DH).transpose(0, 2, 1, 3)
        s = jnp.einsum("bhqd,bhkd->bhqk", qh, kh) / math.sqrt(DH)
        p = jax.nn.softmax(s, axis=-1)
        o = jnp.einsum("bhqk,bhkd->bhqd", p, vh).transpose(0, 2, 1, 3).reshape(B, S, D)
        o = o @ lp["wo"] + lp["bo"]
        x = _layernorm(x + o, lp["g1"], lp["be1"], EPS)
        ff = jnp.maximum(x @ lp["w1"] + lp["b1"], 0.0) @ lp["w2"] + lp["b2"]
        x = _layernorm(x + ff, lp["g2"], lp["be2"], EPS)
    x = x.reshape(B, S * D)
    rp = params["readout"]
    h = jnp.maximum(x @ rp["w1"] + rp["b1"], 0.0)
    return h @ rp["w2"] + rp["b2"]


# ---------------- deterministic parameter init ---------------------------------
def init_params(key):
    def xavier(key, shape):
        fan_in, fan_out = shape[-2], shape[-1]
        lim = math.sqrt(6.0 / (fan_in + fan_out))
        return jax.random.uniform(key, shape, jnp.float32, -lim, lim)

    keys = iter(jax.random.split(key, 64))
    params = {"pos": 0.02 * jax.random.normal(next(keys), (S, D), jnp.float32)}
    layers = []
    for _ in range(N_LAYERS):
        layers.append({
            "wqkv": xavier(next(keys), (D, 3 * D)),
            "bqkv": jnp.zeros((1, 3 * D), jnp.float32),
            "wo":   xavier(next(keys), (D, D)),
            "bo":   jnp.zeros((1, D), jnp.float32),
            "g1":   jnp.ones((1, D), jnp.float32),
            "be1":  jnp.zeros((1, D), jnp.float32),
            "w1":   xavier(next(keys), (D, FF)),
            "b1":   jnp.zeros((1, FF), jnp.float32),
            "w2":   xavier(next(keys), (FF, D)),
            "b2":   jnp.zeros((1, D), jnp.float32),
            "g2":   jnp.ones((1, D), jnp.float32),
            "be2":  jnp.zeros((1, D), jnp.float32),
        })
    params["layers"] = layers
    params["readout"] = {
        "w1": xavier(next(keys), (S * D, DE)),
        "b1": jnp.zeros((1, DE), jnp.float32),
        "w2": xavier(next(keys), (DE, DE)),
        "b2": jnp.zeros((1, DE), jnp.float32),
    }
    return params


if __name__ == "__main__":
    key = jax.random.PRNGKey(0)
    k_x, k_p = jax.random.split(key)
    src = jax.random.normal(k_x, (B, S, D), jnp.float32)
    params = init_params(k_p)
    kparams = prepare_kernel_params(params)

    out = jax.block_until_ready(attention_transformer_encoder(src, kparams))
    ref = jax.block_until_ready(reference_forward(src, params))

    assert out.shape == (B, DE)
    assert bool(jnp.all(jnp.isfinite(out)))
    # The f32 matmul path matches the reference to ~1e-5; the tolerance is
    # deliberately relaxed because softmax uses the approximate EUP reciprocal
    # (pl.reciprocal(..., approx=True)) per the performance review.
    assert bool(jnp.max(jnp.abs(out - ref)) < 1e-2), "mismatch vs pure-JAX reference"

    print("KERNEL_OK")
</pallas_src>

<mosaic_0001>
module attributes {stable_mosaic.version = 11 : i64} {
  func.func @fused_forward_kernel(%arg0: memref<16x32xf32, #tpu.memory_space<vmem>>, %arg1: memref<16x32xf32, #tpu.memory_space<vmem>>, %arg2: memref<2x8x32x8xf32, #tpu.memory_space<vmem>>, %arg3: memref<2x8x32x8xf32, #tpu.memory_space<vmem>>, %arg4: memref<2x8x32x8xf32, #tpu.memory_space<vmem>>, %arg5: memref<2x8x1x8xf32, #tpu.memory_space<vmem>>, %arg6: memref<2x8x1x8xf32, #tpu.memory_space<vmem>>, %arg7: memref<2x8x1x8xf32, #tpu.memory_space<vmem>>, %arg8: memref<2x8x8x32xf32, #tpu.memory_space<vmem>>, %arg9: memref<2x1x32xf32, #tpu.memory_space<vmem>>, %arg10: memref<2x1x32xf32, #tpu.memory_space<vmem>>, %arg11: memref<2x1x32xf32, #tpu.memory_space<vmem>>, %arg12: memref<2x32x64xf32, #tpu.memory_space<vmem>>, %arg13: memref<2x1x64xf32, #tpu.memory_space<vmem>>, %arg14: memref<2x64x32xf32, #tpu.memory_space<vmem>>, %arg15: memref<2x1x32xf32, #tpu.memory_space<vmem>>, %arg16: memref<2x1x32xf32, #tpu.memory_space<vmem>>, %arg17: memref<2x1x32xf32, #tpu.memory_space<vmem>>, %arg18: memref<8x32x16xf32, #tpu.memory_space<vmem>>, %arg19: memref<1x16xf32, #tpu.memory_space<vmem>>, %arg20: memref<16x16xf32, #tpu.memory_space<vmem>>, %arg21: memref<1x16xf32, #tpu.memory_space<vmem>>, %arg22: memref<2x16xf32, #tpu.memory_space<vmem>>) attributes {dimension_semantics = [], scalar_prefetch = 0 : i64, scratch_operands = 0 : i64, tpu.core_type = #tpu.core_type<tc>} {
    %c0 = arith.constant 0 : index
    %c0_0 = arith.constant 0 : index
    %0 = vector.load %arg0[%c0, %c0_0] : memref<16x32xf32, #tpu.memory_space<vmem>>, vector<16x32xf32>
    %c0_1 = arith.constant 0 : index
    %c0_2 = arith.constant 0 : index
    %1 = vector.load %arg1[%c0_1, %c0_2] : memref<16x32xf32, #tpu.memory_space<vmem>>, vector<16x32xf32>
    %2 = arith.addf %0, %1 : vector<16x32xf32>
    %3 = vector.shape_cast %2 : vector<16x32xf32> to vector<2x1x8x32xf32>
    %4 = vector.shape_cast %3 : vector<2x1x8x32xf32> to vector<2x1x8x32xf32>
    %5 = vector.broadcast %4 : vector<2x1x8x32xf32> to vector<2x4x8x32xf32>
    %6 = vector.shape_cast %5 : vector<2x4x8x32xf32> to vector<8x8x32xf32>
    %c0_3 = arith.constant 0 : index
    %c0_4 = arith.constant 0 : index
    %c0_5 = arith.constant 0 : index
    %c0_6 = arith.constant 0 : index
    %7 = vector.load %arg2[%c0_3, %c0_4, %c0_5, %c0_6] : memref<2x8x32x8xf32, #tpu.memory_space<vmem>>, vector<1x8x32x8xf32>
    %8 = vector.shape_cast %7 : vector<1x8x32x8xf32> to vector<8x32x8xf32>
    "tpu.trace_start"() <{level = 10 : i32, message = "nsd,nde->nse"}> : () -> ()
    %cst = arith.constant dense<0.000000e+00> : vector<8x8x8xf32>
    %9 = tpu.matmul %6, %8, %cst {dimension_numbers = #tpu.dot_dimension_numbers<[2], [1], [1], [2], [0, 0, 0, 1, 1, 2], [0], [0]>} : vector<8x8x32xf32>, vector<8x32x8xf32>, vector<8x8x8xf32> -> vector<8x8x8xf32>
    "tpu.trace_stop"() : () -> ()
    %c0_7 = arith.constant 0 : index
    %c0_8 = arith.constant 0 : index
    %c0_9 = arith.constant 0 : index
    %c0_10 = arith.constant 0 : index
    %10 = vector.load %arg5[%c0_7, %c0_8, %c0_9, %c0_10] : memref<2x8x1x8xf32, #tpu.memory_space<vmem>>, vector<1x8x1x8xf32>
    %11 = vector.shape_cast %10 : vector<1x8x1x8xf32> to vector<8x1x8xf32>
    %12 = vector.broadcast %11 : vector<8x1x8xf32> to vector<8x8x8xf32>
    %13 = arith.addf %9, %12 : vector<8x8x8xf32>
    %c0_11 = arith.constant 0 : index
    %c0_12 = arith.constant 0 : index
    %c0_13 = arith.constant 0 : index
    %c0_14 = arith.constant 0 : index
    %14 = vector.load %arg3[%c0_11, %c0_12, %c0_13, %c0_14] : memref<2x8x32x8xf32, #tpu.memory_space<vmem>>, vector<1x8x32x8xf32>
    %15 = vector.shape_cast %14 : vector<1x8x32x8xf32> to vector<8x32x8xf32>
    "tpu.trace_start"() <{level = 10 : i32, message = "nsd,nde->nse"}> : () -> ()
    %cst_15 = arith.constant dense<0.000000e+00> : vector<8x8x8xf32>
    %16 = tpu.matmul %6, %15, %cst_15 {dimension_numbers = #tpu.dot_dimension_numbers<[2], [1], [1], [2], [0, 0, 0, 1, 1, 2], [0], [0]>} : vector<8x8x32xf32>, vector<8x32x8xf32>, vector<8x8x8xf32> -> vector<8x8x8xf32>
    "tpu.trace_stop"() : () -> ()
    %c0_16 = arith.constant 0 : index
    %c0_17 = arith.constant 0 : index
    %c0_18 = arith.constant 0 : index
    %c0_19 = arith.constant 0 : index
    %17 = vector.load %arg6[%c0_16, %c0_17, %c0_18, %c0_19] : memref<2x8x1x8xf32, #tpu.memory_space<vmem>>, vector<1x8x1x8xf32>
    %18 = vector.shape_cast %17 : vector<1x8x1x8xf32> to vector<8x1x8xf32>
    %19 = vector.broadcast %18 : vector<8x1x8xf32> to vector<8x8x8xf32>
    %20 = arith.addf %16, %19 : vector<8x8x8xf32>
    %c0_20 = arith.constant 0 : index
    %c0_21 = arith.constant 0 : index
    %c0_22 = arith.constant 0 : index
    %c0_23 = arith.constant 0 : index
    %21 = vector.load %arg4[%c0_20, %c0_21, %c0_22, %c0_23] : memref<2x8x32x8xf32, #tpu.memory_space<vmem>>, vector<1x8x32x8xf32>
    %22 = vector.shape_cast %21 : vector<1x8x32x8xf32> to vector<8x32x8xf32>
    "tpu.trace_start"() <{level = 10 : i32, message = "nsd,nde->nse"}> : () -> ()
    %cst_24 = arith.constant dense<0.000000e+00> : vector<8x8x8xf32>
    %23 = tpu.matmul %6, %22, %cst_24 {dimension_numbers = #tpu.dot_dimension_numbers<[2], [1], [1], [2], [0, 0, 0, 1, 1, 2], [0], [0]>} : vector<8x8x32xf32>, vector<8x32x8xf32>, vector<8x8x8xf32> -> vector<8x8x8xf32>
    "tpu.trace_stop"() : () -> ()
    %c0_25 = arith.constant 0 : index
    %c0_26 = arith.constant 0 : index
    %c0_27 = arith.constant 0 : index
    %c0_28 = arith.constant 0 : index
    %24 = vector.load %arg7[%c0_25, %c0_26, %c0_27, %c0_28] : memref<2x8x1x8xf32, #tpu.memory_space<vmem>>, vector<1x8x1x8xf32>
    %25 = vector.shape_cast %24 : vector<1x8x1x8xf32> to vector<8x1x8xf32>
    %26 = vector.broadcast %25 : vector<8x1x8xf32> to vector<8x8x8xf32>
    %27 = arith.addf %23, %26 : vector<8x8x8xf32>
    "tpu.trace_start"() <{level = 10 : i32, message = "nqe,nke->nqk"}> : () -> ()
    %cst_29 = arith.constant dense<0.000000e+00> : vector<8x8x8xf32>
    %28 = tpu.matmul %13, %20, %cst_29 {dimension_numbers = #tpu.dot_dimension_numbers<[2], [2], [1], [1], [0, 0, 0, 1, 1, 1], [0], [0]>} : vector<8x8x8xf32>, vector<8x8x8xf32>, vector<8x8x8xf32> -> vector<8x8x8xf32>
    "tpu.trace_stop"() : () -> ()
    %cst_30 = arith.constant 0.353553385 : f32
    %29 = vector.broadcast %cst_30 : f32 to vector<8x8x8xf32>
    %30 = arith.mulf %28, %29 : vector<8x8x8xf32>
    %cst_31 = arith.constant dense<0xFF800000> : vector<8x8xf32>
    %31 = vector.multi_reduction <maximumf>, %30, %cst_31 [2] : vector<8x8x8xf32> to vector<8x8xf32>
    %32 = vector.shape_cast %31 : vector<8x8xf32> to vector<8x8x1xf32>
    %33 = vector.broadcast %32 : vector<8x8x1xf32> to vector<8x8x8xf32>
    %34 = arith.subf %30, %33 : vector<8x8x8xf32>
    %35 = math.exp %34 : vector<8x8x8xf32>
    %cst_32 = arith.constant dense<0.000000e+00> : vector<8x8xf32>
    %36 = vector.multi_reduction <add>, %35, %cst_32 [2] : vector<8x8x8xf32> to vector<8x8xf32>
    %37 = vector.shape_cast %36 : vector<8x8xf32> to vector<8x8x1xf32>
    %38 = tpu.reciprocal %37 {approx = true} : vector<8x8x1xf32> -> vector<8x8x1xf32>
    %39 = vector.broadcast %38 : vector<8x8x1xf32> to vector<8x8x8xf32>
    %40 = arith.mulf %35, %39 : vector<8x8x8xf32>
    "tpu.trace_start"() <{level = 10 : i32, message = "nqk,nke->nqe"}> : () -> ()
    %cst_33 = arith.constant dense<0.000000e+00> : vector<8x8x8xf32>
    %41 = tpu.matmul %40, %27, %cst_33 {dimension_numbers = #tpu.dot_dimension_numbers<[2], [1], [1], [2], [0, 0, 0, 1, 1, 2], [0], [0]>} : vector<8x8x8xf32>, vector<8x8x8xf32>, vector<8x8x8xf32> -> vector<8x8x8xf32>
    "tpu.trace_stop"() : () -> ()
    %c0_34 = arith.constant 0 : index
    %c0_35 = arith.constant 0 : index
    %c0_36 = arith.constant 0 : index
    %c0_37 = arith.constant 0 : index
    %42 = vector.load %arg8[%c0_34, %c0_35, %c0_36, %c0_37] : memref<2x8x8x32xf32, #tpu.memory_space<vmem>>, vector<1x8x8x32xf32>
    %43 = vector.shape_cast %42 : vector<1x8x8x32xf32> to vector<8x8x32xf32>
    "tpu.trace_start"() <{level = 10 : i32, message = "nqe,nef->nqf"}> : () -> ()
    %cst_38 = arith.constant dense<0.000000e+00> : vector<8x8x32xf32>
    %44 = tpu.matmul %41, %43, %cst_38 {dimension_numbers = #tpu.dot_dimension_numbers<[2], [1], [1], [2], [0, 0, 0, 1, 1, 2], [0], [0]>} : vector<8x8x8xf32>, vector<8x8x32xf32>, vector<8x8x32xf32> -> vector<8x8x32xf32>
    "tpu.trace_stop"() : () -> ()
    %45 = vector.shape_cast %44 : vector<8x8x32xf32> to vector<2x4x8x32xf32>
    %cst_39 = arith.constant dense<0.000000e+00> : vector<2x8x32xf32>
    %46 = vector.multi_reduction <add>, %45, %cst_39 [1] : vector<2x4x8x32xf32> to vector<2x8x32xf32>
    %47 = vector.shape_cast %46 : vector<2x8x32xf32> to vector<16x32xf32>
    %c0_40 = arith.constant 0 : index
    %c0_41 = arith.constant 0 : index
    %c0_42 = arith.constant 0 : index
    %48 = vector.load %arg9[%c0_40, %c0_41, %c0_42] : memref<2x1x32xf32, #tpu.memory_space<vmem>>, vector<1x1x32xf32>
    %49 = vector.shape_cast %48 : vector<1x1x32xf32> to vector<1x32xf32>
    %50 = vector.broadcast %49 : vector<1x32xf32> to vector<16x32xf32>
    %51 = arith.addf %47, %50 : vector<16x32xf32>
    %52 = arith.addf %2, %51 : vector<16x32xf32>
    %c0_43 = arith.constant 0 : index
    %c0_44 = arith.constant 0 : index
    %c0_45 = arith.constant 0 : index
    %53 = vector.load %arg10[%c0_43, %c0_44, %c0_45] : memref<2x1x32xf32, #tpu.memory_space<vmem>>, vector<1x1x32xf32>
    %54 = vector.shape_cast %53 : vector<1x1x32xf32> to vector<1x32xf32>
    %c0_46 = arith.constant 0 : index
    %c0_47 = arith.constant 0 : index
    %c0_48 = arith.constant 0 : index
    %55 = vector.load %arg11[%c0_46, %c0_47, %c0_48] : memref<2x1x32xf32, #tpu.memory_space<vmem>>, vector<1x1x32xf32>
    %56 = vector.shape_cast %55 : vector<1x1x32xf32> to vector<1x32xf32>
    %cst_49 = arith.constant dense<0.000000e+00> : vector<16xf32>
    %57 = vector.multi_reduction <add>, %52, %cst_49 [1] : vector<16x32xf32> to vector<16xf32>
    %58 = vector.shape_cast %57 : vector<16xf32> to vector<16x1xf32>
    %cst_50 = arith.constant 3.200000e+01 : f32
    %59 = vector.broadcast %cst_50 : f32 to vector<16x1xf32>
    %60 = arith.divf %58, %59 : vector<16x1xf32>
    %61 = vector.broadcast %60 : vector<16x1xf32> to vector<16x32xf32>
    %62 = arith.subf %52, %61 : vector<16x32xf32>
    %63 = arith.mulf %62, %62 : vector<16x32xf32>
    %cst_51 = arith.constant dense<0.000000e+00> : vector<16xf32>
    %64 = vector.multi_reduction <add>, %63, %cst_51 [1] : vector<16x32xf32> to vector<16xf32>
    %65 = vector.shape_cast %64 : vector<16xf32> to vector<16x1xf32>
    %cst_52 = arith.constant 3.200000e+01 : f32
    %66 = vector.broadcast %cst_52 : f32 to vector<16x1xf32>
    %67 = arith.divf %65, %66 : vector<16x1xf32>
    %68 = vector.broadcast %60 : vector<16x1xf32> to vector<16x32xf32>
    %69 = arith.subf %52, %68 : vector<16x32xf32>
    %cst_53 = arith.constant 9.99999974E-6 : f32
    %70 = vector.broadcast %cst_53 : f32 to vector<16x1xf32>
    %71 = arith.addf %67, %70 : vector<16x1xf32>
    %72 = math.rsqrt %71 : vector<16x1xf32>
    %73 = vector.broadcast %72 : vector<16x1xf32> to vector<16x32xf32>
    %74 = arith.mulf %69, %73 : vector<16x32xf32>
    %75 = vector.broadcast %54 : vector<1x32xf32> to vector<16x32xf32>
    %76 = arith.mulf %74, %75 : vector<16x32xf32>
    %77 = vector.broadcast %56 : vector<1x32xf32> to vector<16x32xf32>
    %78 = arith.addf %76, %77 : vector<16x32xf32>
    %c0_54 = arith.constant 0 : index
    %c0_55 = arith.constant 0 : index
    %c0_56 = arith.constant 0 : index
    %79 = vector.load %arg12[%c0_54, %c0_55, %c0_56] : memref<2x32x64xf32, #tpu.memory_space<vmem>>, vector<1x32x64xf32>
    %80 = vector.shape_cast %79 : vector<1x32x64xf32> to vector<32x64xf32>
    %cst_57 = arith.constant dense<0.000000e+00> : vector<16x64xf32>
    %81 = tpu.matmul %78, %80, %cst_57 {dimension_numbers = #tpu.dot_dimension_numbers<[1], [0], [0], [1], [0, 0, 1, 1], [], []>} : vector<16x32xf32>, vector<32x64xf32>, vector<16x64xf32> -> vector<16x64xf32>
    %c0_58 = arith.constant 0 : index
    %c0_59 = arith.constant 0 : index
    %c0_60 = arith.constant 0 : index
    %82 = vector.load %arg13[%c0_58, %c0_59, %c0_60] : memref<2x1x64xf32, #tpu.memory_space<vmem>>, vector<1x1x64xf32>
    %83 = vector.shape_cast %82 : vector<1x1x64xf32> to vector<1x64xf32>
    %84 = vector.broadcast %83 : vector<1x64xf32> to vector<16x64xf32>
    %85 = arith.addf %81, %84 : vector<16x64xf32>
    %cst_61 = arith.constant 0.000000e+00 : f32
    %86 = vector.broadcast %cst_61 : f32 to vector<16x64xf32>
    %87 = arith.maximumf %85, %86 : vector<16x64xf32>
    %c0_62 = arith.constant 0 : index
    %c0_63 = arith.constant 0 : index
    %c0_64 = arith.constant 0 : index
    %88 = vector.load %arg14[%c0_62, %c0_63, %c0_64] : memref<2x64x32xf32, #tpu.memory_space<vmem>>, vector<1x64x32xf32>
    %89 = vector.shape_cast %88 : vector<1x64x32xf32> to vector<64x32xf32>
    %cst_65 = arith.constant dense<0.000000e+00> : vector<16x32xf32>
    %90 = tpu.matmul %87, %89, %cst_65 {dimension_numbers = #tpu.dot_dimension_numbers<[1], [0], [0], [1], [0, 0, 1, 1], [], []>} : vector<16x64xf32>, vector<64x32xf32>, vector<16x32xf32> -> vector<16x32xf32>
    %c0_66 = arith.constant 0 : index
    %c0_67 = arith.constant 0 : index
    %c0_68 = arith.constant 0 : index
    %91 = vector.load %arg15[%c0_66, %c0_67, %c0_68] : memref<2x1x32xf32, #tpu.memory_space<vmem>>, vector<1x1x32xf32>
    %92 = vector.shape_cast %91 : vector<1x1x32xf32> to vector<1x32xf32>
    %93 = vector.broadcast %92 : vector<1x32xf32> to vector<16x32xf32>
    %94 = arith.addf %90, %93 : vector<16x32xf32>
    %95 = arith.addf %78, %94 : vector<16x32xf32>
    %c0_69 = arith.constant 0 : index
    %c0_70 = arith.constant 0 : index
    %c0_71 = arith.constant 0 : index
    %96 = vector.load %arg16[%c0_69, %c0_70, %c0_71] : memref<2x1x32xf32, #tpu.memory_space<vmem>>, vector<1x1x32xf32>
    %97 = vector.shape_cast %96 : vector<1x1x32xf32> to vector<1x32xf32>
    %c0_72 = arith.constant 0 : index
    %c0_73 = arith.constant 0 : index
    %c0_74 = arith.constant 0 : index
    %98 = vector.load %arg17[%c0_72, %c0_73, %c0_74] : memref<2x1x32xf32, #tpu.memory_space<vmem>>, vector<1x1x32xf32>
    %99 = vector.shape_cast %98 : vector<1x1x32xf32> to vector<1x32xf32>
    %cst_75 = arith.constant dense<0.000000e+00> : vector<16xf32>
    %100 = vector.multi_reduction <add>, %95, %cst_75 [1] : vector<16x32xf32> to vector<16xf32>
    %101 = vector.shape_cast %100 : vector<16xf32> to vector<16x1xf32>
    %cst_76 = arith.constant 3.200000e+01 : f32
    %102 = vector.broadcast %cst_76 : f32 to vector<16x1xf32>
    %103 = arith.divf %101, %102 : vector<16x1xf32>
    %104 = vector.broadcast %103 : vector<16x1xf32> to vector<16x32xf32>
    %105 = arith.subf %95, %104 : vector<16x32xf32>
    %106 = arith.mulf %105, %105 : vector<16x32xf32>
    %cst_77 = arith.constant dense<0.000000e+00> : vector<16xf32>
    %107 = vector.multi_reduction <add>, %106, %cst_77 [1] : vector<16x32xf32> to vector<16xf32>
    %108 = vector.shape_cast %107 : vector<16xf32> to vector<16x1xf32>
    %cst_78 = arith.constant 3.200000e+01 : f32
    %109 = vector.broadcast %cst_78 : f32 to vector<16x1xf32>
    %110 = arith.divf %108, %109 : vector<16x1xf32>
    %111 = vector.broadcast %103 : vector<16x1xf32> to vector<16x32xf32>
    %112 = arith.subf %95, %111 : vector<16x32xf32>
    %cst_79 = arith.constant 9.99999974E-6 : f32
    %113 = vector.broadcast %cst_79 : f32 to vector<16x1xf32>
    %114 = arith.addf %110, %113 : vector<16x1xf32>
    %115 = math.rsqrt %114 : vector<16x1xf32>
    %116 = vector.broadcast %115 : vector<16x1xf32> to vector<16x32xf32>
    %117 = arith.mulf %112, %116 : vector<16x32xf32>
    %118 = vector.broadcast %97 : vector<1x32xf32> to vector<16x32xf32>
    %119 = arith.mulf %117, %118 : vector<16x32xf32>
    %120 = vector.broadcast %99 : vector<1x32xf32> to vector<16x32xf32>
    %121 = arith.addf %119, %120 : vector<16x32xf32>
    %122 = vector.shape_cast %121 : vector<16x32xf32> to vector<2x1x8x32xf32>
    %123 = vector.shape_cast %122 : vector<2x1x8x32xf32> to vector<2x1x8x32xf32>
    %124 = vector.broadcast %123 : vector<2x1x8x32xf32> to vector<2x4x8x32xf32>
    %125 = vector.shape_cast %124 : vector<2x4x8x32xf32> to vector<8x8x32xf32>
    %c1 = arith.constant 1 : index
    %c0_80 = arith.constant 0 : index
    %c0_81 = arith.constant 0 : index
    %c0_82 = arith.constant 0 : index
    %126 = vector.load %arg2[%c1, %c0_80, %c0_81, %c0_82] : memref<2x8x32x8xf32, #tpu.memory_space<vmem>>, vector<1x8x32x8xf32>
    %127 = vector.shape_cast %126 : vector<1x8x32x8xf32> to vector<8x32x8xf32>
    "tpu.trace_start"() <{level = 10 : i32, message = "nsd,nde->nse"}> : () -> ()
    %cst_83 = arith.constant dense<0.000000e+00> : vector<8x8x8xf32>
    %128 = tpu.matmul %125, %127, %cst_83 {dimension_numbers = #tpu.dot_dimension_numbers<[2], [1], [1], [2], [0, 0, 0, 1, 1, 2], [0], [0]>} : vector<8x8x32xf32>, vector<8x32x8xf32>, vector<8x8x8xf32> -> vector<8x8x8xf32>
    "tpu.trace_stop"() : () -> ()
    %c1_84 = arith.constant 1 : index
    %c0_85 = arith.constant 0 : index
    %c0_86 = arith.constant 0 : index
    %c0_87 = arith.constant 0 : index
    %129 = vector.load %arg5[%c1_84, %c0_85, %c0_86, %c0_87] : memref<2x8x1x8xf32, #tpu.memory_space<vmem>>, vector<1x8x1x8xf32>
    %130 = vector.shape_cast %129 : vector<1x8x1x8xf32> to vector<8x1x8xf32>
    %131 = vector.broadcast %130 : vector<8x1x8xf32> to vector<8x8x8xf32>
    %132 = arith.addf %128, %131 : vector<8x8x8xf32>
    %c1_88 = arith.constant 1 : index
    %c0_89 = arith.constant 0 : index
    %c0_90 = arith.constant 0 : index
    %c0_91 = arith.constant 0 : index
    %133 = vector.load %arg3[%c1_88, %c0_89, %c0_90, %c0_91] : memref<2x8x32x8xf32, #tpu.memory_space<vmem>>, vector<1x8x32x8xf32>
    %134 = vector.shape_cast %133 : vector<1x8x32x8xf32> to vector<8x32x8xf32>
    "tpu.trace_start"() <{level = 10 : i32, message = "nsd,nde->nse"}> : () -> ()
    %cst_92 = arith.constant dense<0.000000e+00> : vector<8x8x8xf32>
    %135 = tpu.matmul %125, %134, %cst_92 {dimension_numbers = #tpu.dot_dimension_numbers<[2], [1], [1], [2], [0, 0, 0, 1, 1, 2], [0], [0]>} : vector<8x8x32xf32>, vector<8x32x8xf32>, vector<8x8x8xf32> -> vector<8x8x8xf32>
    "tpu.trace_stop"() : () -> ()
    %c1_93 = arith.constant 1 : index
    %c0_94 = arith.constant 0 : index
    %c0_95 = arith.constant 0 : index
    %c0_96 = arith.constant 0 : index
    %136 = vector.load %arg6[%c1_93, %c0_94, %c0_95, %c0_96] : memref<2x8x1x8xf32, #tpu.memory_space<vmem>>, vector<1x8x1x8xf32>
    %137 = vector.shape_cast %136 : vector<1x8x1x8xf32> to vector<8x1x8xf32>
    %138 = vector.broadcast %137 : vector<8x1x8xf32> to vector<8x8x8xf32>
    %139 = arith.addf %135, %138 : vector<8x8x8xf32>
    %c1_97 = arith.constant 1 : index
    %c0_98 = arith.constant 0 : index
    %c0_99 = arith.constant 0 : index
    %c0_100 = arith.constant 0 : index
    %140 = vector.load %arg4[%c1_97, %c0_98, %c0_99, %c0_100] : memref<2x8x32x8xf32, #tpu.memory_space<vmem>>, vector<1x8x32x8xf32>
    %141 = vector.shape_cast %140 : vector<1x8x32x8xf32> to vector<8x32x8xf32>
    "tpu.trace_start"() <{level = 10 : i32, message = "nsd,nde->nse"}> : () -> ()
    %cst_101 = arith.constant dense<0.000000e+00> : vector<8x8x8xf32>
    %142 = tpu.matmul %125, %141, %cst_101 {dimension_numbers = #tpu.dot_dimension_numbers<[2], [1], [1], [2], [0, 0, 0, 1, 1, 2], [0], [0]>} : vector<8x8x32xf32>, vector<8x32x8xf32>, vector<8x8x8xf32> -> vector<8x8x8xf32>
    "tpu.trace_stop"() : () -> ()
    %c1_102 = arith.constant 1 : index
    %c0_103 = arith.constant 0 : index
    %c0_104 = arith.constant 0 : index
    %c0_105 = arith.constant 0 : index
    %143 = vector.load %arg7[%c1_102, %c0_103, %c0_104, %c0_105] : memref<2x8x1x8xf32, #tpu.memory_space<vmem>>, vector<1x8x1x8xf32>
    %144 = vector.shape_cast %143 : vector<1x8x1x8xf32> to vector<8x1x8xf32>
    %145 = vector.broadcast %144 : vector<8x1x8xf32> to vector<8x8x8xf32>
    %146 = arith.addf %142, %145 : vector<8x8x8xf32>
    "tpu.trace_start"() <{level = 10 : i32, message = "nqe,nke->nqk"}> : () -> ()
    %cst_106 = arith.constant dense<0.000000e+00> : vector<8x8x8xf32>
    %147 = tpu.matmul %132, %139, %cst_106 {dimension_numbers = #tpu.dot_dimension_numbers<[2], [2], [1], [1], [0, 0, 0, 1, 1, 1], [0], [0]>} : vector<8x8x8xf32>, vector<8x8x8xf32>, vector<8x8x8xf32> -> vector<8x8x8xf32>
    "tpu.trace_stop"() : () -> ()
    %cst_107 = arith.constant 0.353553385 : f32
    %148 = vector.broadcast %cst_107 : f32 to vector<8x8x8xf32>
    %149 = arith.mulf %147, %148 : vector<8x8x8xf32>
    %cst_108 = arith.constant dense<0xFF800000> : vector<8x8xf32>
    %150 = vector.multi_reduction <maximumf>, %149, %cst_108 [2] : vector<8x8x8xf32> to vector<8x8xf32>
    %151 = vector.shape_cast %150 : vector<8x8xf32> to vector<8x8x1xf32>
    %152 = vector.broadcast %151 : vector<8x8x1xf32> to vector<8x8x8xf32>
    %153 = arith.subf %149, %152 : vector<8x8x8xf32>
    %154 = math.exp %153 : vector<8x8x8xf32>
    %cst_109 = arith.constant dense<0.000000e+00> : vector<8x8xf32>
    %155 = vector.multi_reduction <add>, %154, %cst_109 [2] : vector<8x8x8xf32> to vector<8x8xf32>
    %156 = vector.shape_cast %155 : vector<8x8xf32> to vector<8x8x1xf32>
    %157 = tpu.reciprocal %156 {approx = true} : vector<8x8x1xf32> -> vector<8x8x1xf32>
    %158 = vector.broadcast %157 : vector<8x8x1xf32> to vector<8x8x8xf32>
    %159 = arith.mulf %154, %158 : vector<8x8x8xf32>
    "tpu.trace_start"() <{level = 10 : i32, message = "nqk,nke->nqe"}> : () -> ()
    %cst_110 = arith.constant dense<0.000000e+00> : vector<8x8x8xf32>
    %160 = tpu.matmul %159, %146, %cst_110 {dimension_numbers = #tpu.dot_dimension_numbers<[2], [1], [1], [2], [0, 0, 0, 1, 1, 2], [0], [0]>} : vector<8x8x8xf32>, vector<8x8x8xf32>, vector<8x8x8xf32> -> vector<8x8x8xf32>
    "tpu.trace_stop"() : () -> ()
    %c1_111 = arith.constant 1 : index
    %c0_112 = arith.constant 0 : index
    %c0_113 = arith.constant 0 : index
    %c0_114 = arith.constant 0 : index
    %161 = vector.load %arg8[%c1_111, %c0_112, %c0_113, %c0_114] : memref<2x8x8x32xf32, #tpu.memory_space<vmem>>, vector<1x8x8x32xf32>
    %162 = vector.shape_cast %161 : vector<1x8x8x32xf32> to vector<8x8x32xf32>
    "tpu.trace_start"() <{level = 10 : i32, message = "nqe,nef->nqf"}> : () -> ()
    %cst_115 = arith.constant dense<0.000000e+00> : vector<8x8x32xf32>
    %163 = tpu.matmul %160, %162, %cst_115 {dimension_numbers = #tpu.dot_dimension_numbers<[2], [1], [1], [2], [0, 0, 0, 1, 1, 2], [0], [0]>} : vector<8x8x8xf32>, vector<8x8x32xf32>, vector<8x8x32xf32> -> vector<8x8x32xf32>
    "tpu.trace_stop"() : () -> ()
    %164 = vector.shape_cast %163 : vector<8x8x32xf32> to vector<2x4x8x32xf32>
    %cst_116 = arith.constant dense<0.000000e+00> : vector<2x8x32xf32>
    %165 = vector.multi_reduction <add>, %164, %cst_116 [1] : vector<2x4x8x32xf32> to vector<2x8x32xf32>
    %166 = vector.shape_cast %165 : vector<2x8x32xf32> to vector<16x32xf32>
    %c1_117 = arith.constant 1 : index
    %c0_118 = arith.constant 0 : index
    %c0_119 = arith.constant 0 : index
    %167 = vector.load %arg9[%c1_117, %c0_118, %c0_119] : memref<2x1x32xf32, #tpu.memory_space<vmem>>, vector<1x1x32xf32>
    %168 = vector.shape_cast %167 : vector<1x1x32xf32> to vector<1x32xf32>
    %169 = vector.broadcast %168 : vector<1x32xf32> to vector<16x32xf32>
    %170 = arith.addf %166, %169 : vector<16x32xf32>
    %171 = arith.addf %121, %170 : vector<16x32xf32>
    %c1_120 = arith.constant 1 : index
    %c0_121 = arith.constant 0 : index
    %c0_122 = arith.constant 0 : index
    %172 = vector.load %arg10[%c1_120, %c0_121, %c0_122] : memref<2x1x32xf32, #tpu.memory_space<vmem>>, vector<1x1x32xf32>
    %173 = vector.shape_cast %172 : vector<1x1x32xf32> to vector<1x32xf32>
    %c1_123 = arith.constant 1 : index
    %c0_124 = arith.constant 0 : index
    %c0_125 = arith.constant 0 : index
    %174 = vector.load %arg11[%c1_123, %c0_124, %c0_125] : memref<2x1x32xf32, #tpu.memory_space<vmem>>, vector<1x1x32xf32>
    %175 = vector.shape_cast %174 : vector<1x1x32xf32> to vector<1x32xf32>
    %cst_126 = arith.constant dense<0.000000e+00> : vector<16xf32>
    %176 = vector.multi_reduction <add>, %171, %cst_126 [1] : vector<16x32xf32> to vector<16xf32>
    %177 = vector.shape_cast %176 : vector<16xf32> to vector<16x1xf32>
    %cst_127 = arith.constant 3.200000e+01 : f32
    %178 = vector.broadcast %cst_127 : f32 to vector<16x1xf32>
    %179 = arith.divf %177, %178 : vector<16x1xf32>
    %180 = vector.broadcast %179 : vector<16x1xf32> to vector<16x32xf32>
    %181 = arith.subf %171, %180 : vector<16x32xf32>
    %182 = arith.mulf %181, %181 : vector<16x32xf32>
    %cst_128 = arith.constant dense<0.000000e+00> : vector<16xf32>
    %183 = vector.multi_reduction <add>, %182, %cst_128 [1] : vector<16x32xf32> to vector<16xf32>
    %184 = vector.shape_cast %183 : vector<16xf32> to vector<16x1xf32>
    %cst_129 = arith.constant 3.200000e+01 : f32
    %185 = vector.broadcast %cst_129 : f32 to vector<16x1xf32>
    %186 = arith.divf %184, %185 : vector<16x1xf32>
    %187 = vector.broadcast %179 : vector<16x1xf32> to vector<16x32xf32>
    %188 = arith.subf %171, %187 : vector<16x32xf32>
    %cst_130 = arith.constant 9.99999974E-6 : f32
    %189 = vector.broadcast %cst_130 : f32 to vector<16x1xf32>
    %190 = arith.addf %186, %189 : vector<16x1xf32>
    %191 = math.rsqrt %190 : vector<16x1xf32>
    %192 = vector.broadcast %191 : vector<16x1xf32> to vector<16x32xf32>
    %193 = arith.mulf %188, %192 : vector<16x32xf32>
    %194 = vector.broadcast %173 : vector<1x32xf32> to vector<16x32xf32>
    %195 = arith.mulf %193, %194 : vector<16x32xf32>
    %196 = vector.broadcast %175 : vector<1x32xf32> to vector<16x32xf32>
    %197 = arith.addf %195, %196 : vector<16x32xf32>
    %c1_131 = arith.constant 1 : index
    %c0_132 = arith.constant 0 : index
    %c0_133 = arith.constant 0 : index
    %198 = vector.load %arg12[%c1_131, %c0_132, %c0_133] : memref<2x32x64xf32, #tpu.memory_space<vmem>>, vector<1x32x64xf32>
    %199 = vector.shape_cast %198 : vector<1x32x64xf32> to vector<32x64xf32>
    %cst_134 = arith.constant dense<0.000000e+00> : vector<16x64xf32>
    %200 = tpu.matmul %197, %199, %cst_134 {dimension_numbers = #tpu.dot_dimension_numbers<[1], [0], [0], [1], [0, 0, 1, 1], [], []>} : vector<16x32xf32>, vector<32x64xf32>, vector<16x64xf32> -> vector<16x64xf32>
    %c1_135 = arith.constant 1 : index
    %c0_136 = arith.constant 0 : index
    %c0_137 = arith.constant 0 : index
    %201 = vector.load %arg13[%c1_135, %c0_136, %c0_137] : memref<2x1x64xf32, #tpu.memory_space<vmem>>, vector<1x1x64xf32>
    %202 = vector.shape_cast %201 : vector<1x1x64xf32> to vector<1x64xf32>
    %203 = vector.broadcast %202 : vector<1x64xf32> to vector<16x64xf32>
    %204 = arith.addf %200, %203 : vector<16x64xf32>
    %cst_138 = arith.constant 0.000000e+00 : f32
    %205 = vector.broadcast %cst_138 : f32 to vector<16x64xf32>
    %206 = arith.maximumf %204, %205 : vector<16x64xf32>
    %c1_139 = arith.constant 1 : index
    %c0_140 = arith.constant 0 : index
    %c0_141 = arith.constant 0 : index
    %207 = vector.load %arg14[%c1_139, %c0_140, %c0_141] : memref<2x64x32xf32, #tpu.memory_space<vmem>>, vector<1x64x32xf32>
    %208 = vector.shape_cast %207 : vector<1x64x32xf32> to vector<64x32xf32>
    %cst_142 = arith.constant dense<0.000000e+00> : vector<16x32xf32>
    %209 = tpu.matmul %206, %208, %cst_142 {dimension_numbers = #tpu.dot_dimension_numbers<[1], [0], [0], [1], [0, 0, 1, 1], [], []>} : vector<16x64xf32>, vector<64x32xf32>, vector<16x32xf32> -> vector<16x32xf32>
    %c1_143 = arith.constant 1 : index
    %c0_144 = arith.constant 0 : index
    %c0_145 = arith.constant 0 : index
    %210 = vector.load %arg15[%c1_143, %c0_144, %c0_145] : memref<2x1x32xf32, #tpu.memory_space<vmem>>, vector<1x1x32xf32>
    %211 = vector.shape_cast %210 : vector<1x1x32xf32> to vector<1x32xf32>
    %212 = vector.broadcast %211 : vector<1x32xf32> to vector<16x32xf32>
    %213 = arith.addf %209, %212 : vector<16x32xf32>
    %214 = arith.addf %197, %213 : vector<16x32xf32>
    %c1_146 = arith.constant 1 : index
    %c0_147 = arith.constant 0 : index
    %c0_148 = arith.constant 0 : index
    %215 = vector.load %arg16[%c1_146, %c0_147, %c0_148] : memref<2x1x32xf32, #tpu.memory_space<vmem>>, vector<1x1x32xf32>
    %216 = vector.shape_cast %215 : vector<1x1x32xf32> to vector<1x32xf32>
    %c1_149 = arith.constant 1 : index
    %c0_150 = arith.constant 0 : index
    %c0_151 = arith.constant 0 : index
    %217 = vector.load %arg17[%c1_149, %c0_150, %c0_151] : memref<2x1x32xf32, #tpu.memory_space<vmem>>, vector<1x1x32xf32>
    %218 = vector.shape_cast %217 : vector<1x1x32xf32> to vector<1x32xf32>
    %cst_152 = arith.constant dense<0.000000e+00> : vector<16xf32>
    %219 = vector.multi_reduction <add>, %214, %cst_152 [1] : vector<16x32xf32> to vector<16xf32>
    %220 = vector.shape_cast %219 : vector<16xf32> to vector<16x1xf32>
    %cst_153 = arith.constant 3.200000e+01 : f32
    %221 = vector.broadcast %cst_153 : f32 to vector<16x1xf32>
    %222 = arith.divf %220, %221 : vector<16x1xf32>
    %223 = vector.broadcast %222 : vector<16x1xf32> to vector<16x32xf32>
    %224 = arith.subf %214, %223 : vector<16x32xf32>
    %225 = arith.mulf %224, %224 : vector<16x32xf32>
    %cst_154 = arith.constant dense<0.000000e+00> : vector<16xf32>
    %226 = vector.multi_reduction <add>, %225, %cst_154 [1] : vector<16x32xf32> to vector<16xf32>
    %227 = vector.shape_cast %226 : vector<16xf32> to vector<16x1xf32>
    %cst_155 = arith.constant 3.200000e+01 : f32
    %228 = vector.broadcast %cst_155 : f32 to vector<16x1xf32>
    %229 = arith.divf %227, %228 : vector<16x1xf32>
    %230 = vector.broadcast %222 : vector<16x1xf32> to vector<16x32xf32>
    %231 = arith.subf %214, %230 : vector<16x32xf32>
    %cst_156 = arith.constant 9.99999974E-6 : f32
    %232 = vector.broadcast %cst_156 : f32 to vector<16x1xf32>
    %233 = arith.addf %229, %232 : vector<16x1xf32>
    %234 = math.rsqrt %233 : vector<16x1xf32>
    %235 = vector.broadcast %234 : vector<16x1xf32> to vector<16x32xf32>
    %236 = arith.mulf %231, %235 : vector<16x32xf32>
    %237 = vector.broadcast %216 : vector<1x32xf32> to vector<16x32xf32>
    %238 = arith.mulf %236, %237 : vector<16x32xf32>
    %239 = vector.broadcast %218 : vector<1x32xf32> to vector<16x32xf32>
    %240 = arith.addf %238, %239 : vector<16x32xf32>
    %241 = vector.shape_cast %240 : vector<16x32xf32> to vector<2x8x32xf32>
    %cst_157 = arith.constant 0.000000e+00 : f32
    %242 = vector.broadcast %cst_157 : f32 to vector<2x16xf32>
    %c0_158 = arith.constant 0 : index
    %c0_159 = arith.constant 0 : index
    %243 = vector.load %arg19[%c0_158, %c0_159] : memref<1x16xf32, #tpu.memory_space<vmem>>, vector<1x16xf32>
    %244 = vector.broadcast %243 : vector<1x16xf32> to vector<2x16xf32>
    %245 = arith.addf %242, %244 : vector<2x16xf32>
    %246 = vector.extract_strided_slice %241 {offsets = [0, 0, 0], sizes = [2, 1, 32], strides = [1, 1, 1]} : vector<2x8x32xf32> to vector<2x1x32xf32>
    %247 = vector.shape_cast %246 : vector<2x1x32xf32> to vector<2x32xf32>
    %c0_160 = arith.constant 0 : index
    %c0_161 = arith.constant 0 : index
    %c0_162 = arith.constant 0 : index
    %248 = vector.load %arg18[%c0_160, %c0_161, %c0_162] : memref<8x32x16xf32, #tpu.memory_space<vmem>>, vector<1x32x16xf32>
    %249 = vector.shape_cast %248 : vector<1x32x16xf32> to vector<32x16xf32>
    %cst_163 = arith.constant dense<0.000000e+00> : vector<2x16xf32>
    %250 = tpu.matmul %247, %249, %cst_163 {dimension_numbers = #tpu.dot_dimension_numbers<[1], [0], [0], [1], [0, 0, 1, 1], [], []>} : vector<2x32xf32>, vector<32x16xf32>, vector<2x16xf32> -> vector<2x16xf32>
    %251 = arith.addf %245, %250 : vector<2x16xf32>
    %252 = vector.extract_strided_slice %241 {offsets = [0, 1, 0], sizes = [2, 1, 32], strides = [1, 1, 1]} : vector<2x8x32xf32> to vector<2x1x32xf32>
    %253 = vector.shape_cast %252 : vector<2x1x32xf32> to vector<2x32xf32>
    %c1_164 = arith.constant 1 : index
    %c0_165 = arith.constant 0 : index
    %c0_166 = arith.constant 0 : index
    %254 = vector.load %arg18[%c1_164, %c0_165, %c0_166] : memref<8x32x16xf32, #tpu.memory_space<vmem>>, vector<1x32x16xf32>
    %255 = vector.shape_cast %254 : vector<1x32x16xf32> to vector<32x16xf32>
    %cst_167 = arith.constant dense<0.000000e+00> : vector<2x16xf32>
    %256 = tpu.matmul %253, %255, %cst_167 {dimension_numbers = #tpu.dot_dimension_numbers<[1], [0], [0], [1], [0, 0, 1, 1], [], []>} : vector<2x32xf32>, vector<32x16xf32>, vector<2x16xf32> -> vector<2x16xf32>
    %257 = arith.addf %251, %256 : vector<2x16xf32>
    %258 = vector.extract_strided_slice %241 {offsets = [0, 2, 0], sizes = [2, 1, 32], strides = [1, 1, 1]} : vector<2x8x32xf32> to vector<2x1x32xf32>
    %259 = vector.shape_cast %258 : vector<2x1x32xf32> to vector<2x32xf32>
    %c2 = arith.constant 2 : index
    %c0_168 = arith.constant 0 : index
    %c0_169 = arith.constant 0 : index
    %260 = vector.load %arg18[%c2, %c0_168, %c0_169] : memref<8x32x16xf32, #tpu.memory_space<vmem>>, vector<1x32x16xf32>
    %261 = vector.shape_cast %260 : vector<1x32x16xf32> to vector<32x16xf32>
    %cst_170 = arith.constant dense<0.000000e+00> : vector<2x16xf32>
    %262 = tpu.matmul %259, %261, %cst_170 {dimension_numbers = #tpu.dot_dimension_numbers<[1], [0], [0], [1], [0, 0, 1, 1], [], []>} : vector<2x32xf32>, vector<32x16xf32>, vector<2x16xf32> -> vector<2x16xf32>
    %263 = arith.addf %257, %262 : vector<2x16xf32>
    %264 = vector.extract_strided_slice %241 {offsets = [0, 3, 0], sizes = [2, 1, 32], strides = [1, 1, 1]} : vector<2x8x32xf32> to vector<2x1x32xf32>
    %265 = vector.shape_cast %264 : vector<2x1x32xf32> to vector<2x32xf32>
    %c3 = arith.constant 3 : index
    %c0_171 = arith.constant 0 : index
    %c0_172 = arith.constant 0 : index
    %266 = vector.load %arg18[%c3, %c0_171, %c0_172] : memref<8x32x16xf32, #tpu.memory_space<vmem>>, vector<1x32x16xf32>
    %267 = vector.shape_cast %266 : vector<1x32x16xf32> to vector<32x16xf32>
    %cst_173 = arith.constant dense<0.000000e+00> : vector<2x16xf32>
    %268 = tpu.matmul %265, %267, %cst_173 {dimension_numbers = #tpu.dot_dimension_numbers<[1], [0], [0], [1], [0, 0, 1, 1], [], []>} : vector<2x32xf32>, vector<32x16xf32>, vector<2x16xf32> -> vector<2x16xf32>
    %269 = arith.addf %263, %268 : vector<2x16xf32>
    %270 = vector.extract_strided_slice %241 {offsets = [0, 4, 0], sizes = [2, 1, 32], strides = [1, 1, 1]} : vector<2x8x32xf32> to vector<2x1x32xf32>
    %271 = vector.shape_cast %270 : vector<2x1x32xf32> to vector<2x32xf32>
    %c4 = arith.constant 4 : index
    %c0_174 = arith.constant 0 : index
    %c0_175 = arith.constant 0 : index
    %272 = vector.load %arg18[%c4, %c0_174, %c0_175] : memref<8x32x16xf32, #tpu.memory_space<vmem>>, vector<1x32x16xf32>
    %273 = vector.shape_cast %272 : vector<1x32x16xf32> to vector<32x16xf32>
    %cst_176 = arith.constant dense<0.000000e+00> : vector<2x16xf32>
    %274 = tpu.matmul %271, %273, %cst_176 {dimension_numbers = #tpu.dot_dimension_numbers<[1], [0], [0], [1], [0, 0, 1, 1], [], []>} : vector<2x32xf32>, vector<32x16xf32>, vector<2x16xf32> -> vector<2x16xf32>
    %275 = arith.addf %269, %274 : vector<2x16xf32>
    %276 = vector.extract_strided_slice %241 {offsets = [0, 5, 0], sizes = [2, 1, 32], strides = [1, 1, 1]} : vector<2x8x32xf32> to vector<2x1x32xf32>
    %277 = vector.shape_cast %276 : vector<2x1x32xf32> to vector<2x32xf32>
    %c5 = arith.constant 5 : index
    %c0_177 = arith.constant 0 : index
    %c0_178 = arith.constant 0 : index
    %278 = vector.load %arg18[%c5, %c0_177, %c0_178] : memref<8x32x16xf32, #tpu.memory_space<vmem>>, vector<1x32x16xf32>
    %279 = vector.shape_cast %278 : vector<1x32x16xf32> to vector<32x16xf32>
    %cst_179 = arith.constant dense<0.000000e+00> : vector<2x16xf32>
    %280 = tpu.matmul %277, %279, %cst_179 {dimension_numbers = #tpu.dot_dimension_numbers<[1], [0], [0], [1], [0, 0, 1, 1], [], []>} : vector<2x32xf32>, vector<32x16xf32>, vector<2x16xf32> -> vector<2x16xf32>
    %281 = arith.addf %275, %280 : vector<2x16xf32>
    %282 = vector.extract_strided_slice %241 {offsets = [0, 6, 0], sizes = [2, 1, 32], strides = [1, 1, 1]} : vector<2x8x32xf32> to vector<2x1x32xf32>
    %283 = vector.shape_cast %282 : vector<2x1x32xf32> to vector<2x32xf32>
    %c6 = arith.constant 6 : index
    %c0_180 = arith.constant 0 : index
    %c0_181 = arith.constant 0 : index
    %284 = vector.load %arg18[%c6, %c0_180, %c0_181] : memref<8x32x16xf32, #tpu.memory_space<vmem>>, vector<1x32x16xf32>
    %285 = vector.shape_cast %284 : vector<1x32x16xf32> to vector<32x16xf32>
    %cst_182 = arith.constant dense<0.000000e+00> : vector<2x16xf32>
    %286 = tpu.matmul %283, %285, %cst_182 {dimension_numbers = #tpu.dot_dimension_numbers<[1], [0], [0], [1], [0, 0, 1, 1], [], []>} : vector<2x32xf32>, vector<32x16xf32>, vector<2x16xf32> -> vector<2x16xf32>
    %287 = arith.addf %281, %286 : vector<2x16xf32>
    %288 = vector.extract_strided_slice %241 {offsets = [0, 7, 0], sizes = [2, 1, 32], strides = [1, 1, 1]} : vector<2x8x32xf32> to vector<2x1x32xf32>
    %289 = vector.shape_cast %288 : vector<2x1x32xf32> to vector<2x32xf32>
    %c7 = arith.constant 7 : index
    %c0_183 = arith.constant 0 : index
    %c0_184 = arith.constant 0 : index
    %290 = vector.load %arg18[%c7, %c0_183, %c0_184] : memref<8x32x16xf32, #tpu.memory_space<vmem>>, vector<1x32x16xf32>
    %291 = vector.shape_cast %290 : vector<1x32x16xf32> to vector<32x16xf32>
    %cst_185 = arith.constant dense<0.000000e+00> : vector<2x16xf32>
    %292 = tpu.matmul %289, %291, %cst_185 {dimension_numbers = #tpu.dot_dimension_numbers<[1], [0], [0], [1], [0, 0, 1, 1], [], []>} : vector<2x32xf32>, vector<32x16xf32>, vector<2x16xf32> -> vector<2x16xf32>
    %293 = arith.addf %287, %292 : vector<2x16xf32>
    %cst_186 = arith.constant 0.000000e+00 : f32
    %294 = vector.broadcast %cst_186 : f32 to vector<2x16xf32>
    %295 = arith.maximumf %293, %294 : vector<2x16xf32>
    %c0_187 = arith.constant 0 : index
    %c0_188 = arith.constant 0 : index
    %296 = vector.load %arg20[%c0_187, %c0_188] : memref<16x16xf32, #tpu.memory_space<vmem>>, vector<16x16xf32>
    %cst_189 = arith.constant dense<0.000000e+00> : vector<2x16xf32>
    %297 = tpu.matmul %295, %296, %cst_189 {dimension_numbers = #tpu.dot_dimension_numbers<[1], [0], [0], [1], [0, 0, 1, 1], [], []>} : vector<2x16xf32>, vector<16x16xf32>, vector<2x16xf32> -> vector<2x16xf32>
    %c0_190 = arith.constant 0 : index
    %c0_191 = arith.constant 0 : index
    %298 = vector.load %arg21[%c0_190, %c0_191] : memref<1x16xf32, #tpu.memory_space<vmem>>, vector<1x16xf32>
    %299 = vector.broadcast %298 : vector<1x16xf32> to vector<2x16xf32>
    %300 = arith.addf %297, %299 : vector<2x16xf32>
    %c0_192 = arith.constant 0 : index
    %c0_193 = arith.constant 0 : index
    %301 = vector.load %arg22[%c0_192, %c0_193] : memref<2x16xf32, #tpu.memory_space<vmem>>, vector<2x16xf32>
    tpu.vector_store %arg22[%c0_192, %c0_193], %300 {strides = array<i32>} : memref<2x16xf32, #tpu.memory_space<vmem>>, vector<2x16xf32>,
    return
  }
}

</mosaic_0001>

<llo_original>
// kernel: attention_transformer_encoder.1
$region0: #{attention_transformer_encoder.1}
  #allocation0 [shape = 'u32[]', space=smem, size = 0x4, offset = 0x4, fixed_abs, tag = 'smem constant byte address 0x4 - core index']
  #allocation1 [shape = 'u32[72,128]{1,0:T(1,128)}', space=vmem, size = 0x9000, scoped, tag = 'internal scratch']
  %s0 = inlined_call_operand.vmem [shape: f32[16,32], index: 0, kind: input, shape index: {}]
  %s1 = inlined_call_operand.vmem [shape: f32[16,32], index: 1, kind: input, shape index: {}]
  %s2 = inlined_call_operand.vmem [shape: f32[2,8,32,8], index: 2, kind: input, shape index: {}]
  %s3 = inlined_call_operand.vmem [shape: f32[2,8,32,8], index: 3, kind: input, shape index: {}]
  %s4 = inlined_call_operand.vmem [shape: f32[2,8,32,8], index: 4, kind: input, shape index: {}]
  %s5 = inlined_call_operand.vmem [shape: f32[2,8,1,8], index: 5, kind: input, shape index: {}]
  %s6 = inlined_call_operand.vmem [shape: f32[2,8,1,8], index: 6, kind: input, shape index: {}]
  %s7 = inlined_call_operand.vmem [shape: f32[2,8,1,8], index: 7, kind: input, shape index: {}]
  %s8 = inlined_call_operand.vmem [shape: f32[2,8,8,32], index: 8, kind: input, shape index: {}]
  %s9 = inlined_call_operand.vmem [shape: f32[2,1,32], index: 9, kind: input, shape index: {}]
  %s10 = inlined_call_operand.vmem [shape: f32[2,1,32], index: 10, kind: input, shape index: {}]
  %s11 = inlined_call_operand.vmem [shape: f32[2,1,32], index: 11, kind: input, shape index: {}]
  %s12 = inlined_call_operand.vmem [shape: f32[2,32,64], index: 12, kind: input, shape index: {}]
  %s13 = inlined_call_operand.vmem [shape: f32[2,1,64], index: 13, kind: input, shape index: {}]
  %s14 = inlined_call_operand.vmem [shape: f32[2,64,32], index: 14, kind: input, shape index: {}]
  %s15 = inlined_call_operand.vmem [shape: f32[2,1,32], index: 15, kind: input, shape index: {}]
  %s16 = inlined_call_operand.vmem [shape: f32[2,1,32], index: 16, kind: input, shape index: {}]
  %s17 = inlined_call_operand.vmem [shape: f32[2,1,32], index: 17, kind: input, shape index: {}]
  %s18 = inlined_call_operand.vmem [shape: f32[8,32,16], index: 18, kind: input, shape index: {}]
  %s19 = inlined_call_operand.vmem [shape: f32[1,16], index: 19, kind: input, shape index: {}]
  %s20 = inlined_call_operand.vmem [shape: f32[16,16], index: 20, kind: input, shape index: {}]
  %s21 = inlined_call_operand.vmem [shape: f32[1,16], index: 21, kind: input, shape index: {}]
  %s22 = inlined_call_operand.hbm [shape: f32[2,16], index: 22, kind: output, shape index: {}]
  %s23 = sld [smem:[#allocation0]]
  $region98: #{attention_transformer_encoder.1} parent=0
    _
  %s25 = ssub.s32 1, %s23
  %s26 = scalar_select 0, %s25, %s23
  $region1: #{attention_transformer_encoder.1} parent=0
    #allocation2 [shape = 'u8[1024]{0}', space=vmem, size = 0x400, scoped, tag = 'output window, operand 0, single buffered']
    #allocation3 [shape = 's32[1]{0}', space=sflag, size = 0x4, scoped, tag = 'scoped memory for attention_transformer_encoder.1']
    %27 = vsyncpa [#allocation3], 0
    // Predicated region
    $region2: #{attention_transformer_encoder.1} parent=1 // pred_check
      _
    $region3: #{attention_transformer_encoder.1} parent=1 // pred_check_branch
      %29 = sbr.rel (0) target = $region5
    $region4: #{attention_transformer_encoder.1} parent=1 // pred_region
      _
    $region5: #{attention_transformer_encoder.1} parent=1 // pred_fallthru
      _
    // Predicated region
    $region6: #{attention_transformer_encoder.1} parent=1 // pred_check
      _
    $region7: #{attention_transformer_encoder.1} parent=1 // pred_check_branch
      %31 = sbr.rel (0) target = $region9
    $region8: #{attention_transformer_encoder.1} parent=1 // pred_region
      _
    $region9: #{attention_transformer_encoder.1} parent=1 // pred_fallthru
      _
    // Predicated region
    $region10: #{attention_transformer_encoder.1} parent=1 // pred_check
      _
    $region11: #{attention_transformer_encoder.1} parent=1 // pred_check_branch
      %33 = sbr.rel (0) target = $region13
    $region12: #{attention_transformer_encoder.1} parent=1 // pred_region
      _
    $region13: #{attention_transformer_encoder.1} parent=1 // pred_fallthru
      _
    // Predicated region
    $region14: #{attention_transformer_encoder.1} parent=1 // pred_check
      _
    $region15: #{attention_transformer_encoder.1} parent=1 // pred_check_branch
      %35 = sbr.rel (0) target = $region17
    $region16: #{attention_transformer_encoder.1} parent=1 // pred_region
      _
    $region17: #{attention_transformer_encoder.1} parent=1 // pred_fallthru
      _
    // Predicated region
    $region18: #{attention_transformer_encoder.1} parent=1 // pred_check
      _
    $region19: #{attention_transformer_encoder.1} parent=1 // pred_check_branch
      %37 = sbr.rel (0) target = $region21
    $region20: #{attention_transformer_encoder.1} parent=1 // pred_region
      _
    $region21: #{attention_transformer_encoder.1} parent=1 // pred_fallthru
      _
    // Predicated region
    $region22: #{attention_transformer_encoder.1} parent=1 // pred_check
      _
    $region23: #{attention_transformer_encoder.1} parent=1 // pred_check_branch
      %39 = sbr.rel (0) target = $region25
    $region24: #{attention_transformer_encoder.1} parent=1 // pred_region
      _
    $region25: #{attention_transformer_encoder.1} parent=1 // pred_fallthru
      _
    // Predicated region
    $region26: #{attention_transformer_encoder.1} parent=1 // pred_check
      _
    $region27: #{attention_transformer_encoder.1} parent=1 // pred_check_branch
      %41 = sbr.rel (0) target = $region29
    $region28: #{attention_transformer_encoder.1} parent=1 // pred_region
      _
    $region29: #{attention_transformer_encoder.1} parent=1 // pred_fallthru
      _
    // Predicated region
    $region30: #{attention_transformer_encoder.1} parent=1 // pred_check
      _
    $region31: #{attention_transformer_encoder.1} parent=1 // pred_check_branch
      %43 = sbr.rel (0) target = $region33
    $region32: #{attention_transformer_encoder.1} parent=1 // pred_region
      _
    $region33: #{attention_transformer_encoder.1} parent=1 // pred_fallthru
      _
    // Predicated region
    $region34: #{attention_transformer_encoder.1} parent=1 // pred_check
      _
    $region35: #{attention_transformer_encoder.1} parent=1 // pred_check_branch
      %45 = sbr.rel (0) target = $region37
    $region36: #{attention_transformer_encoder.1} parent=1 // pred_region
      _
    $region37: #{attention_transformer_encoder.1} parent=1 // pred_fallthru
      _
    // Predicated region
    $region38: #{attention_transformer_encoder.1} parent=1 // pred_check
      _
    $region39: #{attention_transformer_encoder.1} parent=1 // pred_check_branch
      %47 = sbr.rel (0) target = $region41
    $region40: #{attention_transformer_encoder.1} parent=1 // pred_region
      _
    $region41: #{attention_transformer_encoder.1} parent=1 // pred_fallthru
      _
    // Predicated region
    $region42: #{attention_transformer_encoder.1} parent=1 // pred_check
      _
    $region43: #{attention_transformer_encoder.1} parent=1 // pred_check_branch
      %49 = sbr.rel (0) target = $region45
    $region44: #{attention_transformer_encoder.1} parent=1 // pred_region
      _
    $region45: #{attention_transformer_encoder.1} parent=1 // pred_fallthru
      _
    // Predicated region
    $region46: #{attention_transformer_encoder.1} parent=1 // pred_check
      _
    $region47: #{attention_transformer_encoder.1} parent=1 // pred_check_branch
      %51 = sbr.rel (0) target = $region49
    $region48: #{attention_transformer_encoder.1} parent=1 // pred_region
      _
    $region49: #{attention_transformer_encoder.1} parent=1 // pred_fallthru
      _
    // Predicated region
    $region50: #{attention_transformer_encoder.1} parent=1 // pred_check
      _
    $region51: #{attention_transformer_encoder.1} parent=1 // pred_check_branch
      %53 = sbr.rel (0) target = $region53
    $region52: #{attention_transformer_encoder.1} parent=1 // pred_region
      _
    $region53: #{attention_transformer_encoder.1} parent=1 // pred_fallthru
      _
    // Predicated region
    $region54: #{attention_transformer_encoder.1} parent=1 // pred_check
      _
    $region55: #{attention_transformer_encoder.1} parent=1 // pred_check_branch
      %55 = sbr.rel (0) target = $region57
    $region56: #{attention_transformer_encoder.1} parent=1 // pred_region
      _
    $region57: #{attention_transformer_encoder.1} parent=1 // pred_fallthru
      _
    // Predicated region
    $region58: #{attention_transformer_encoder.1} parent=1 // pred_check
      _
    $region59: #{attention_transformer_encoder.1} parent=1 // pred_check_branch
      %57 = sbr.rel (0) target = $region61
    $region60: #{attention_transformer_encoder.1} parent=1 // pred_region
      _
    $region61: #{attention_transformer_encoder.1} parent=1 // pred_fallthru
      _
    // Predicated region
    $region62: #{attention_transformer_encoder.1} parent=1 // pred_check
      _
    $region63: #{attention_transformer_encoder.1} parent=1 // pred_check_branch
      %59 = sbr.rel (0) target = $region65
    $region64: #{attention_transformer_encoder.1} parent=1 // pred_region
      _
    $region65: #{attention_transformer_encoder.1} parent=1 // pred_fallthru
      _
    // Predicated region
    $region66: #{attention_transformer_encoder.1} parent=1 // pred_check
      _
    $region67: #{attention_transformer_encoder.1} parent=1 // pred_check_branch
      %61 = sbr.rel (0) target = $region69
    $region68: #{attention_transformer_encoder.1} parent=1 // pred_region
      _
    $region69: #{attention_transformer_encoder.1} parent=1 // pred_fallthru
      _
    // Predicated region
    $region70: #{attention_transformer_encoder.1} parent=1 // pred_check
      _
    $region71: #{attention_transformer_encoder.1} parent=1 // pred_check_branch
      %63 = sbr.rel (0) target = $region73
    $region72: #{attention_transformer_encoder.1} parent=1 // pred_region
      _
    $region73: #{attention_transformer_encoder.1} parent=1 // pred_fallthru
      _
    // Predicated region
    $region74: #{attention_transformer_encoder.1} parent=1 // pred_check
      _
    $region75: #{attention_transformer_encoder.1} parent=1 // pred_check_branch
      %65 = sbr.rel (0) target = $region77
    $region76: #{attention_transformer_encoder.1} parent=1 // pred_region
      _
    $region77: #{attention_transformer_encoder.1} parent=1 // pred_fallthru
      _
    // Predicated region
    $region78: #{attention_transformer_encoder.1} parent=1 // pred_check
      _
    $region79: #{attention_transformer_encoder.1} parent=1 // pred_check_branch
      %67 = sbr.rel (0) target = $region81
    $region80: #{attention_transformer_encoder.1} parent=1 // pred_region
      _
    $region81: #{attention_transformer_encoder.1} parent=1 // pred_fallthru
      _
    // Predicated region
    $region82: #{attention_transformer_encoder.1} parent=1 // pred_check
      _
    $region83: #{attention_transformer_encoder.1} parent=1 // pred_check_branch
      %69 = sbr.rel (0) target = $region85
    $region84: #{attention_transformer_encoder.1} parent=1 // pred_region
      _
    $region85: #{attention_transformer_encoder.1} parent=1 // pred_fallthru
      _
    // Predicated region
    $region86: #{attention_transformer_encoder.1} parent=1 // pred_check
      _
    $region87: #{attention_transformer_encoder.1} parent=1 // pred_check_branch
      %71 = sbr.rel (0) target = $region89
    $region88: #{attention_transformer_encoder.1} parent=1 // pred_region
      _
    $region89: #{attention_transformer_encoder.1} parent=1 // pred_fallthru
      _
    %v72 = vld [vmem:[%s0] sm:$0xff]
    %v73 = vld [vmem:[%s0 + $0x8] sm:$0xff]
    %v74 = vld [vmem:[%s1] sm:$0xff]
    %v75 = vld [vmem:[%s1 + $0x8] sm:$0xff]
    %v76 = vadd.f32 %v72, %v74
    %v77 = vadd.f32 %v73, %v75
    %v78 = vld [vmem:[%s2] sm:$0xff]
    %v79 = vld [vmem:[%s2 + $0x8] sm:$0xff]
    %v80 = vld [vmem:[%s2 + $0x10] sm:$0xff]
    %v81 = vld [vmem:[%s2 + $0x18] sm:$0xff]
    %v82 = vld [vmem:[%s2 + $0x20] sm:$0xff]
    %v83 = vld [vmem:[%s2 + $0x28] sm:$0xff]
    %v84 = vld [vmem:[%s2 + $0x30] sm:$0xff]
    %v85 = vld [vmem:[%s2 + $0x38] sm:$0xff]
    %v86 = vld [vmem:[%s2 + $0x40] sm:$0xff]
    %v87 = vld [vmem:[%s2 + $0x48] sm:$0xff]
    %v88 = vld [vmem:[%s2 + $0x50] sm:$0xff]
    %v89 = vld [vmem:[%s2 + $0x58] sm:$0xff]
    %v90 = vld [vmem:[%s2 + $0x60] sm:$0xff]
    %v91 = vld [vmem:[%s2 + $0x68] sm:$0xff]
    %v92 = vld [vmem:[%s2 + $0x70] sm:$0xff]
    %v93 = vld [vmem:[%s2 + $0x78] sm:$0xff]
    %v94 = vld [vmem:[%s2 + $0x80] sm:$0xff]
    %v95 = vld [vmem:[%s2 + $0x88] sm:$0xff]
    %v96 = vld [vmem:[%s2 + $0x90] sm:$0xff]
    %v97 = vld [vmem:[%s2 + $0x98] sm:$0xff]
    %v98 = vld [vmem:[%s2 + $0xa0] sm:$0xff]
    %v99 = vld [vmem:[%s2 + $0xa8] sm:$0xff]
    %v100 = vld [vmem:[%s2 + $0xb0] sm:$0xff]
    %v101 = vld [vmem:[%s2 + $0xb8] sm:$0xff]
    %v102 = vld [vmem:[%s2 + $0xc0] sm:$0xff]
    %v103 = vld [vmem:[%s2 + $0xc8] sm:$0xff]
    %v104 = vld [vmem:[%s2 + $0xd0] sm:$0xff]
    %v105 = vld [vmem:[%s2 + $0xd8] sm:$0xff]
    %v106 = vld [vmem:[%s2 + $0xe0] sm:$0xff]
    %v107 = vld [vmem:[%s2 + $0xe8] sm:$0xff]
    %v108 = vld [vmem:[%s2 + $0xf0] sm:$0xff]
    %v109 = vld [vmem:[%s2 + $0xf8] sm:$0xff]
    %v110 = vld [vmem:[%s5] sm:$0x1]
    %v111 = vld [vmem:[%s5 + $0x1] sm:$0x1]
    %v112 = vld [vmem:[%s5 + $0x2] sm:$0x1]
    %v113 = vld [vmem:[%s5 + $0x3] sm:$0x1]
    %v114 = vld [vmem:[%s5 + $0x4] sm:$0x1]
    %v115 = vld [vmem:[%s5 + $0x5] sm:$0x1]
    %v116 = vld [vmem:[%s5 + $0x6] sm:$0x1]
    %v117 = vld [vmem:[%s5 + $0x7] sm:$0x1]
    %v126 = vperm.slane %v110, 0
    %v127 = vperm.slane %v111, 0
    %v128 = vperm.slane %v112, 0
    %v129 = vperm.slane %v113, 0
    %v130 = vperm.slane %v114, 0
    %v131 = vperm.slane %v115, 0
    %v132 = vperm.slane %v116, 0
    %v133 = vperm.slane %v117, 0
    %vm142 = vcmask 261120
    %v144 = vsel %vm142, %v76, 0
    %146 = vmatpush.msra.mxu0 0.0
    %147 = vmatpush.msra.mxu0 0.0
    %148 = vmatpush.msra.mxu0 0.0
    %149 = vmatpush.msra.mxu0 0.0
    %150 = vmatpush.msra.mxu0 0.0
    %151 = vmatpush.msra.mxu0 0.0
    %152 = vmatpush.msra.mxu0 0.0
    %153 = vmatpush.msra.mxu0 0.0
    %154 = vmatpush.msra.mxu0 0.0
    %155 = vmatpush.msra.mxu0 0.0
    %156 = vmatpush.msra.mxu0 0.0
    %157 = vmatpush.msra.mxu0 0.0
    %158 = vmatpush.msra.mxu0 %v81
    %159 = vmatpush.msra.mxu0 %v80
    %160 = vmatpush.msra.mxu0 %v79
    %161 = vmatpush.msra.mxu0 %v78
    %162 = vmatmul.f32.gmra.mxu0 %v144
    %v163 = vpop.f32.mrf.mxu0
    %v164 = vadd.f32 %v126, %v163
    %165 = vdwg.mxu0
    %166 = vmatpush.msra.mxu0 0.0
    %167 = vmatpush.msra.mxu0 0.0
    %168 = vmatpush.msra.mxu0 0.0
    %169 = vmatpush.msra.mxu0 0.0
    %170 = vmatpush.msra.mxu0 0.0
    %171 = vmatpush.msra.mxu0 0.0
    %172 = vmatpush.msra.mxu0 0.0
    %173 = vmatpush.msra.mxu0 0.0
    %174 = vmatpush.msra.mxu0 0.0
    %175 = vmatpush.msra.mxu0 0.0
    %176 = vmatpush.msra.mxu0 0.0
    %177 = vmatpush.msra.mxu0 0.0
    %178 = vmatpush.msra.mxu0 %v85
    %179 = vmatpush.msra.mxu0 %v84
    %180 = vmatpush.msra.mxu0 %v83
    %181 = vmatpush.msra.mxu0 %v82
    %182 = vmatmul.f32.gmra.mxu0 %v144
    %v183 = vpop.f32.mrf.mxu0
    %v184 = vadd.f32 %v127, %v183
    %185 = vdwg.mxu0
    %186 = vmatpush.msra.mxu0 0.0
    %187 = vmatpush.msra.mxu0 0.0
    %188 = vmatpush.msra.mxu0 0.0
    %189 = vmatpush.msra.mxu0 0.0
    %190 = vmatpush.msra.mxu0 0.0
    %191 = vmatpush.msra.mxu0 0.0
    %192 = vmatpush.msra.mxu0 0.0
    %193 = vmatpush.msra.mxu0 0.0
    %194 = vmatpush.msra.mxu0 0.0
    %195 = vmatpush.msra.mxu0 0.0
    %196 = vmatpush.msra.mxu0 0.0
    %197 = vmatpush.msra.mxu0 0.0
    %198 = vmatpush.msra.mxu0 %v89
    %199 = vmatpush.msra.mxu0 %v88
    %200 = vmatpush.msra.mxu0 %v87
    %201 = vmatpush.msra.mxu0 %v86
    %202 = vmatmul.f32.gmra.mxu0 %v144
    %v203 = vpop.f32.mrf.mxu0
    %v204 = vadd.f32 %v128, %v203
    %205 = vdwg.mxu0
    %206 = vmatpush.msra.mxu0 0.0
    %207 = vmatpush.msra.mxu0 0.0
    %208 = vmatpush.msra.mxu0 0.0
    %209 = vmatpush.msra.mxu0 0.0
    %210 = vmatpush.msra.mxu0 0.0
    %211 = vmatpush.msra.mxu0 0.0
    %212 = vmatpush.msra.mxu0 0.0
    %213 = vmatpush.msra.mxu0 0.0
    %214 = vmatpush.msra.mxu0 0.0
    %215 = vmatpush.msra.mxu0 0.0
    %216 = vmatpush.msra.mxu0 0.0
    %217 = vmatpush.msra.mxu0 0.0
    %218 = vmatpush.msra.mxu0 %v93
    %219 = vmatpush.msra.mxu0 %v92
    %220 = vmatpush.msra.mxu0 %v91
    %221 = vmatpush.msra.mxu0 %v90
    %222 = vmatmul.f32.gmra.mxu0 %v144
    %v223 = vpop.f32.mrf.mxu0
    %v224 = vadd.f32 %v129, %v223
    %225 = vdwg.mxu0
    %v227 = vsel %vm142, %v77, 0
    %229 = vmatpush.msra.mxu0 0.0
    %230 = vmatpush.msra.mxu0 0.0
    %231 = vmatpush.msra.mxu0 0.0
    %232 = vmatpush.msra.mxu0 0.0
    %233 = vmatpush.msra.mxu0 0.0
    %234 = vmatpush.msra.mxu0 0.0
    %235 = vmatpush.msra.mxu0 0.0
    %236 = vmatpush.msra.mxu0 0.0
    %237 = vmatpush.msra.mxu0 0.0
    %238 = vmatpush.msra.mxu0 0.0
    %239 = vmatpush.msra.mxu0 0.0
    %240 = vmatpush.msra.mxu0 0.0
    %241 = vmatpush.msra.mxu0 %v97
    %242 = vmatpush.msra.mxu0 %v96
    %243 = vmatpush.msra.mxu0 %v95
    %244 = vmatpush.msra.mxu0 %v94
    %245 = vmatmul.f32.gmra.mxu0 %v227
    %v246 = vpop.f32.mrf.mxu0
    %v247 = vadd.f32 %v130, %v246
    %248 = vdwg.mxu0
    %249 = vmatpush.msra.mxu0 0.0
    %250 = vmatpush.msra.mxu0 0.0
    %251 = vmatpush.msra.mxu0 0.0
    %252 = vmatpush.msra.mxu0 0.0
    %253 = vmatpush.msra.mxu0 0.0
    %254 = vmatpush.msra.mxu0 0.0
    %255 = vmatpush.msra.mxu0 0.0
    %256 = vmatpush.msra.mxu0 0.0
    %257 = vmatpush.msra.mxu0 0.0
    %258 = vmatpush.msra.mxu0 0.0
    %259 = vmatpush.msra.mxu0 0.0
    %260 = vmatpush.msra.mxu0 0.0
    %261 = vmatpush.msra.mxu0 %v101
    %262 = vmatpush.msra.mxu0 %v100
    %263 = vmatpush.msra.mxu0 %v99
    %264 = vmatpush.msra.mxu0 %v98
    %265 = vmatmul.f32.gmra.mxu0 %v227
    %v266 = vpop.f32.mrf.mxu0
    %v267 = vadd.f32 %v131, %v266
    %268 = vdwg.mxu0
    %269 = vmatpush.msra.mxu0 0.0
    %270 = vmatpush.msra.mxu0 0.0
    %271 = vmatpush.msra.mxu0 0.0
    %272 = vmatpush.msra.mxu0 0.0
    %273 = vmatpush.msra.mxu0 0.0
    %274 = vmatpush.msra.mxu0 0.0
    %275 = vmatpush.msra.mxu0 0.0
    %276 = vmatpush.msra.mxu0 0.0
    %277 = vmatpush.msra.mxu0 0.0
    %278 = vmatpush.msra.mxu0 0.0
    %279 = vmatpush.msra.mxu0 0.0
    %280 = vmatpush.msra.mxu0 0.0
    %281 = vmatpush.msra.mxu0 %v105
    %282 = vmatpush.msra.mxu0 %v104
    %283 = vmatpush.msra.mxu0 %v103
    %284 = vmatpush.msra.mxu0 %v102
    %285 = vmatmul.f32.gmra.mxu0 %v227
    %v286 = vpop.f32.mrf.mxu0
    %v287 = vadd.f32 %v132, %v286
    %288 = vdwg.mxu0
    %289 = vmatpush.msra.mxu0 0.0
    %290 = vmatpush.msra.mxu0 0.0
    %291 = vmatpush.msra.mxu0 0.0
    %292 = vmatpush.msra.mxu0 0.0
    %293 = vmatpush.msra.mxu0 0.0
    %294 = vmatpush.msra.mxu0 0.0
    %295 = vmatpush.msra.mxu0 0.0
    %296 = vmatpush.msra.mxu0 0.0
    %297 = vmatpush.msra.mxu0 0.0
    %298 = vmatpush.msra.mxu0 0.0
    %299 = vmatpush.msra.mxu0 0.0
    %300 = vmatpush.msra.mxu0 0.0
    %301 = vmatpush.msra.mxu0 %v109
    %302 = vmatpush.msra.mxu0 %v108
    %303 = vmatpush.msra.mxu0 %v107
    %304 = vmatpush.msra.mxu0 %v106
    %305 = vmatmul.f32.gmra.mxu0 %v227
    %v306 = vpop.f32.mrf.mxu0
    %v307 = vadd.f32 %v133, %v306
    %308 = vdwg.mxu0
    %v309 = vld [vmem:[%s3] sm:$0xff]
    %v310 = vld [vmem:[%s3 + $0x8] sm:$0xff]
    %v311 = vld [vmem:[%s3 + $0x10] sm:$0xff]
    %v312 = vld [vmem:[%s3 + $0x18] sm:$0xff]
    %v313 = vld [vmem:[%s3 + $0x20] sm:$0xff]
    %v314 = vld [vmem:[%s3 + $0x28] sm:$0xff]
    %v315 = vld [vmem:[%s3 + $0x30] sm:$0xff]
    %v316 = vld [vmem:[%s3 + $0x38] sm:$0xff]
    %v317 = vld [vmem:[%s3 + $0x40] sm:$0xff]
    %v318 = vld [vmem:[%s3 + $0x48] sm:$0xff]
    %v319 = vld [vmem:[%s3 + $0x50] sm:$0xff]
    %v320 = vld [vmem:[%s3 + $0x58] sm:$0xff]
    %v321 = vld [vmem:[%s3 + $0x60] sm:$0xff]
    %v322 = vld [vmem:[%s3 + $0x68] sm:$0xff]
    %v323 = vld [vmem:[%s3 + $0x70] sm:$0xff]
    %v324 = vld [vmem:[%s3 + $0x78] sm:$0xff]
    %v325 = vld [vmem:[%s3 + $0x80] sm:$0xff]
    %v326 = vld [vmem:[%s3 + $0x88] sm:$0xff]
    %v327 = vld [vmem:[%s3 + $0x90] sm:$0xff]
    %v328 = vld [vmem:[%s3 + $0x98] sm:$0xff]
    %v329 = vld [vmem:[%s3 + $0xa0] sm:$0xff]
    %v330 = vld [vmem:[%s3 + $0xa8] sm:$0xff]
    %v331 = vld [vmem:[%s3 + $0xb0] sm:$0xff]
    %v332 = vld [vmem:[%s3 + $0xb8] sm:$0xff]
    %v333 = vld [vmem:[%s3 + $0xc0] sm:$0xff]
    %v334 = vld [vmem:[%s3 + $0xc8] sm:$0xff]
    %v335 = vld [vmem:[%s3 + $0xd0] sm:$0xff]
    %v336 = vld [vmem:[%s3 + $0xd8] sm:$0xff]
    %v337 = vld [vmem:[%s3 + $0xe0] sm:$0xff]
    %v338 = vld [vmem:[%s3 + $0xe8] sm:$0xff]
    %v339 = vld [vmem:[%s3 + $0xf0] sm:$0xff]
    %v340 = vld [vmem:[%s3 + $0xf8] sm:$0xff]
    %v341 = vld [vmem:[%s6] sm:$0x1]
    %v342 = vld [vmem:[%s6 + $0x1] sm:$0x1]
    %v343 = vld [vmem:[%s6 + $0x2] sm:$0x1]
    %v344 = vld [vmem:[%s6 + $0x3] sm:$0x1]
    %v345 = vld [vmem:[%s6 + $0x4] sm:$0x1]
    %v346 = vld [vmem:[%s6 + $0x5] sm:$0x1]
    %v347 = vld [vmem:[%s6 + $0x6] sm:$0x1]
    %v348 = vld [vmem:[%s6 + $0x7] sm:$0x1]
    %v357 = vperm.slane %v341, 0
    %v358 = vperm.slane %v342, 0
    %v359 = vperm.slane %v343, 0
    %v360 = vperm.slane %v344, 0
    %v361 = vperm.slane %v345, 0
    %v362 = vperm.slane %v346, 0
    %v363 = vperm.slane %v347, 0
    %v364 = vperm.slane %v348, 0
    %373 = vmatpush.msra.mxu0 0.0
    %374 = vmatpush.msra.mxu0 0.0
    %375 = vmatpush.msra.mxu0 0.0
    %376 = vmatpush.msra.mxu0 0.0
    %377 = vmatpush.msra.mxu0 0.0
    %378 = vmatpush.msra.mxu0 0.0
    %379 = vmatpush.msra.mxu0 0.0
    %380 = vmatpush.msra.mxu0 0.0
    %381 = vmatpush.msra.mxu0 0.0
    %382 = vmatpush.msra.mxu0 0.0
    %383 = vmatpush.msra.mxu0 0.0
    %384 = vmatpush.msra.mxu0 0.0
    %385 = vmatpush.msra.mxu0 %v312
    %386 = vmatpush.msra.mxu0 %v311
    %387 = vmatpush.msra.mxu0 %v310
    %388 = vmatpush.msra.mxu0 %v309
    %389 = vmatmul.f32.gmra.mxu0 %v144
    %v390 = vpop.f32.mrf.mxu0
    %v391 = vadd.f32 %v357, %v390
    %392 = vdwg.mxu0
    %393 = vmatpush.msra.mxu0 0.0
    %394 = vmatpush.msra.mxu0 0.0
    %395 = vmatpush.msra.mxu0 0.0
    %396 = vmatpush.msra.mxu0 0.0
    %397 = vmatpush.msra.mxu0 0.0
    %398 = vmatpush.msra.mxu0 0.0
    %399 = vmatpush.msra.mxu0 0.0
    %400 = vmatpush.msra.mxu0 0.0
    %401 = vmatpush.msra.mxu0 0.0
    %402 = vmatpush.msra.mxu0 0.0
    %403 = vmatpush.msra.mxu0 0.0
    %404 = vmatpush.msra.mxu0 0.0
    %405 = vmatpush.msra.mxu0 %v316
    %406 = vmatpush.msra.mxu0 %v315
    %407 = vmatpush.msra.mxu0 %v314
    %408 = vmatpush.msra.mxu0 %v313
    %409 = vmatmul.f32.gmra.mxu0 %v144
    %v410 = vpop.f32.mrf.mxu0
    %v411 = vadd.f32 %v358, %v410
    %412 = vdwg.mxu0
    %413 = vmatpush.msra.mxu0 0.0
    %414 = vmatpush.msra.mxu0 0.0
    %415 = vmatpush.msra.mxu0 0.0
    %416 = vmatpush.msra.mxu0 0.0
    %417 = vmatpush.msra.mxu0 0.0
    %418 = vmatpush.msra.mxu0 0.0
    %419 = vmatpush.msra.mxu0 0.0
    %420 = vmatpush.msra.mxu0 0.0
    %421 = vmatpush.msra.mxu0 0.0
    %422 = vmatpush.msra.mxu0 0.0
    %423 = vmatpush.msra.mxu0 0.0
    %424 = vmatpush.msra.mxu0 0.0
    %425 = vmatpush.msra.mxu0 %v320
    %426 = vmatpush.msra.mxu0 %v319
    %427 = vmatpush.msra.mxu0 %v318
    %428 = vmatpush.msra.mxu0 %v317
    %429 = vmatmul.f32.gmra.mxu0 %v144
    %v430 = vpop.f32.mrf.mxu0
    %v431 = vadd.f32 %v359, %v430
    %432 = vdwg.mxu0
    %433 = vmatpush.msra.mxu0 0.0
    %434 = vmatpush.msra.mxu0 0.0
    %435 = vmatpush.msra.mxu0 0.0
    %436 = vmatpush.msra.mxu0 0.0
    %437 = vmatpush.msra.mxu0 0.0
    %438 = vmatpush.msra.mxu0 0.0
    %439 = vmatpush.msra.mxu0 0.0
    %440 = vmatpush.msra.mxu0 0.0
    %441 = vmatpush.msra.mxu0 0.0
    %442 = vmatpush.msra.mxu0 0.0
    %443 = vmatpush.msra.mxu0 0.0
    %444 = vmatpush.msra.mxu0 0.0
    %445 = vmatpush.msra.mxu0 %v324
    %446 = vmatpush.msra.mxu0 %v323
    %447 = vmatpush.msra.mxu0 %v322
    %448 = vmatpush.msra.mxu0 %v321
    %449 = vmatmul.f32.gmra.mxu0 %v144
    %v450 = vpop.f32.mrf.mxu0
    %v451 = vadd.f32 %v360, %v450
    %452 = vdwg.mxu0
    %453 = vmatpush.msra.mxu0 0.0
    %454 = vmatpush.msra.mxu0 0.0
    %455 = vmatpush.msra.mxu0 0.0
    %456 = vmatpush.msra.mxu0 0.0
    %457 = vmatpush.msra.mxu0 0.0
    %458 = vmatpush.msra.mxu0 0.0
    %459 = vmatpush.msra.mxu0 0.0
    %460 = vmatpush.msra.mxu0 0.0
    %461 = vmatpush.msra.mxu0 0.0
    %462 = vmatpush.msra.mxu0 0.0
    %463 = vmatpush.msra.mxu0 0.0
    %464 = vmatpush.msra.mxu0 0.0
    %465 = vmatpush.msra.mxu0 %v328
    %466 = vmatpush.msra.mxu0 %v327
    %467 = vmatpush.msra.mxu0 %v326
    %468 = vmatpush.msra.mxu0 %v325
    %469 = vmatmul.f32.gmra.mxu0 %v227
    %v470 = vpop.f32.mrf.mxu0
    %v471 = vadd.f32 %v361, %v470
    %472 = vdwg.mxu0
    %473 = vmatpush.msra.mxu0 0.0
    %474 = vmatpush.msra.mxu0 0.0
    %475 = vmatpush.msra.mxu0 0.0
    %476 = vmatpush.msra.mxu0 0.0
    %477 = vmatpush.msra.mxu0 0.0
    %478 = vmatpush.msra.mxu0 0.0
    %479 = vmatpush.msra.mxu0 0.0
    %480 = vmatpush.msra.mxu0 0.0
    %481 = vmatpush.msra.mxu0 0.0
    %482 = vmatpush.msra.mxu0 0.0
    %483 = vmatpush.msra.mxu0 0.0
    %484 = vmatpush.msra.mxu0 0.0
    %485 = vmatpush.msra.mxu0 %v332
    %486 = vmatpush.msra.mxu0 %v331
    %487 = vmatpush.msra.mxu0 %v330
    %488 = vmatpush.msra.mxu0 %v329
    %489 = vmatmul.f32.gmra.mxu0 %v227
    %v490 = vpop.f32.mrf.mxu0
    %v491 = vadd.f32 %v362, %v490
    %492 = vdwg.mxu0
    %493 = vmatpush.msra.mxu0 0.0
    %494 = vmatpush.msra.mxu0 0.0
    %495 = vmatpush.msra.mxu0 0.0
    %496 = vmatpush.msra.mxu0 0.0
    %497 = vmatpush.msra.mxu0 0.0
    %498 = vmatpush.msra.mxu0 0.0
    %499 = vmatpush.msra.mxu0 0.0
    %500 = vmatpush.msra.mxu0 0.0
    %501 = vmatpush.msra.mxu0 0.0
    %502 = vmatpush.msra.mxu0 0.0
    %503 = vmatpush.msra.mxu0 0.0
    %504 = vmatpush.msra.mxu0 0.0
    %505 = vmatpush.msra.mxu0 %v336
    %506 = vmatpush.msra.mxu0 %v335
    %507 = vmatpush.msra.mxu0 %v334
    %508 = vmatpush.msra.mxu0 %v333
    %509 = vmatmul.f32.gmra.mxu0 %v227
    %v510 = vpop.f32.mrf.mxu0
    %v511 = vadd.f32 %v363, %v510
    %512 = vdwg.mxu0
    %513 = vmatpush.msra.mxu0 0.0
    %514 = vmatpush.msra.mxu0 0.0
    %515 = vmatpush.msra.mxu0 0.0
    %516 = vmatpush.msra.mxu0 0.0
    %517 = vmatpush.msra.mxu0 0.0
    %518 = vmatpush.msra.mxu0 0.0
    %519 = vmatpush.msra.mxu0 0.0
    %520 = vmatpush.msra.mxu0 0.0
    %521 = vmatpush.msra.mxu0 0.0
    %522 = vmatpush.msra.mxu0 0.0
    %523 = vmatpush.msra.mxu0 0.0
    %524 = vmatpush.msra.mxu0 0.0
    %525 = vmatpush.msra.mxu0 %v340
    %526 = vmatpush.msra.mxu0 %v339
    %527 = vmatpush.msra.mxu0 %v338
    %528 = vmatpush.msra.mxu0 %v337
    %529 = vmatmul.f32.gmra.mxu0 %v227
    %v530 = vpop.f32.mrf.mxu0
    %v531 = vadd.f32 %v364, %v530
    %532 = vdwg.mxu0
    %v533 = vld [vmem:[%s4] sm:$0xff]
    %v534 = vld [vmem:[%s4 + $0x8] sm:$0xff]
    %v535 = vld [vmem:[%s4 + $0x10] sm:$0xff]
    %v536 = vld [vmem:[%s4 + $0x18] sm:$0xff]
    %v537 = vld [vmem:[%s4 + $0x20] sm:$0xff]
    %v538 = vld [vmem:[%s4 + $0x28] sm:$0xff]
    %v539 = vld [vmem:[%s4 + $0x30] sm:$0xff]
    %v540 = vld [vmem:[%s4 + $0x38] sm:$0xff]
    %v541 = vld [vmem:[%s4 + $0x40] sm:$0xff]
    %v542 = vld [vmem:[%s4 + $0x48] sm:$0xff]
    %v543 = vld [vmem:[%s4 + $0x50] sm:$0xff]
    %v544 = vld [vmem:[%s4 + $0x58] sm:$0xff]
    %v545 = vld [vmem:[%s4 + $0x60] sm:$0xff]
    %v546 = vld [vmem:[%s4 + $0x68] sm:$0xff]
    %v547 = vld [vmem:[%s4 + $0x70] sm:$0xff]
    %v548 = vld [vmem:[%s4 + $0x78] sm:$0xff]
    %v549 = vld [vmem:[%s4 + $0x80] sm:$0xff]
    %v550 = vld [vmem:[%s4 + $0x88] sm:$0xff]
    %v551 = vld [vmem:[%s4 + $0x90] sm:$0xff]
    %v552 = vld [vmem:[%s4 + $0x98] sm:$0xff]
    %v553 = vld [vmem:[%s4 + $0xa0] sm:$0xff]
    %v554 = vld [vmem:[%s4 + $0xa8] sm:$0xff]
    %v555 = vld [vmem:[%s4 + $0xb0] sm:$0xff]
    %v556 = vld [vmem:[%s4 + $0xb8] sm:$0xff]
    %v557 = vld [vmem:[%s4 + $0xc0] sm:$0xff]
    %v558 = vld [vmem:[%s4 + $0xc8] sm:$0xff]
    %v559 = vld [vmem:[%s4 + $0xd0] sm:$0xff]
    %v560 = vld [vmem:[%s4 + $0xd8] sm:$0xff]
    %v561 = vld [vmem:[%s4 + $0xe0] sm:$0xff]
    %v562 = vld [vmem:[%s4 + $0xe8] sm:$0xff]
    %v563 = vld [vmem:[%s4 + $0xf0] sm:$0xff]
    %v564 = vld [vmem:[%s4 + $0xf8] sm:$0xff]
    %v565 = vld [vmem:[%s7] sm:$0x1]
    %v566 = vld [vmem:[%s7 + $0x1] sm:$0x1]
    %v567 = vld [vmem:[%s7 + $0x2] sm:$0x1]
    %v568 = vld [vmem:[%s7 + $0x3] sm:$0x1]
    %v569 = vld [vmem:[%s7 + $0x4] sm:$0x1]
    %v570 = vld [vmem:[%s7 + $0x5] sm:$0x1]
    %v571 = vld [vmem:[%s7 + $0x6] sm:$0x1]
    %v572 = vld [vmem:[%s7 + $0x7] sm:$0x1]
    %v581 = vperm.slane %v565, 0
    %v582 = vperm.slane %v566, 0
    %v583 = vperm.slane %v567, 0
    %v584 = vperm.slane %v568, 0
    %v585 = vperm.slane %v569, 0
    %v586 = vperm.slane %v570, 0
    %v587 = vperm.slane %v571, 0
    %v588 = vperm.slane %v572, 0
    %597 = vmatpush.msra.mxu0 0.0
    %598 = vmatpush.msra.mxu0 0.0
    %599 = vmatpush.msra.mxu0 0.0
    %600 = vmatpush.msra.mxu0 0.0
    %601 = vmatpush.msra.mxu0 0.0
    %602 = vmatpush.msra.mxu0 0.0
    %603 = vmatpush.msra.mxu0 0.0
    %604 = vmatpush.msra.mxu0 0.0
    %605 = vmatpush.msra.mxu0 0.0
    %606 = vmatpush.msra.mxu0 0.0
    %607 = vmatpush.msra.mxu0 0.0
    %608 = vmatpush.msra.mxu0 0.0
    %609 = vmatpush.msra.mxu0 %v536
    %610 = vmatpush.msra.mxu0 %v535
    %611 = vmatpush.msra.mxu0 %v534
    %612 = vmatpush.msra.mxu0 %v533
    %613 = vmatmul.f32.gmra.mxu0 %v144
    %v614 = vpop.f32.mrf.mxu0
    %v615 = vadd.f32 %v581, %v614
    %616 = vdwg.mxu0
    %617 = vmatpush.msra.mxu0 0.0
    %618 = vmatpush.msra.mxu0 0.0
    %619 = vmatpush.msra.mxu0 0.0
    %620 = vmatpush.msra.mxu0 0.0
    %621 = vmatpush.msra.mxu0 0.0
    %622 = vmatpush.msra.mxu0 0.0
    %623 = vmatpush.msra.mxu0 0.0
    %624 = vmatpush.msra.mxu0 0.0
    %625 = vmatpush.msra.mxu0 0.0
    %626 = vmatpush.msra.mxu0 0.0
    %627 = vmatpush.msra.mxu0 0.0
    %628 = vmatpush.msra.mxu0 0.0
    %629 = vmatpush.msra.mxu0 %v540
    %630 = vmatpush.msra.mxu0 %v539
    %631 = vmatpush.msra.mxu0 %v538
    %632 = vmatpush.msra.mxu0 %v537
    %633 = vmatmul.f32.gmra.mxu0 %v144
    %v634 = vpop.f32.mrf.mxu0
    %v635 = vadd.f32 %v582, %v634
    %636 = vdwg.mxu0
    %637 = vmatpush.msra.mxu0 0.0
    %638 = vmatpush.msra.mxu0 0.0
    %639 = vmatpush.msra.mxu0 0.0
    %640 = vmatpush.msra.mxu0 0.0
    %641 = vmatpush.msra.mxu0 0.0
    %642 = vmatpush.msra.mxu0 0.0
    %643 = vmatpush.msra.mxu0 0.0
    %644 = vmatpush.msra.mxu0 0.0
    %645 = vmatpush.msra.mxu0 0.0
    %646 = vmatpush.msra.mxu0 0.0
    %647 = vmatpush.msra.mxu0 0.0
    %648 = vmatpush.msra.mxu0 0.0
    %649 = vmatpush.msra.mxu0 %v544
    %650 = vmatpush.msra.mxu0 %v543
    %651 = vmatpush.msra.mxu0 %v542
    %652 = vmatpush.msra.mxu0 %v541
    %653 = vmatmul.f32.gmra.mxu0 %v144
    %v654 = vpop.f32.mrf.mxu0
    %v655 = vadd.f32 %v583, %v654
    %656 = vdwg.mxu0
    %657 = vmatpush.msra.mxu0 0.0
    %658 = vmatpush.msra.mxu0 0.0
    %659 = vmatpush.msra.mxu0 0.0
    %660 = vmatpush.msra.mxu0 0.0
    %661 = vmatpush.msra.mxu0 0.0
    %662 = vmatpush.msra.mxu0 0.0
    %663 = vmatpush.msra.mxu0 0.0
    %664 = vmatpush.msra.mxu0 0.0
    %665 = vmatpush.msra.mxu0 0.0
    %666 = vmatpush.msra.mxu0 0.0
    %667 = vmatpush.msra.mxu0 0.0
    %668 = vmatpush.msra.mxu0 0.0
    %669 = vmatpush.msra.mxu0 %v548
    %670 = vmatpush.msra.mxu0 %v547
    %671 = vmatpush.msra.mxu0 %v546
    %672 = vmatpush.msra.mxu0 %v545
    %673 = vmatmul.f32.gmra.mxu0 %v144
    %v674 = vpop.f32.mrf.mxu0
    %v675 = vadd.f32 %v584, %v674
    %676 = vdwg.mxu0
    %677 = vmatpush.msra.mxu0 0.0
    %678 = vmatpush.msra.mxu0 0.0
    %679 = vmatpush.msra.mxu0 0.0
    %680 = vmatpush.msra.mxu0 0.0
    %681 = vmatpush.msra.mxu0 0.0
    %682 = vmatpush.msra.mxu0 0.0
    %683 = vmatpush.msra.mxu0 0.0
    %684 = vmatpush.msra.mxu0 0.0
    %685 = vmatpush.msra.mxu0 0.0
    %686 = vmatpush.msra.mxu0 0.0
    %687 = vmatpush.msra.mxu0 0.0
    %688 = vmatpush.msra.mxu0 0.0
    %689 = vmatpush.msra.mxu0 %v552
    %690 = vmatpush.msra.mxu0 %v551
    %691 = vmatpush.msra.mxu0 %v550
    %692 = vmatpush.msra.mxu0 %v549
    %693 = vmatmul.f32.gmra.mxu0 %v227
    %v694 = vpop.f32.mrf.mxu0
    %v695 = vadd.f32 %v585, %v694
    %696 = vdwg.mxu0
    %697 = vmatpush.msra.mxu0 0.0
    %698 = vmatpush.msra.mxu0 0.0
    %699 = vmatpush.msra.mxu0 0.0
    %700 = vmatpush.msra.mxu0 0.0
    %701 = vmatpush.msra.mxu0 0.0
    %702 = vmatpush.msra.mxu0 0.0
    %703 = vmatpush.msra.mxu0 0.0
    %704 = vmatpush.msra.mxu0 0.0
    %705 = vmatpush.msra.mxu0 0.0
    %706 = vmatpush.msra.mxu0 0.0
    %707 = vmatpush.msra.mxu0 0.0
    %708 = vmatpush.msra.mxu0 0.0
    %709 = vmatpush.msra.mxu0 %v556
    %710 = vmatpush.msra.mxu0 %v555
    %711 = vmatpush.msra.mxu0 %v554
    %712 = vmatpush.msra.mxu0 %v553
    %713 = vmatmul.f32.gmra.mxu0 %v227
    %v714 = vpop.f32.mrf.mxu0
    %v715 = vadd.f32 %v586, %v714
    %716 = vdwg.mxu0
    %717 = vmatpush.msra.mxu0 0.0
    %718 = vmatpush.msra.mxu0 0.0
    %719 = vmatpush.msra.mxu0 0.0
    %720 = vmatpush.msra.mxu0 0.0
    %721 = vmatpush.msra.mxu0 0.0
    %722 = vmatpush.msra.mxu0 0.0
    %723 = vmatpush.msra.mxu0 0.0
    %724 = vmatpush.msra.mxu0 0.0
    %725 = vmatpush.msra.mxu0 0.0
    %726 = vmatpush.msra.mxu0 0.0
    %727 = vmatpush.msra.mxu0 0.0
    %728 = vmatpush.msra.mxu0 0.0
    %729 = vmatpush.msra.mxu0 %v560
    %730 = vmatpush.msra.mxu0 %v559
    %731 = vmatpush.msra.mxu0 %v558
    %732 = vmatpush.msra.mxu0 %v557
    %733 = vmatmul.f32.gmra.mxu0 %v227
    %v734 = vpop.f32.mrf.mxu0
    %v735 = vadd.f32 %v587, %v734
    %736 = vdwg.mxu0
    %737 = vmatpush.msra.mxu0 0.0
    %738 = vmatpush.msra.mxu0 0.0
    %739 = vmatpush.msra.mxu0 0.0
    %740 = vmatpush.msra.mxu0 0.0
    %741 = vmatpush.msra.mxu0 0.0
    %742 = vmatpush.msra.mxu0 0.0
    %743 = vmatpush.msra.mxu0 0.0
    %744 = vmatpush.msra.mxu0 0.0
    %745 = vmatpush.msra.mxu0 0.0
    %746 = vmatpush.msra.mxu0 0.0
    %747 = vmatpush.msra.mxu0 0.0
    %748 = vmatpush.msra.mxu0 0.0
    %749 = vmatpush.msra.mxu0 %v564
    %750 = vmatpush.msra.mxu0 %v563
    %751 = vmatpush.msra.mxu0 %v562
    %752 = vmatpush.msra.mxu0 %v561
    %753 = vmatmul.f32.gmra.mxu0 %v227
    %v754 = vpop.f32.mrf.mxu0
    %v755 = vadd.f32 %v588, %v754
    %756 = vdwg.mxu0
    %vm757 = vcmask 64512
    %v759 = vsel %vm757, %v164, 0
    %v762 = vsel %vm757, %v391, 0
    %764 = vmatpush.xpose.msra.mxu0 0.0
    %765 = vmatpush.xpose.msra.mxu0 0.0
    %766 = vmatpush.xpose.msra.mxu0 0.0
    %767 = vmatpush.xpose.msra.mxu0 0.0
    %768 = vmatpush.xpose.msra.mxu0 0.0
    %769 = vmatpush.xpose.msra.mxu0 0.0
    %770 = vmatpush.xpose.msra.mxu0 0.0
    %771 = vmatpush.xpose.msra.mxu0 0.0
    %772 = vmatpush.xpose.msra.mxu0 0.0
    %773 = vmatpush.xpose.msra.mxu0 0.0
    %774 = vmatpush.xpose.msra.mxu0 0.0
    %775 = vmatpush.xpose.msra.mxu0 0.0
    %776 = vmatpush.xpose.msra.mxu0 0.0
    %777 = vmatpush.xpose.msra.mxu0 0.0
    %778 = vmatpush.xpose.msra.mxu0 0.0
    %779 = vmatpush.xpose.msra.mxu0 %v762
    %780 = vmatmul.f32.gmra.mxu0 %v759
    %v781 = vpop.f32.mrf.mxu0
    %v782 = vadd.f32 0.0, %v781
    %783 = vdwg.mxu0
    %v785 = vsel %vm757, %v184, 0
    %v788 = vsel %vm757, %v411, 0
    %790 = vmatpush.xpose.msra.mxu0 0.0
    %791 = vmatpush.xpose.msra.mxu0 0.0
    %792 = vmatpush.xpose.msra.mxu0 0.0
    %793 = vmatpush.xpose.msra.mxu0 0.0
    %794 = vmatpush.xpose.msra.mxu0 0.0
    %795 = vmatpush.xpose.msra.mxu0 0.0
    %796 = vmatpush.xpose.msra.mxu0 0.0
    %797 = vmatpush.xpose.msra.mxu0 0.0
    %798 = vmatpush.xpose.msra.mxu0 0.0
    %799 = vmatpush.xpose.msra.mxu0 0.0
    %800 = vmatpush.xpose.msra.mxu0 0.0
    %801 = vmatpush.xpose.msra.mxu0 0.0
    %802 = vmatpush.xpose.msra.mxu0 0.0
    %803 = vmatpush.xpose.msra.mxu0 0.0
    %804 = vmatpush.xpose.msra.mxu0 0.0
    %805 = vmatpush.xpose.msra.mxu0 %v788
    %806 = vmatmul.f32.gmra.mxu0 %v785
    %v807 = vpop.f32.mrf.mxu0
    %v808 = vadd.f32 0.0, %v807
    %809 = vdwg.mxu0
    %v811 = vsel %vm757, %v204, 0
    %v814 = vsel %vm757, %v431, 0
    %816 = vmatpush.xpose.msra.mxu0 0.0
    %817 = vmatpush.xpose.msra.mxu0 0.0
    %818 = vmatpush.xpose.msra.mxu0 0.0
    %819 = vmatpush.xpose.msra.mxu0 0.0
    %820 = vmatpush.xpose.msra.mxu0 0.0
    %821 = vmatpush.xpose.msra.mxu0 0.0
    %822 = vmatpush.xpose.msra.mxu0 0.0
    %823 = vmatpush.xpose.msra.mxu0 0.0
    %824 = vmatpush.xpose.msra.mxu0 0.0
    %825 = vmatpush.xpose.msra.mxu0 0.0
    %826 = vmatpush.xpose.msra.mxu0 0.0
    %827 = vmatpush.xpose.msra.mxu0 0.0
    %828 = vmatpush.xpose.msra.mxu0 0.0
    %829 = vmatpush.xpose.msra.mxu0 0.0
    %830 = vmatpush.xpose.msra.mxu0 0.0
    %831 = vmatpush.xpose.msra.mxu0 %v814
    %832 = vmatmul.f32.gmra.mxu0 %v811
    %v833 = vpop.f32.mrf.mxu0
    %v834 = vadd.f32 0.0, %v833
    %835 = vdwg.mxu0
    %v837 = vsel %vm757, %v224, 0
    %v840 = vsel %vm757, %v451, 0
    %842 = vmatpush.xpose.msra.mxu0 0.0
    %843 = vmatpush.xpose.msra.mxu0 0.0
    %844 = vmatpush.xpose.msra.mxu0 0.0
    %845 = vmatpush.xpose.msra.mxu0 0.0
    %846 = vmatpush.xpose.msra.mxu0 0.0
    %847 = vmatpush.xpose.msra.mxu0 0.0
    %848 = vmatpush.xpose.msra.mxu0 0.0
    %849 = vmatpush.xpose.msra.mxu0 0.0
    %850 = vmatpush.xpose.msra.mxu0 0.0
    %851 = vmatpush.xpose.msra.mxu0 0.0
    %852 = vmatpush.xpose.msra.mxu0 0.0
    %853 = vmatpush.xpose.msra.mxu0 0.0
    %854 = vmatpush.xpose.msra.mxu0 0.0
    %855 = vmatpush.xpose.msra.mxu0 0.0
    %856 = vmatpush.xpose.msra.mxu0 0.0
    %857 = vmatpush.xpose.msra.mxu0 %v840
    %858 = vmatmul.f32.gmra.mxu0 %v837
    %v859 = vpop.f32.mrf.mxu0
    %v860 = vadd.f32 0.0, %v859
    %861 = vdwg.mxu0
    %v863 = vsel %vm757, %v247, 0
    %v866 = vsel %vm757, %v471, 0
    %868 = vmatpush.xpose.msra.mxu0 0.0
    %869 = vmatpush.xpose.msra.mxu0 0.0
    %870 = vmatpush.xpose.msra.mxu0 0.0
    %871 = vmatpush.xpose.msra.mxu0 0.0
    %872 = vmatpush.xpose.msra.mxu0 0.0
    %873 = vmatpush.xpose.msra.mxu0 0.0
    %874 = vmatpush.xpose.msra.mxu0 0.0
    %875 = vmatpush.xpose.msra.mxu0 0.0
    %876 = vmatpush.xpose.msra.mxu0 0.0
    %877 = vmatpush.xpose.msra.mxu0 0.0
    %878 = vmatpush.xpose.msra.mxu0 0.0
    %879 = vmatpush.xpose.msra.mxu0 0.0
    %880 = vmatpush.xpose.msra.mxu0 0.0
    %881 = vmatpush.xpose.msra.mxu0 0.0
    %882 = vmatpush.xpose.msra.mxu0 0.0
    %883 = vmatpush.xpose.msra.mxu0 %v866
    %884 = vmatmul.f32.gmra.mxu0 %v863
    %v885 = vpop.f32.mrf.mxu0
    %v886 = vadd.f32 0.0, %v885
    %887 = vdwg.mxu0
    %v889 = vsel %vm757, %v267, 0
    %v892 = vsel %vm757, %v491, 0
    %894 = vmatpush.xpose.msra.mxu0 0.0
    %895 = vmatpush.xpose.msra.mxu0 0.0
    %896 = vmatpush.xpose.msra.mxu0 0.0
    %897 = vmatpush.xpose.msra.mxu0 0.0
    %898 = vmatpush.xpose.msra.mxu0 0.0
    %899 = vmatpush.xpose.msra.mxu0 0.0
    %900 = vmatpush.xpose.msra.mxu0 0.0
    %901 = vmatpush.xpose.msra.mxu0 0.0
    %902 = vmatpush.xpose.msra.mxu0 0.0
    %903 = vmatpush.xpose.msra.mxu0 0.0
    %904 = vmatpush.xpose.msra.mxu0 0.0
    %905 = vmatpush.xpose.msra.mxu0 0.0
    %906 = vmatpush.xpose.msra.mxu0 0.0
    %907 = vmatpush.xpose.msra.mxu0 0.0
    %908 = vmatpush.xpose.msra.mxu0 0.0
    %909 = vmatpush.xpose.msra.mxu0 %v892
    %910 = vmatmul.f32.gmra.mxu0 %v889
    %v911 = vpop.f32.mrf.mxu0
    %v912 = vadd.f32 0.0, %v911
    %913 = vdwg.mxu0
    %v915 = vsel %vm757, %v287, 0
    %v918 = vsel %vm757, %v511, 0
    %920 = vmatpush.xpose.msra.mxu0 0.0
    %921 = vmatpush.xpose.msra.mxu0 0.0
    %922 = vmatpush.xpose.msra.mxu0 0.0
    %923 = vmatpush.xpose.msra.mxu0 0.0
    %924 = vmatpush.xpose.msra.mxu0 0.0
    %925 = vmatpush.xpose.msra.mxu0 0.0
    %926 = vmatpush.xpose.msra.mxu0 0.0
    %927 = vmatpush.xpose.msra.mxu0 0.0
    %928 = vmatpush.xpose.msra.mxu0 0.0
    %929 = vmatpush.xpose.msra.mxu0 0.0
    %930 = vmatpush.xpose.msra.mxu0 0.0
    %931 = vmatpush.xpose.msra.mxu0 0.0
    %932 = vmatpush.xpose.msra.mxu0 0.0
    %933 = vmatpush.xpose.msra.mxu0 0.0
    %934 = vmatpush.xpose.msra.mxu0 0.0
    %935 = vmatpush.xpose.msra.mxu0 %v918
    %936 = vmatmul.f32.gmra.mxu0 %v915
    %v937 = vpop.f32.mrf.mxu0
    %v938 = vadd.f32 0.0, %v937
    %939 = vdwg.mxu0
    %v941 = vsel %vm757, %v307, 0
    %v944 = vsel %vm757, %v531, 0
    %946 = vmatpush.xpose.msra.mxu0 0.0
    %947 = vmatpush.xpose.msra.mxu0 0.0
    %948 = vmatpush.xpose.msra.mxu0 0.0
    %949 = vmatpush.xpose.msra.mxu0 0.0
    %950 = vmatpush.xpose.msra.mxu0 0.0
    %951 = vmatpush.xpose.msra.mxu0 0.0
    %952 = vmatpush.xpose.msra.mxu0 0.0
    %953 = vmatpush.xpose.msra.mxu0 0.0
    %954 = vmatpush.xpose.msra.mxu0 0.0
    %955 = vmatpush.xpose.msra.mxu0 0.0
    %956 = vmatpush.xpose.msra.mxu0 0.0
    %957 = vmatpush.xpose.msra.mxu0 0.0
    %958 = vmatpush.xpose.msra.mxu0 0.0
    %959 = vmatpush.xpose.msra.mxu0 0.0
    %960 = vmatpush.xpose.msra.mxu0 0.0
    %961 = vmatpush.xpose.msra.mxu0 %v944
    %962 = vmatmul.f32.gmra.mxu0 %v941
    %v963 = vpop.f32.mrf.mxu0
    %v964 = vadd.f32 0.0, %v963
    %965 = vdwg.mxu0
    %v966 = vmul.f32 %v782, 0.35355338
    %v967 = vmul.f32 %v808, 0.35355338
    %v968 = vmul.f32 %v834, 0.35355338
    %v969 = vmul.f32 %v860, 0.35355338
    %v970 = vmul.f32 %v886, 0.35355338
    %v971 = vmul.f32 %v912, 0.35355338
    %v972 = vmul.f32 %v938, 0.35355338
    %v973 = vmul.f32 %v964, 0.35355338
    %v974 = vsel %vm757, %v966, -inf
    %975 = vmax.xlane.f32.xlu0 %v974
    %v976 = vpop.xlane.xlu0 %975
    %v977 = vsel %vm757, %v967, -inf
    %978 = vmax.xlane.f32.xlu0 %v977
    %v979 = vpop.xlane.xlu0 %978
    %v980 = vsel %vm757, %v968, -inf
    %981 = vmax.xlane.f32.xlu0 %v980
    %v982 = vpop.xlane.xlu0 %981
    %v983 = vsel %vm757, %v969, -inf
    %984 = vmax.xlane.f32.xlu0 %v983
    %v985 = vpop.xlane.xlu0 %984
    %v986 = vsel %vm757, %v970, -inf
    %987 = vmax.xlane.f32.xlu0 %v986
    %v988 = vpop.xlane.xlu0 %987
    %v989 = vsel %vm757, %v971, -inf
    %990 = vmax.xlane.f32.xlu0 %v989
    %v991 = vpop.xlane.xlu0 %990
    %v992 = vsel %vm757, %v972, -inf
    %993 = vmax.xlane.f32.xlu0 %v992
    %v994 = vpop.xlane.xlu0 %993
    %v995 = vsel %vm757, %v973, -inf
    %996 = vmax.xlane.f32.xlu0 %v995
    %v997 = vpop.xlane.xlu0 %996
    %v998 = vsub.f32 %v966, %v976
    %v999 = vsub.f32 %v967, %v979
    %v1000 = vsub.f32 %v968, %v982
    %v1001 = vsub.f32 %v969, %v985
    %v1002 = vsub.f32 %v970, %v988
    %v1003 = vsub.f32 %v971, %v991
    %v1004 = vsub.f32 %v972, %v994
    %v1005 = vsub.f32 %v973, %v997
    %v1006 = vmul.f32 %v998, 1.442695
    %v1007 = vpow.pop %v1006
    %v1008 = vmul.f32 %v999, 1.442695
    %v1009 = vpow.pop %v1008
    %v1010 = vmul.f32 %v1000, 1.442695
    %v1011 = vpow.pop %v1010
    %v1012 = vmul.f32 %v1001, 1.442695
    %v1013 = vpow.pop %v1012
    %v1014 = vmul.f32 %v1002, 1.442695
    %v1015 = vpow.pop %v1014
    %v1016 = vmul.f32 %v1003, 1.442695
    %v1017 = vpow.pop %v1016
    %v1018 = vmul.f32 %v1004, 1.442695
    %v1019 = vpow.pop %v1018
    %v1020 = vmul.f32 %v1005, 1.442695
    %v1021 = vpow.pop %v1020
    %v1022 = vsel %vm757, %v1007, 0.0
    %1023 = vadd.xlane.f32.xlu0 %v1022
    %v1024 = vpop.xlane.xlu0 %1023
    %v1025 = vsel %vm757, %v1009, 0.0
    %1026 = vadd.xlane.f32.xlu0 %v1025
    %v1027 = vpop.xlane.xlu0 %1026
    %v1028 = vsel %vm757, %v1011, 0.0
    %1029 = vadd.xlane.f32.xlu0 %v1028
    %v1030 = vpop.xlane.xlu0 %1029
    %v1031 = vsel %vm757, %v1013, 0.0
    %1032 = vadd.xlane.f32.xlu0 %v1031
    %v1033 = vpop.xlane.xlu0 %1032
    %v1034 = vsel %vm757, %v1015, 0.0
    %1035 = vadd.xlane.f32.xlu0 %v1034
    %v1036 = vpop.xlane.xlu0 %1035
    %v1037 = vsel %vm757, %v1017, 0.0
    %1038 = vadd.xlane.f32.xlu0 %v1037
    %v1039 = vpop.xlane.xlu0 %1038
    %v1040 = vsel %vm757, %v1019, 0.0
    %1041 = vadd.xlane.f32.xlu0 %v1040
    %v1042 = vpop.xlane.xlu0 %1041
    %v1043 = vsel %vm757, %v1021, 0.0
    %1044 = vadd.xlane.f32.xlu0 %v1043
    %v1045 = vpop.xlane.xlu0 %1044
    %v1046 = vrcp.pop %v1024
    %v1047 = vrcp.pop %v1027
    %v1048 = vrcp.pop %v1030
    %v1049 = vrcp.pop %v1033
    %v1050 = vrcp.pop %v1036
    %v1051 = vrcp.pop %v1039
    %v1052 = vrcp.pop %v1042
    %v1053 = vrcp.pop %v1045
    %v1054 = vmul.f32 %v1007, %v1046
    %v1055 = vmul.f32 %v1009, %v1047
    %v1056 = vmul.f32 %v1011, %v1048
    %v1057 = vmul.f32 %v1013, %v1049
    %v1058 = vmul.f32 %v1015, %v1050
    %v1059 = vmul.f32 %v1017, %v1051
    %v1060 = vmul.f32 %v1019, %v1052
    %v1061 = vmul.f32 %v1021, %v1053
    %v1063 = vsel %vm757, %v1054, 0
    %1065 = vmatpush.msra.mxu0 0.0
    %1066 = vmatpush.msra.mxu0 0.0
    %1067 = vmatpush.msra.mxu0 0.0
    %1068 = vmatpush.msra.mxu0 0.0
    %1069 = vmatpush.msra.mxu0 0.0
    %1070 = vmatpush.msra.mxu0 0.0
    %1071 = vmatpush.msra.mxu0 0.0
    %1072 = vmatpush.msra.mxu0 0.0
    %1073 = vmatpush.msra.mxu0 0.0
    %1074 = vmatpush.msra.mxu0 0.0
    %1075 = vmatpush.msra.mxu0 0.0
    %1076 = vmatpush.msra.mxu0 0.0
    %1077 = vmatpush.msra.mxu0 0.0
    %1078 = vmatpush.msra.mxu0 0.0
    %1079 = vmatpush.msra.mxu0 0.0
    %1080 = vmatpush.msra.mxu0 %v615
    %1081 = vmatmul.f32.gmra.mxu0 %v1063
    %v1082 = vpop.f32.mrf.mxu0
    %v1083 = vadd.f32 0.0, %v1082
    %1084 = vdwg.mxu0
    %v1086 = vsel %vm757, %v1055, 0
    %1088 = vmatpush.msra.mxu0 0.0
    %1089 = vmatpush.msra.mxu0 0.0
    %1090 = vmatpush.msra.mxu0 0.0
    %1091 = vmatpush.msra.mxu0 0.0
    %1092 = vmatpush.msra.mxu0 0.0
    %1093 = vmatpush.msra.mxu0 0.0
    %1094 = vmatpush.msra.mxu0 0.0
    %1095 = vmatpush.msra.mxu0 0.0
    %1096 = vmatpush.msra.mxu0 0.0
    %1097 = vmatpush.msra.mxu0 0.0
    %1098 = vmatpush.msra.mxu0 0.0
    %1099 = vmatpush.msra.mxu0 0.0
    %1100 = vmatpush.msra.mxu0 0.0
    %1101 = vmatpush.msra.mxu0 0.0
    %1102 = vmatpush.msra.mxu0 0.0
    %1103 = vmatpush.msra.mxu0 %v635
    %1104 = vmatmul.f32.gmra.mxu0 %v1086
    %v1105 = vpop.f32.mrf.mxu0
    %v1106 = vadd.f32 0.0, %v1105
    %1107 = vdwg.mxu0
    %v1109 = vsel %vm757, %v1056, 0
    %1111 = vmatpush.msra.mxu0 0.0
    %1112 = vmatpush.msra.mxu0 0.0
    %1113 = vmatpush.msra.mxu0 0.0
    %1114 = vmatpush.msra.mxu0 0.0
    %1115 = vmatpush.msra.mxu0 0.0
    %1116 = vmatpush.msra.mxu0 0.0
    %1117 = vmatpush.msra.mxu0 0.0
    %1118 = vmatpush.msra.mxu0 0.0
    %1119 = vmatpush.msra.mxu0 0.0
    %1120 = vmatpush.msra.mxu0 0.0
    %1121 = vmatpush.msra.mxu0 0.0
    %1122 = vmatpush.msra.mxu0 0.0
    %1123 = vmatpush.msra.mxu0 0.0
    %1124 = vmatpush.msra.mxu0 0.0
    %1125 = vmatpush.msra.mxu0 0.0
    %1126 = vmatpush.msra.mxu0 %v655
    %1127 = vmatmul.f32.gmra.mxu0 %v1109
    %v1128 = vpop.f32.mrf.mxu0
    %v1129 = vadd.f32 0.0, %v1128
    %1130 = vdwg.mxu0
    %v1132 = vsel %vm757, %v1057, 0
    %1134 = vmatpush.msra.mxu0 0.0
    %1135 = vmatpush.msra.mxu0 0.0
    %1136 = vmatpush.msra.mxu0 0.0
    %1137 = vmatpush.msra.mxu0 0.0
    %1138 = vmatpush.msra.mxu0 0.0
    %1139 = vmatpush.msra.mxu0 0.0
    %1140 = vmatpush.msra.mxu0 0.0
    %1141 = vmatpush.msra.mxu0 0.0
    %1142 = vmatpush.msra.mxu0 0.0
    %1143 = vmatpush.msra.mxu0 0.0
    %1144 = vmatpush.msra.mxu0 0.0
    %1145 = vmatpush.msra.mxu0 0.0
    %1146 = vmatpush.msra.mxu0 0.0
    %1147 = vmatpush.msra.mxu0 0.0
    %1148 = vmatpush.msra.mxu0 0.0
    %1149 = vmatpush.msra.mxu0 %v675
    %1150 = vmatmul.f32.gmra.mxu0 %v1132
    %v1151 = vpop.f32.mrf.mxu0
    %v1152 = vadd.f32 0.0, %v1151
    %1153 = vdwg.mxu0
    %v1155 = vsel %vm757, %v1058, 0
    %1157 = vmatpush.msra.mxu0 0.0
    %1158 = vmatpush.msra.mxu0 0.0
    %1159 = vmatpush.msra.mxu0 0.0
    %1160 = vmatpush.msra.mxu0 0.0
    %1161 = vmatpush.msra.mxu0 0.0
    %1162 = vmatpush.msra.mxu0 0.0
    %1163 = vmatpush.msra.mxu0 0.0
    %1164 = vmatpush.msra.mxu0 0.0
    %1165 = vmatpush.msra.mxu0 0.0
    %1166 = vmatpush.msra.mxu0 0.0
    %1167 = vmatpush.msra.mxu0 0.0
    %1168 = vmatpush.msra.mxu0 0.0
    %1169 = vmatpush.msra.mxu0 0.0
    %1170 = vmatpush.msra.mxu0 0.0
    %1171 = vmatpush.msra.mxu0 0.0
    %1172 = vmatpush.msra.mxu0 %v695
    %1173 = vmatmul.f32.gmra.mxu0 %v1155
    %v1174 = vpop.f32.mrf.mxu0
    %v1175 = vadd.f32 0.0, %v1174
    %1176 = vdwg.mxu0
    %v1178 = vsel %vm757, %v1059, 0
    %1180 = vmatpush.msra.mxu0 0.0
    %1181 = vmatpush.msra.mxu0 0.0
    %1182 = vmatpush.msra.mxu0 0.0
    %1183 = vmatpush.msra.mxu0 0.0
    %1184 = vmatpush.msra.mxu0 0.0
    %1185 = vmatpush.msra.mxu0 0.0
    %1186 = vmatpush.msra.mxu0 0.0
    %1187 = vmatpush.msra.mxu0 0.0
    %1188 = vmatpush.msra.mxu0 0.0
    %1189 = vmatpush.msra.mxu0 0.0
    %1190 = vmatpush.msra.mxu0 0.0
    %1191 = vmatpush.msra.mxu0 0.0
    %1192 = vmatpush.msra.mxu0 0.0
    %1193 = vmatpush.msra.mxu0 0.0
    %1194 = vmatpush.msra.mxu0 0.0
    %1195 = vmatpush.msra.mxu0 %v715
    %1196 = vmatmul.f32.gmra.mxu0 %v1178
    %v1197 = vpop.f32.mrf.mxu0
    %v1198 = vadd.f32 0.0, %v1197
    %1199 = vdwg.mxu0
    %v1201 = vsel %vm757, %v1060, 0
    %1203 = vmatpush.msra.mxu0 0.0
    %1204 = vmatpush.msra.mxu0 0.0
    %1205 = vmatpush.msra.mxu0 0.0
    %1206 = vmatpush.msra.mxu0 0.0
    %1207 = vmatpush.msra.mxu0 0.0
    %1208 = vmatpush.msra.mxu0 0.0
    %1209 = vmatpush.msra.mxu0 0.0
    %1210 = vmatpush.msra.mxu0 0.0
    %1211 = vmatpush.msra.mxu0 0.0
    %1212 = vmatpush.msra.mxu0 0.0
    %1213 = vmatpush.msra.mxu0 0.0
    %1214 = vmatpush.msra.mxu0 0.0
    %1215 = vmatpush.msra.mxu0 0.0
    %1216 = vmatpush.msra.mxu0 0.0
    %1217 = vmatpush.msra.mxu0 0.0
    %1218 = vmatpush.msra.mxu0 %v735
    %1219 = vmatmul.f32.gmra.mxu0 %v1201
    %v1220 = vpop.f32.mrf.mxu0
    %v1221 = vadd.f32 0.0, %v1220
    %1222 = vdwg.mxu0
    %v1224 = vsel %vm757, %v1061, 0
    %1226 = vmatpush.msra.mxu0 0.0
    %1227 = vmatpush.msra.mxu0 0.0
    %1228 = vmatpush.msra.mxu0 0.0
    %1229 = vmatpush.msra.mxu0 0.0
    %1230 = vmatpush.msra.mxu0 0.0
    %1231 = vmatpush.msra.mxu0 0.0
    %1232 = vmatpush.msra.mxu0 0.0
    %1233 = vmatpush.msra.mxu0 0.0
    %1234 = vmatpush.msra.mxu0 0.0
    %1235 = vmatpush.msra.mxu0 0.0
    %1236 = vmatpush.msra.mxu0 0.0
    %1237 = vmatpush.msra.mxu0 0.0
    %1238 = vmatpush.msra.mxu0 0.0
    %1239 = vmatpush.msra.mxu0 0.0
    %1240 = vmatpush.msra.mxu0 0.0
    %1241 = vmatpush.msra.mxu0 %v755
    %1242 = vmatmul.f32.gmra.mxu0 %v1224
    %v1243 = vpop.f32.mrf.mxu0
    %v1244 = vadd.f32 0.0, %v1243
    %1245 = vdwg.mxu0
    %v1246 = vld [vmem:[%s8] sm:$0xff]
    %v1247 = vld [vmem:[%s8 + $0x8] sm:$0xff]
    %v1248 = vld [vmem:[%s8 + $0x10] sm:$0xff]
    %v1249 = vld [vmem:[%s8 + $0x18] sm:$0xff]
    %v1250 = vld [vmem:[%s8 + $0x20] sm:$0xff]
    %v1251 = vld [vmem:[%s8 + $0x28] sm:$0xff]
    %v1252 = vld [vmem:[%s8 + $0x30] sm:$0xff]
    %v1253 = vld [vmem:[%s8 + $0x38] sm:$0xff]
    %v1255 = vsel %vm757, %v1083, 0
    %1257 = vmatpush.msra.mxu0 0.0
    %1258 = vmatpush.msra.mxu0 0.0
    %1259 = vmatpush.msra.mxu0 0.0
    %1260 = vmatpush.msra.mxu0 0.0
    %1261 = vmatpush.msra.mxu0 0.0
    %1262 = vmatpush.msra.mxu0 0.0
    %1263 = vmatpush.msra.mxu0 0.0
    %1264 = vmatpush.msra.mxu0 0.0
    %1265 = vmatpush.msra.mxu0 0.0
    %1266 = vmatpush.msra.mxu0 0.0
    %1267 = vmatpush.msra.mxu0 0.0
    %1268 = vmatpush.msra.mxu0 0.0
    %1269 = vmatpush.msra.mxu0 0.0
    %1270 = vmatpush.msra.mxu0 0.0
    %1271 = vmatpush.msra.mxu0 0.0
    %1272 = vmatpush.msra.mxu0 %v1246
    %1273 = vmatmul.f32.gmra.mxu0 %v1255
    %v1274 = vpop.f32.mrf.mxu0
    %v1275 = vadd.f32 0.0, %v1274
    %1276 = vdwg.mxu0
    %v1278 = vsel %vm757, %v1106, 0
    %1280 = vmatpush.msra.mxu0 0.0
    %1281 = vmatpush.msra.mxu0 0.0
    %1282 = vmatpush.msra.mxu0 0.0
    %1283 = vmatpush.msra.mxu0 0.0
    %1284 = vmatpush.msra.mxu0 0.0
    %1285 = vmatpush.msra.mxu0 0.0
    %1286 = vmatpush.msra.mxu0 0.0
    %1287 = vmatpush.msra.mxu0 0.0
    %1288 = vmatpush.msra.mxu0 0.0
    %1289 = vmatpush.msra.mxu0 0.0
    %1290 = vmatpush.msra.mxu0 0.0
    %1291 = vmatpush.msra.mxu0 0.0
    %1292 = vmatpush.msra.mxu0 0.0
    %1293 = vmatpush.msra.mxu0 0.0
    %1294 = vmatpush.msra.mxu0 0.0
    %1295 = vmatpush.msra.mxu0 %v1247
    %1296 = vmatmul.f32.gmra.mxu0 %v1278
    %v1297 = vpop.f32.mrf.mxu0
    %v1298 = vadd.f32 0.0, %v1297
    %1299 = vdwg.mxu0
    %v1301 = vsel %vm757, %v1129, 0
    %1303 = vmatpush.msra.mxu0 0.0
    %1304 = vmatpush.msra.mxu0 0.0
    %1305 = vmatpush.msra.mxu0 0.0
    %1306 = vmatpush.msra.mxu0 0.0
    %1307 = vmatpush.msra.mxu0 0.0
    %1308 = vmatpush.msra.mxu0 0.0
    %1309 = vmatpush.msra.mxu0 0.0
    %1310 = vmatpush.msra.mxu0 0.0
    %1311 = vmatpush.msra.mxu0 0.0
    %1312 = vmatpush.msra.mxu0 0.0
    %1313 = vmatpush.msra.mxu0 0.0
    %1314 = vmatpush.msra.mxu0 0.0
    %1315 = vmatpush.msra.mxu0 0.0
    %1316 = vmatpush.msra.mxu0 0.0
    %1317 = vmatpush.msra.mxu0 0.0
    %1318 = vmatpush.msra.mxu0 %v1248
    %1319 = vmatmul.f32.gmra.mxu0 %v1301
    %v1320 = vpop.f32.mrf.mxu0
    %v1321 = vadd.f32 0.0, %v1320
    %1322 = vdwg.mxu0
    %v1324 = vsel %vm757, %v1152, 0
    %1326 = vmatpush.msra.mxu0 0.0
    %1327 = vmatpush.msra.mxu0 0.0
    %1328 = vmatpush.msra.mxu0 0.0
    %1329 = vmatpush.msra.mxu0 0.0
    %1330 = vmatpush.msra.mxu0 0.0
    %1331 = vmatpush.msra.mxu0 0.0
    %1332 = vmatpush.msra.mxu0 0.0
    %1333 = vmatpush.msra.mxu0 0.0
    %1334 = vmatpush.msra.mxu0 0.0
    %1335 = vmatpush.msra.mxu0 0.0
    %1336 = vmatpush.msra.mxu0 0.0
    %1337 = vmatpush.msra.mxu0 0.0
    %1338 = vmatpush.msra.mxu0 0.0
    %1339 = vmatpush.msra.mxu0 0.0
    %1340 = vmatpush.msra.mxu0 0.0
    %1341 = vmatpush.msra.mxu0 %v1249
    %1342 = vmatmul.f32.gmra.mxu0 %v1324
    %v1343 = vpop.f32.mrf.mxu0
    %v1344 = vadd.f32 0.0, %v1343
    %1345 = vdwg.mxu0
    %v1347 = vsel %vm757, %v1175, 0
    %1349 = vmatpush.msra.mxu0 0.0
    %1350 = vmatpush.msra.mxu0 0.0
    %1351 = vmatpush.msra.mxu0 0.0
    %1352 = vmatpush.msra.mxu0 0.0
    %1353 = vmatpush.msra.mxu0 0.0
    %1354 = vmatpush.msra.mxu0 0.0
    %1355 = vmatpush.msra.mxu0 0.0
    %1356 = vmatpush.msra.mxu0 0.0
    %1357 = vmatpush.msra.mxu0 0.0
    %1358 = vmatpush.msra.mxu0 0.0
    %1359 = vmatpush.msra.mxu0 0.0
    %1360 = vmatpush.msra.mxu0 0.0
    %1361 = vmatpush.msra.mxu0 0.0
    %1362 = vmatpush.msra.mxu0 0.0
    %1363 = vmatpush.msra.mxu0 0.0
    %1364 = vmatpush.msra.mxu0 %v1250
    %1365 = vmatmul.f32.gmra.mxu0 %v1347
    %v1366 = vpop.f32.mrf.mxu0
    %v1367 = vadd.f32 0.0, %v1366
    %1368 = vdwg.mxu0
    %v1370 = vsel %vm757, %v1198, 0
    %1372 = vmatpush.msra.mxu0 0.0
    %1373 = vmatpush.msra.mxu0 0.0
    %1374 = vmatpush.msra.mxu0 0.0
    %1375 = vmatpush.msra.mxu0 0.0
    %1376 = vmatpush.msra.mxu0 0.0
    %1377 = vmatpush.msra.mxu0 0.0
    %1378 = vmatpush.msra.mxu0 0.0
    %1379 = vmatpush.msra.mxu0 0.0
    %1380 = vmatpush.msra.mxu0 0.0
    %1381 = vmatpush.msra.mxu0 0.0
    %1382 = vmatpush.msra.mxu0 0.0
    %1383 = vmatpush.msra.mxu0 0.0
    %1384 = vmatpush.msra.mxu0 0.0
    %1385 = vmatpush.msra.mxu0 0.0
    %1386 = vmatpush.msra.mxu0 0.0
    %1387 = vmatpush.msra.mxu0 %v1251
    %1388 = vmatmul.f32.gmra.mxu0 %v1370
    %v1389 = vpop.f32.mrf.mxu0
    %v1390 = vadd.f32 0.0, %v1389
    %1391 = vdwg.mxu0
    %v1393 = vsel %vm757, %v1221, 0
    %1395 = vmatpush.msra.mxu0 0.0
    %1396 = vmatpush.msra.mxu0 0.0
    %1397 = vmatpush.msra.mxu0 0.0
    %1398 = vmatpush.msra.mxu0 0.0
    %1399 = vmatpush.msra.mxu0 0.0
    %1400 = vmatpush.msra.mxu0 0.0
    %1401 = vmatpush.msra.mxu0 0.0
    %1402 = vmatpush.msra.mxu0 0.0
    %1403 = vmatpush.msra.mxu0 0.0
    %1404 = vmatpush.msra.mxu0 0.0
    %1405 = vmatpush.msra.mxu0 0.0
    %1406 = vmatpush.msra.mxu0 0.0
    %1407 = vmatpush.msra.mxu0 0.0
    %1408 = vmatpush.msra.mxu0 0.0
    %1409 = vmatpush.msra.mxu0 0.0
    %1410 = vmatpush.msra.mxu0 %v1252
    %1411 = vmatmul.f32.gmra.mxu0 %v1393
    %v1412 = vpop.f32.mrf.mxu0
    %v1413 = vadd.f32 0.0, %v1412
    %1414 = vdwg.mxu0
    %v1416 = vsel %vm757, %v1244, 0
    %1418 = vmatpush.msra.mxu0 0.0
    %1419 = vmatpush.msra.mxu0 0.0
    %1420 = vmatpush.msra.mxu0 0.0
    %1421 = vmatpush.msra.mxu0 0.0
    %1422 = vmatpush.msra.mxu0 0.0
    %1423 = vmatpush.msra.mxu0 0.0
    %1424 = vmatpush.msra.mxu0 0.0
    %1425 = vmatpush.msra.mxu0 0.0
    %1426 = vmatpush.msra.mxu0 0.0
    %1427 = vmatpush.msra.mxu0 0.0
    %1428 = vmatpush.msra.mxu0 0.0
    %1429 = vmatpush.msra.mxu0 0.0
    %1430 = vmatpush.msra.mxu0 0.0
    %1431 = vmatpush.msra.mxu0 0.0
    %1432 = vmatpush.msra.mxu0 0.0
    %1433 = vmatpush.msra.mxu0 %v1253
    %1434 = vmatmul.f32.gmra.mxu0 %v1416
    %v1435 = vpop.f32.mrf.mxu0
    %v1436 = vadd.f32 0.0, %v1435
    %1437 = vdwg.mxu0
    %v1438 = vsel %vm142, %v1275, 0.0
    %v1439 = vsel %vm142, %v1298, 0.0
    %v1440 = vadd.f32 %v1438, %v1439
    %v1441 = vsel %vm142, %v1321, 0.0
    %v1442 = vadd.f32 %v1440, %v1441
    %v1443 = vsel %vm142, %v1344, 0.0
    %v1444 = vadd.f32 %v1442, %v1443
    %v1445 = vsel %vm142, %v1367, 0.0
    %v1446 = vsel %vm142, %v1390, 0.0
    %v1447 = vadd.f32 %v1445, %v1446
    %v1448 = vsel %vm142, %v1413, 0.0
    %v1449 = vadd.f32 %v1447, %v1448
    %v1450 = vsel %vm142, %v1436, 0.0
    %v1451 = vadd.f32 %v1449, %v1450
    %v1452 = vld [vmem:[%s9] sm:$0x1]
    %v1454 = vperm.slane %v1452, 0
    %v1456 = vadd.f32 %v1444, %v1454
    %v1457 = vadd.f32 %v1451, %v1454
    %v1458 = vadd.f32 %v76, %v1456
    %v1459 = vadd.f32 %v77, %v1457
    %v1460 = vld [vmem:[%s10] sm:$0x1]
    %v1461 = vld [vmem:[%s11] sm:$0x1]
    %v1462 = vsel %vm142, %v1458, 0.0
    %1463 = vadd.xlane.f32.xlu0 %v1462
    %v1464 = vpop.xlane.xlu0 %1463
    %v1465 = vsel %vm142, %v1459, 0.0
    %1466 = vadd.xlane.f32.xlu0 %v1465
    %v1467 = vpop.xlane.xlu0 %1466
    %v1468 = vrcp.pop 32.0
    %v1469 = vmul.f32 32.0, %v1468
    %v1470 = vsub.f32 1.0, %v1469
    %v1471 = vmul.f32 %v1468, %v1470
    %v1472 = vadd.f32 %v1468, %v1471
    %vm1473 = vweird.f32 %v1468
    %v1474 = vsel %vm1473, %v1468, %v1472
    %v1475 = vmul.f32 %v1464, %v1474
    %v1476 = vmul.f32 %v1467, %v1474
    %v1477 = vsub.f32 %v1458, %v1475
    %v1478 = vsub.f32 %v1459, %v1476
    %v1479 = vmul.f32 %v1477, %v1477
    %v1480 = vmul.f32 %v1478, %v1478
    %v1481 = vsel %vm142, %v1479, 0.0
    %1482 = vadd.xlane.f32.xlu0 %v1481
    %v1483 = vpop.xlane.xlu0 %1482
    %v1484 = vsel %vm142, %v1480, 0.0
    %1485 = vadd.xlane.f32.xlu0 %v1484
    %v1486 = vpop.xlane.xlu0 %1485
    %v1487 = vmul.f32 %v1483, %v1474
    %v1488 = vmul.f32 %v1486, %v1474
    %v1489 = vadd.f32 %v1487, 1e-05
    %v1490 = vadd.f32 %v1488, 1e-05
    %v1491 = vrsqrt.pop %v1489
    %v1492 = vmul.f32 %v1491, %v1489
    %v1493 = vmul.f32 %v1492, %v1491
    %v1494 = vmul.f32 0.5, %v1493
    %v1495 = vsub.f32 1.5, %v1494
    %v1496 = vmul.f32 %v1491, %v1495
    %vm1497 = vweird.f32 %v1489
    %vm1498 = vweird.f32 %v1491
    %vm1499 = vmor %vm1497, %vm1498
    %v1500 = vsel %vm1499, %v1491, %v1496
    %v1501 = vrsqrt.pop %v1490
    %v1502 = vmul.f32 %v1501, %v1490
    %v1503 = vmul.f32 %v1502, %v1501
    %v1504 = vmul.f32 0.5, %v1503
    %v1505 = vsub.f32 1.5, %v1504
    %v1506 = vmul.f32 %v1501, %v1505
    %vm1507 = vweird.f32 %v1490
    %vm1508 = vweird.f32 %v1501
    %vm1509 = vmor %vm1507, %vm1508
    %v1510 = vsel %vm1509, %v1501, %v1506
    %v1511 = vmul.f32 %v1477, %v1500
    %v1512 = vmul.f32 %v1478, %v1510
    %v1514 = vperm.slane %v1460, 0
    %v1516 = vmul.f32 %v1511, %v1514
    %v1517 = vmul.f32 %v1512, %v1514
    %v1519 = vperm.slane %v1461, 0
    %v1521 = vadd.f32 %v1516, %v1519
    %v1522 = vadd.f32 %v1517, %v1519
    %v1523 = vld [vmem:[%s12] sm:$0xff]
    %v1524 = vld [vmem:[%s12 + $0x8] sm:$0xff]
    %v1525 = vld [vmem:[%s12 + $0x10] sm:$0xff]
    %v1526 = vld [vmem:[%s12 + $0x18] sm:$0xff]
    %v1527 = vld [vmem:[%s13] sm:$0x1]
    %v1529 = vperm.slane %v1527, 0
    %v1532 = vsel %vm142, %v1521, 0
    %v1535 = vsel %vm142, %v1522, 0
    %1537 = vmatpush.msra.mxu0 0.0
    %1538 = vmatpush.msra.mxu0 0.0
    %1539 = vmatpush.msra.mxu0 0.0
    %1540 = vmatpush.msra.mxu0 0.0
    %1541 = vmatpush.msra.mxu0 0.0
    %1542 = vmatpush.msra.mxu0 0.0
    %1543 = vmatpush.msra.mxu0 0.0
    %1544 = vmatpush.msra.mxu0 0.0
    %1545 = vmatpush.msra.mxu0 0.0
    %1546 = vmatpush.msra.mxu0 0.0
    %1547 = vmatpush.msra.mxu0 0.0
    %1548 = vmatpush.msra.mxu0 0.0
    %1549 = vmatpush.msra.mxu0 %v1526
    %1550 = vmatpush.msra.mxu0 %v1525
    %1551 = vmatpush.msra.mxu0 %v1524
    %1552 = vmatpush.msra.mxu0 %v1523
    %1553 = vmatmul.f32.gmra.mxu0 %v1532
    %v1554 = vpop.f32.mrf.mxu0
    %v1555 = vadd.f32 %v1529, %v1554
    %1556 = vmatmul.f32.gmra.mxu0 %v1535
    %v1557 = vpop.f32.mrf.mxu0
    %v1558 = vadd.f32 %v1529, %v1557
    %1559 = vdwg.mxu0
    %v1560 = vmax.f32 %v1555, 0.0
    %v1561 = vmax.f32 %v1558, 0.0
    %v1562 = vld [vmem:[%s14] sm:$0xff]
    %v1563 = vld [vmem:[%s14 + $0x8] sm:$0xff]
    %v1564 = vld [vmem:[%s14 + $0x10] sm:$0xff]
    %v1565 = vld [vmem:[%s14 + $0x18] sm:$0xff]
    %v1566 = vld [vmem:[%s14 + $0x20] sm:$0xff]
    %v1567 = vld [vmem:[%s14 + $0x28] sm:$0xff]
    %v1568 = vld [vmem:[%s14 + $0x30] sm:$0xff]
    %v1569 = vld [vmem:[%s14 + $0x38] sm:$0xff]
    %v1570 = vld [vmem:[%s15] sm:$0x1]
    %v1572 = vperm.slane %v1570, 0
    %vm1574 = vcmask 523264
    %v1576 = vsel %vm1574, %v1560, 0
    %v1579 = vsel %vm1574, %v1561, 0
    %1581 = vmatpush.msra.mxu0 0.0
    %1582 = vmatpush.msra.mxu0 0.0
    %1583 = vmatpush.msra.mxu0 0.0
    %1584 = vmatpush.msra.mxu0 0.0
    %1585 = vmatpush.msra.mxu0 0.0
    %1586 = vmatpush.msra.mxu0 0.0
    %1587 = vmatpush.msra.mxu0 0.0
    %1588 = vmatpush.msra.mxu0 0.0
    %1589 = vmatpush.msra.mxu0 %v1569
    %1590 = vmatpush.msra.mxu0 %v1568
    %1591 = vmatpush.msra.mxu0 %v1567
    %1592 = vmatpush.msra.mxu0 %v1566
    %1593 = vmatpush.msra.mxu0 %v1565
    %1594 = vmatpush.msra.mxu0 %v1564
    %1595 = vmatpush.msra.mxu0 %v1563
    %1596 = vmatpush.msra.mxu0 %v1562
    %1597 = vmatmul.f32.gmra.mxu0 %v1576
    %v1598 = vpop.f32.mrf.mxu0
    %v1599 = vadd.f32 %v1572, %v1598
    %1600 = vmatmul.f32.gmra.mxu0 %v1579
    %v1601 = vpop.f32.mrf.mxu0
    %v1602 = vadd.f32 %v1572, %v1601
    %1603 = vdwg.mxu0
    %v1604 = vadd.f32 %v1521, %v1599
    %v1605 = vadd.f32 %v1522, %v1602
    %v1606 = vld [vmem:[%s16] sm:$0x1]
    %v1607 = vld [vmem:[%s17] sm:$0x1]
    %v1608 = vsel %vm142, %v1604, 0.0
    %1609 = vadd.xlane.f32.xlu0 %v1608
    %v1610 = vpop.xlane.xlu0 %1609
    %v1611 = vsel %vm142, %v1605, 0.0
    %1612 = vadd.xlane.f32.xlu0 %v1611
    %v1613 = vpop.xlane.xlu0 %1612
    %v1614 = vmul.f32 %v1610, %v1474
    %v1615 = vmul.f32 %v1613, %v1474
    %v1616 = vsub.f32 %v1604, %v1614
    %v1617 = vsub.f32 %v1605, %v1615
    %v1618 = vmul.f32 %v1616, %v1616
    %v1619 = vmul.f32 %v1617, %v1617
    %v1620 = vsel %vm142, %v1618, 0.0
    %1621 = vadd.xlane.f32.xlu0 %v1620
    %v1622 = vpop.xlane.xlu0 %1621
    %v1623 = vsel %vm142, %v1619, 0.0
    %1624 = vadd.xlane.f32.xlu0 %v1623
    %v1625 = vpop.xlane.xlu0 %1624
    %v1626 = vmul.f32 %v1622, %v1474
    %v1627 = vmul.f32 %v1625, %v1474
    %v1628 = vadd.f32 %v1626, 1e-05
    %v1629 = vadd.f32 %v1627, 1e-05
    %v1630 = vrsqrt.pop %v1628
    %v1631 = vmul.f32 %v1630, %v1628
    %v1632 = vmul.f32 %v1631, %v1630
    %v1633 = vmul.f32 0.5, %v1632
    %v1634 = vsub.f32 1.5, %v1633
    %v1635 = vmul.f32 %v1630, %v1634
    %vm1636 = vweird.f32 %v1628
    %vm1637 = vweird.f32 %v1630
    %vm1638 = vmor %vm1636, %vm1637
    %v1639 = vsel %vm1638, %v1630, %v1635
    %v1640 = vrsqrt.pop %v1629
    %v1641 = vmul.f32 %v1640, %v1629
    %v1642 = vmul.f32 %v1641, %v1640
    %v1643 = vmul.f32 0.5, %v1642
    %v1644 = vsub.f32 1.5, %v1643
    %v1645 = vmul.f32 %v1640, %v1644
    %vm1646 = vweird.f32 %v1629
    %vm1647 = vweird.f32 %v1640
    %vm1648 = vmor %vm1646, %vm1647
    %v1649 = vsel %vm1648, %v1640, %v1645
    %v1650 = vmul.f32 %v1616, %v1639
    %v1651 = vmul.f32 %v1617, %v1649
    %v1653 = vperm.slane %v1606, 0
    %v1655 = vmul.f32 %v1650, %v1653
    %v1656 = vmul.f32 %v1651, %v1653
    %v1658 = vperm.slane %v1607, 0
    %v1660 = vadd.f32 %v1655, %v1658
    %v1661 = vadd.f32 %v1656, %v1658
    %s1662 = scalar_lea.vmem %s2, 256
    %v1663 = vld [vmem:[%s1662] sm:$0xff]
    %v1664 = vld [vmem:[%s1662 + $0x8] sm:$0xff]
    %v1665 = vld [vmem:[%s1662 + $0x10] sm:$0xff]
    %v1666 = vld [vmem:[%s1662 + $0x18] sm:$0xff]
    %v1667 = vld [vmem:[%s1662 + $0x20] sm:$0xff]
    %v1668 = vld [vmem:[%s1662 + $0x28] sm:$0xff]
    %v1669 = vld [vmem:[%s1662 + $0x30] sm:$0xff]
    %v1670 = vld [vmem:[%s1662 + $0x38] sm:$0xff]
    %v1671 = vld [vmem:[%s1662 + $0x40] sm:$0xff]
    %v1672 = vld [vmem:[%s1662 + $0x48] sm:$0xff]
    %v1673 = vld [vmem:[%s1662 + $0x50] sm:$0xff]
    %v1674 = vld [vmem:[%s1662 + $0x58] sm:$0xff]
    %v1675 = vld [vmem:[%s1662 + $0x60] sm:$0xff]
    %v1676 = vld [vmem:[%s1662 + $0x68] sm:$0xff]
    %v1677 = vld [vmem:[%s1662 + $0x70] sm:$0xff]
    %v1678 = vld [vmem:[%s1662 + $0x78] sm:$0xff]
    %v1679 = vld [vmem:[%s1662 + $0x80] sm:$0xff]
    %v1680 = vld [vmem:[%s1662 + $0x88] sm:$0xff]
    %v1681 = vld [vmem:[%s1662 + $0x90] sm:$0xff]
    %v1682 = vld [vmem:[%s1662 + $0x98] sm:$0xff]
    %v1683 = vld [vmem:[%s1662 + $0xa0] sm:$0xff]
    %v1684 = vld [vmem:[%s1662 + $0xa8] sm:$0xff]
    %v1685 = vld [vmem:[%s1662 + $0xb0] sm:$0xff]
    %v1686 = vld [vmem:[%s1662 + $0xb8] sm:$0xff]
    %v1687 = vld [vmem:[%s1662 + $0xc0] sm:$0xff]
    %v1688 = vld [vmem:[%s1662 + $0xc8] sm:$0xff]
    %v1689 = vld [vmem:[%s1662 + $0xd0] sm:$0xff]
    %v1690 = vld [vmem:[%s1662 + $0xd8] sm:$0xff]
    %v1691 = vld [vmem:[%s1662 + $0xe0] sm:$0xff]
    %v1692 = vld [vmem:[%s1662 + $0xe8] sm:$0xff]
    %v1693 = vld [vmem:[%s1662 + $0xf0] sm:$0xff]
    %v1694 = vld [vmem:[%s1662 + $0xf8] sm:$0xff]
    %s1695 = scalar_lea.vmem %s5, 8
    %v1696 = vld [vmem:[%s1695] sm:$0x1]
    %v1697 = vld [vmem:[%s1695 + $0x1] sm:$0x1]
    %v1698 = vld [vmem:[%s1695 + $0x2] sm:$0x1]
    %v1699 = vld [vmem:[%s1695 + $0x3] sm:$0x1]
    %v1700 = vld [vmem:[%s1695 + $0x4] sm:$0x1]
    %v1701 = vld [vmem:[%s1695 + $0x5] sm:$0x1]
    %v1702 = vld [vmem:[%s1695 + $0x6] sm:$0x1]
    %v1703 = vld [vmem:[%s1695 + $0x7] sm:$0x1]
    %v1712 = vperm.slane %v1696, 0
    %v1713 = vperm.slane %v1697, 0
    %v1714 = vperm.slane %v1698, 0
    %v1715 = vperm.slane %v1699, 0
    %v1716 = vperm.slane %v1700, 0
    %v1717 = vperm.slane %v1701, 0
    %v1718 = vperm.slane %v1702, 0
    %v1719 = vperm.slane %v1703, 0
    %v1729 = vsel %vm142, %v1660, 0
    %1731 = vmatpush.msra.mxu0 0.0
    %1732 = vmatpush.msra.mxu0 0.0
    %1733 = vmatpush.msra.mxu0 0.0
    %1734 = vmatpush.msra.mxu0 0.0
    %1735 = vmatpush.msra.mxu0 0.0
    %1736 = vmatpush.msra.mxu0 0.0
    %1737 = vmatpush.msra.mxu0 0.0
    %1738 = vmatpush.msra.mxu0 0.0
    %1739 = vmatpush.msra.mxu0 0.0
    %1740 = vmatpush.msra.mxu0 0.0
    %1741 = vmatpush.msra.mxu0 0.0
    %1742 = vmatpush.msra.mxu0 0.0
    %1743 = vmatpush.msra.mxu0 %v1666
    %1744 = vmatpush.msra.mxu0 %v1665
    %1745 = vmatpush.msra.mxu0 %v1664
    %1746 = vmatpush.msra.mxu0 %v1663
    %1747 = vmatmul.f32.gmra.mxu0 %v1729
    %v1748 = vpop.f32.mrf.mxu0
    %v1749 = vadd.f32 %v1712, %v1748
    %1750 = vdwg.mxu0
    %1751 = vmatpush.msra.mxu0 0.0
    %1752 = vmatpush.msra.mxu0 0.0
    %1753 = vmatpush.msra.mxu0 0.0
    %1754 = vmatpush.msra.mxu0 0.0
    %1755 = vmatpush.msra.mxu0 0.0
    %1756 = vmatpush.msra.mxu0 0.0
    %1757 = vmatpush.msra.mxu0 0.0
    %1758 = vmatpush.msra.mxu0 0.0
    %1759 = vmatpush.msra.mxu0 0.0
    %1760 = vmatpush.msra.mxu0 0.0
    %1761 = vmatpush.msra.mxu0 0.0
    %1762 = vmatpush.msra.mxu0 0.0
    %1763 = vmatpush.msra.mxu0 %v1670
    %1764 = vmatpush.msra.mxu0 %v1669
    %1765 = vmatpush.msra.mxu0 %v1668
    %1766 = vmatpush.msra.mxu0 %v1667
    %1767 = vmatmul.f32.gmra.mxu0 %v1729
    %v1768 = vpop.f32.mrf.mxu0
    %v1769 = vadd.f32 %v1713, %v1768
    %1770 = vdwg.mxu0
    %1771 = vmatpush.msra.mxu0 0.0
    %1772 = vmatpush.msra.mxu0 0.0
    %1773 = vmatpush.msra.mxu0 0.0
    %1774 = vmatpush.msra.mxu0 0.0
    %1775 = vmatpush.msra.mxu0 0.0
    %1776 = vmatpush.msra.mxu0 0.0
    %1777 = vmatpush.msra.mxu0 0.0
    %1778 = vmatpush.msra.mxu0 0.0
    %1779 = vmatpush.msra.mxu0 0.0
    %1780 = vmatpush.msra.mxu0 0.0
    %1781 = vmatpush.msra.mxu0 0.0
    %1782 = vmatpush.msra.mxu0 0.0
    %1783 = vmatpush.msra.mxu0 %v1674
    %1784 = vmatpush.msra.mxu0 %v1673
    %1785 = vmatpush.msra.mxu0 %v1672
    %1786 = vmatpush.msra.mxu0 %v1671
    %1787 = vmatmul.f32.gmra.mxu0 %v1729
    %v1788 = vpop.f32.mrf.mxu0
    %v1789 = vadd.f32 %v1714, %v1788
    %1790 = vdwg.mxu0
    %1791 = vmatpush.msra.mxu0 0.0
    %1792 = vmatpush.msra.mxu0 0.0
    %1793 = vmatpush.msra.mxu0 0.0
    %1794 = vmatpush.msra.mxu0 0.0
    %1795 = vmatpush.msra.mxu0 0.0
    %1796 = vmatpush.msra.mxu0 0.0
    %1797 = vmatpush.msra.mxu0 0.0
    %1798 = vmatpush.msra.mxu0 0.0
    %1799 = vmatpush.msra.mxu0 0.0
    %1800 = vmatpush.msra.mxu0 0.0
    %1801 = vmatpush.msra.mxu0 0.0
    %1802 = vmatpush.msra.mxu0 0.0
    %1803 = vmatpush.msra.mxu0 %v1678
    %1804 = vmatpush.msra.mxu0 %v1677
    %1805 = vmatpush.msra.mxu0 %v1676
    %1806 = vmatpush.msra.mxu0 %v1675
    %1807 = vmatmul.f32.gmra.mxu0 %v1729
    %v1808 = vpop.f32.mrf.mxu0
    %v1809 = vadd.f32 %v1715, %v1808
    %1810 = vdwg.mxu0
    %v1812 = vsel %vm142, %v1661, 0
    %1814 = vmatpush.msra.mxu0 0.0
    %1815 = vmatpush.msra.mxu0 0.0
    %1816 = vmatpush.msra.mxu0 0.0
    %1817 = vmatpush.msra.mxu0 0.0
    %1818 = vmatpush.msra.mxu0 0.0
    %1819 = vmatpush.msra.mxu0 0.0
    %1820 = vmatpush.msra.mxu0 0.0
    %1821 = vmatpush.msra.mxu0 0.0
    %1822 = vmatpush.msra.mxu0 0.0
    %1823 = vmatpush.msra.mxu0 0.0
    %1824 = vmatpush.msra.mxu0 0.0
    %1825 = vmatpush.msra.mxu0 0.0
    %1826 = vmatpush.msra.mxu0 %v1682
    %1827 = vmatpush.msra.mxu0 %v1681
    %1828 = vmatpush.msra.mxu0 %v1680
    %1829 = vmatpush.msra.mxu0 %v1679
    %1830 = vmatmul.f32.gmra.mxu0 %v1812
    %v1831 = vpop.f32.mrf.mxu0
    %v1832 = vadd.f32 %v1716, %v1831
    %1833 = vdwg.mxu0
    %1834 = vmatpush.msra.mxu0 0.0
    %1835 = vmatpush.msra.mxu0 0.0
    %1836 = vmatpush.msra.mxu0 0.0
    %1837 = vmatpush.msra.mxu0 0.0
    %1838 = vmatpush.msra.mxu0 0.0
    %1839 = vmatpush.msra.mxu0 0.0
    %1840 = vmatpush.msra.mxu0 0.0
    %1841 = vmatpush.msra.mxu0 0.0
    %1842 = vmatpush.msra.mxu0 0.0
    %1843 = vmatpush.msra.mxu0 0.0
    %1844 = vmatpush.msra.mxu0 0.0
    %1845 = vmatpush.msra.mxu0 0.0
    %1846 = vmatpush.msra.mxu0 %v1686
    %1847 = vmatpush.msra.mxu0 %v1685
    %1848 = vmatpush.msra.mxu0 %v1684
    %1849 = vmatpush.msra.mxu0 %v1683
    %1850 = vmatmul.f32.gmra.mxu0 %v1812
    %v1851 = vpop.f32.mrf.mxu0
    %v1852 = vadd.f32 %v1717, %v1851
    %1853 = vdwg.mxu0
    %1854 = vmatpush.msra.mxu0 0.0
    %1855 = vmatpush.msra.mxu0 0.0
    %1856 = vmatpush.msra.mxu0 0.0
    %1857 = vmatpush.msra.mxu0 0.0
    %1858 = vmatpush.msra.mxu0 0.0
    %1859 = vmatpush.msra.mxu0 0.0
    %1860 = vmatpush.msra.mxu0 0.0
    %1861 = vmatpush.msra.mxu0 0.0
    %1862 = vmatpush.msra.mxu0 0.0
    %1863 = vmatpush.msra.mxu0 0.0
    %1864 = vmatpush.msra.mxu0 0.0
    %1865 = vmatpush.msra.mxu0 0.0
    %1866 = vmatpush.msra.mxu0 %v1690
    %1867 = vmatpush.msra.mxu0 %v1689
    %1868 = vmatpush.msra.mxu0 %v1688
    %1869 = vmatpush.msra.mxu0 %v1687
    %1870 = vmatmul.f32.gmra.mxu0 %v1812
    %v1871 = vpop.f32.mrf.mxu0
    %v1872 = vadd.f32 %v1718, %v1871
    %1873 = vdwg.mxu0
    %1874 = vmatpush.msra.mxu0 0.0
    %1875 = vmatpush.msra.mxu0 0.0
    %1876 = vmatpush.msra.mxu0 0.0
    %1877 = vmatpush.msra.mxu0 0.0
    %1878 = vmatpush.msra.mxu0 0.0
    %1879 = vmatpush.msra.mxu0 0.0
    %1880 = vmatpush.msra.mxu0 0.0
    %1881 = vmatpush.msra.mxu0 0.0
    %1882 = vmatpush.msra.mxu0 0.0
    %1883 = vmatpush.msra.mxu0 0.0
    %1884 = vmatpush.msra.mxu0 0.0
    %1885 = vmatpush.msra.mxu0 0.0
    %1886 = vmatpush.msra.mxu0 %v1694
    %1887 = vmatpush.msra.mxu0 %v1693
    %1888 = vmatpush.msra.mxu0 %v1692
    %1889 = vmatpush.msra.mxu0 %v1691
    %1890 = vmatmul.f32.gmra.mxu0 %v1812
    %v1891 = vpop.f32.mrf.mxu0
    %v1892 = vadd.f32 %v1719, %v1891
    %1893 = vdwg.mxu0
    %s1894 = scalar_lea.vmem %s3, 256
    %v1895 = vld [vmem:[%s1894] sm:$0xff]
    %v1896 = vld [vmem:[%s1894 + $0x8] sm:$0xff]
    %v1897 = vld [vmem:[%s1894 + $0x10] sm:$0xff]
    %v1898 = vld [vmem:[%s1894 + $0x18] sm:$0xff]
    %v1899 = vld [vmem:[%s1894 + $0x20] sm:$0xff]
    %v1900 = vld [vmem:[%s1894 + $0x28] sm:$0xff]
    %v1901 = vld [vmem:[%s1894 + $0x30] sm:$0xff]
    %v1902 = vld [vmem:[%s1894 + $0x38] sm:$0xff]
    %v1903 = vld [vmem:[%s1894 + $0x40] sm:$0xff]
    %v1904 = vld [vmem:[%s1894 + $0x48] sm:$0xff]
    %v1905 = vld [vmem:[%s1894 + $0x50] sm:$0xff]
    %v1906 = vld [vmem:[%s1894 + $0x58] sm:$0xff]
    %v1907 = vld [vmem:[%s1894 + $0x60] sm:$0xff]
    %v1908 = vld [vmem:[%s1894 + $0x68] sm:$0xff]
    %v1909 = vld [vmem:[%s1894 + $0x70] sm:$0xff]
    %v1910 = vld [vmem:[%s1894 + $0x78] sm:$0xff]
    %v1911 = vld [vmem:[%s1894 + $0x80] sm:$0xff]
    %v1912 = vld [vmem:[%s1894 + $0x88] sm:$0xff]
    %v1913 = vld [vmem:[%s1894 + $0x90] sm:$0xff]
    %v1914 = vld [vmem:[%s1894 + $0x98] sm:$0xff]
    %v1915 = vld [vmem:[%s1894 + $0xa0] sm:$0xff]
    %v1916 = vld [vmem:[%s1894 + $0xa8] sm:$0xff]
    %v1917 = vld [vmem:[%s1894 + $0xb0] sm:$0xff]
    %v1918 = vld [vmem:[%s1894 + $0xb8] sm:$0xff]
    %v1919 = vld [vmem:[%s1894 + $0xc0] sm:$0xff]
    %v1920 = vld [vmem:[%s1894 + $0xc8] sm:$0xff]
    %v1921 = vld [vmem:[%s1894 + $0xd0] sm:$0xff]
    %v1922 = vld [vmem:[%s1894 + $0xd8] sm:$0xff]
    %v1923 = vld [vmem:[%s1894 + $0xe0] sm:$0xff]
    %v1924 = vld [vmem:[%s1894 + $0xe8] sm:$0xff]
    %v1925 = vld [vmem:[%s1894 + $0xf0] sm:$0xff]
    %v1926 = vld [vmem:[%s1894 + $0xf8] sm:$0xff]
    %s1927 = scalar_lea.vmem %s6, 8
    %v1928 = vld [vmem:[%s1927] sm:$0x1]
    %v1929 = vld [vmem:[%s1927 + $0x1] sm:$0x1]
    %v1930 = vld [vmem:[%s1927 + $0x2] sm:$0x1]
    %v1931 = vld [vmem:[%s1927 + $0x3] sm:$0x1]
    %v1932 = vld [vmem:[%s1927 + $0x4] sm:$0x1]
    %v1933 = vld [vmem:[%s1927 + $0x5] sm:$0x1]
    %v1934 = vld [vmem:[%s1927 + $0x6] sm:$0x1]
    %v1935 = vld [vmem:[%s1927 + $0x7] sm:$0x1]
    %v1944 = vperm.slane %v1928, 0
    %v1945 = vperm.slane %v1929, 0
    %v1946 = vperm.slane %v1930, 0
    %v1947 = vperm.slane %v1931, 0
    %v1948 = vperm.slane %v1932, 0
    %v1949 = vperm.slane %v1933, 0
    %v1950 = vperm.slane %v1934, 0
    %v1951 = vperm.slane %v1935, 0
    %1960 = vmatpush.msra.mxu0 0.0
    %1961 = vmatpush.msra.mxu0 0.0
    %1962 = vmatpush.msra.mxu0 0.0
    %1963 = vmatpush.msra.mxu0 0.0
    %1964 = vmatpush.msra.mxu0 0.0
    %1965 = vmatpush.msra.mxu0 0.0
    %1966 = vmatpush.msra.mxu0 0.0
    %1967 = vmatpush.msra.mxu0 0.0
    %1968 = vmatpush.msra.mxu0 0.0
    %1969 = vmatpush.msra.mxu0 0.0
    %1970 = vmatpush.msra.mxu0 0.0
    %1971 = vmatpush.msra.mxu0 0.0
    %1972 = vmatpush.msra.mxu0 %v1898
    %1973 = vmatpush.msra.mxu0 %v1897
    %1974 = vmatpush.msra.mxu0 %v1896
    %1975 = vmatpush.msra.mxu0 %v1895
    %1976 = vmatmul.f32.gmra.mxu0 %v1729
    %v1977 = vpop.f32.mrf.mxu0
    %v1978 = vadd.f32 %v1944, %v1977
    %1979 = vdwg.mxu0
    %1980 = vmatpush.msra.mxu0 0.0
    %1981 = vmatpush.msra.mxu0 0.0
    %1982 = vmatpush.msra.mxu0 0.0
    %1983 = vmatpush.msra.mxu0 0.0
    %1984 = vmatpush.msra.mxu0 0.0
    %1985 = vmatpush.msra.mxu0 0.0
    %1986 = vmatpush.msra.mxu0 0.0
    %1987 = vmatpush.msra.mxu0 0.0
    %1988 = vmatpush.msra.mxu0 0.0
    %1989 = vmatpush.msra.mxu0 0.0
    %1990 = vmatpush.msra.mxu0 0.0
    %1991 = vmatpush.msra.mxu0 0.0
    %1992 = vmatpush.msra.mxu0 %v1902
    %1993 = vmatpush.msra.mxu0 %v1901
    %1994 = vmatpush.msra.mxu0 %v1900
    %1995 = vmatpush.msra.mxu0 %v1899
    %1996 = vmatmul.f32.gmra.mxu0 %v1729
    %v1997 = vpop.f32.mrf.mxu0
    %v1998 = vadd.f32 %v1945, %v1997
    %1999 = vdwg.mxu0
    %2000 = vmatpush.msra.mxu0 0.0
    %2001 = vmatpush.msra.mxu0 0.0
    %2002 = vmatpush.msra.mxu0 0.0
    %2003 = vmatpush.msra.mxu0 0.0
    %2004 = vmatpush.msra.mxu0 0.0
    %2005 = vmatpush.msra.mxu0 0.0
    %2006 = vmatpush.msra.mxu0 0.0
    %2007 = vmatpush.msra.mxu0 0.0
    %2008 = vmatpush.msra.mxu0 0.0
    %2009 = vmatpush.msra.mxu0 0.0
    %2010 = vmatpush.msra.mxu0 0.0
    %2011 = vmatpush.msra.mxu0 0.0
    %2012 = vmatpush.msra.mxu0 %v1906
    %2013 = vmatpush.msra.mxu0 %v1905
    %2014 = vmatpush.msra.mxu0 %v1904
    %2015 = vmatpush.msra.mxu0 %v1903
    %2016 = vmatmul.f32.gmra.mxu0 %v1729
    %v2017 = vpop.f32.mrf.mxu0
    %v2018 = vadd.f32 %v1946, %v2017
    %2019 = vdwg.mxu0
    %2020 = vmatpush.msra.mxu0 0.0
    %2021 = vmatpush.msra.mxu0 0.0
    %2022 = vmatpush.msra.mxu0 0.0
    %2023 = vmatpush.msra.mxu0 0.0
    %2024 = vmatpush.msra.mxu0 0.0
    %2025 = vmatpush.msra.mxu0 0.0
    %2026 = vmatpush.msra.mxu0 0.0
    %2027 = vmatpush.msra.mxu0 0.0
    %2028 = vmatpush.msra.mxu0 0.0
    %2029 = vmatpush.msra.mxu0 0.0
    %2030 = vmatpush.msra.mxu0 0.0
    %2031 = vmatpush.msra.mxu0 0.0
    %2032 = vmatpush.msra.mxu0 %v1910
    %2033 = vmatpush.msra.mxu0 %v1909
    %2034 = vmatpush.msra.mxu0 %v1908
    %2035 = vmatpush.msra.mxu0 %v1907
    %2036 = vmatmul.f32.gmra.mxu0 %v1729
    %v2037 = vpop.f32.mrf.mxu0
    %v2038 = vadd.f32 %v1947, %v2037
    %2039 = vdwg.mxu0
    %2040 = vmatpush.msra.mxu0 0.0
    %2041 = vmatpush.msra.mxu0 0.0
    %2042 = vmatpush.msra.mxu0 0.0
    %2043 = vmatpush.msra.mxu0 0.0
    %2044 = vmatpush.msra.mxu0 0.0
    %2045 = vmatpush.msra.mxu0 0.0
    %2046 = vmatpush.msra.mxu0 0.0
    %2047 = vmatpush.msra.mxu0 0.0
    %2048 = vmatpush.msra.mxu0 0.0
    %2049 = vmatpush.msra.mxu0 0.0
    %2050 = vmatpush.msra.mxu0 0.0
    %2051 = vmatpush.msra.mxu0 0.0
    %2052 = vmatpush.msra.mxu0 %v1914
    %2053 = vmatpush.msra.mxu0 %v1913
    %2054 = vmatpush.msra.mxu0 %v1912
    %2055 = vmatpush.msra.mxu0 %v1911
    %2056 = vmatmul.f32.gmra.mxu0 %v1812
    %v2057 = vpop.f32.mrf.mxu0
    %v2058 = vadd.f32 %v1948, %v2057
    %2059 = vdwg.mxu0
    %2060 = vmatpush.msra.mxu0 0.0
    %2061 = vmatpush.msra.mxu0 0.0
    %2062 = vmatpush.msra.mxu0 0.0
    %2063 = vmatpush.msra.mxu0 0.0
    %2064 = vmatpush.msra.mxu0 0.0
    %2065 = vmatpush.msra.mxu0 0.0
    %2066 = vmatpush.msra.mxu0 0.0
    %2067 = vmatpush.msra.mxu0 0.0
    %2068 = vmatpush.msra.mxu0 0.0
    %2069 = vmatpush.msra.mxu0 0.0
    %2070 = vmatpush.msra.mxu0 0.0
    %2071 = vmatpush.msra.mxu0 0.0
    %2072 = vmatpush.msra.mxu0 %v1918
    %2073 = vmatpush.msra.mxu0 %v1917
    %2074 = vmatpush.msra.mxu0 %v1916
    %2075 = vmatpush.msra.mxu0 %v1915
    %2076 = vmatmul.f32.gmra.mxu0 %v1812
    %v2077 = vpop.f32.mrf.mxu0
    %v2078 = vadd.f32 %v1949, %v2077
    %2079 = vdwg.mxu0
    %2080 = vmatpush.msra.mxu0 0.0
    %2081 = vmatpush.msra.mxu0 0.0
    %2082 = vmatpush.msra.mxu0 0.0
    %2083 = vmatpush.msra.mxu0 0.0
    %2084 = vmatpush.msra.mxu0 0.0
    %2085 = vmatpush.msra.mxu0 0.0
    %2086 = vmatpush.msra.mxu0 0.0
    %2087 = vmatpush.msra.mxu0 0.0
    %2088 = vmatpush.msra.mxu0 0.0
    %2089 = vmatpush.msra.mxu0 0.0
    %2090 = vmatpush.msra.mxu0 0.0
    %2091 = vmatpush.msra.mxu0 0.0
    %2092 = vmatpush.msra.mxu0 %v1922
    %2093 = vmatpush.msra.mxu0 %v1921
    %2094 = vmatpush.msra.mxu0 %v1920
    %2095 = vmatpush.msra.mxu0 %v1919
    %2096 = vmatmul.f32.gmra.mxu0 %v1812
    %v2097 = vpop.f32.mrf.mxu0
    %v2098 = vadd.f32 %v1950, %v2097
    %2099 = vdwg.mxu0
    %2100 = vmatpush.msra.mxu0 0.0
    %2101 = vmatpush.msra.mxu0 0.0
    %2102 = vmatpush.msra.mxu0 0.0
    %2103 = vmatpush.msra.mxu0 0.0
    %2104 = vmatpush.msra.mxu0 0.0
    %2105 = vmatpush.msra.mxu0 0.0
    %2106 = vmatpush.msra.mxu0 0.0
    %2107 = vmatpush.msra.mxu0 0.0
    %2108 = vmatpush.msra.mxu0 0.0
    %2109 = vmatpush.msra.mxu0 0.0
    %2110 = vmatpush.msra.mxu0 0.0
    %2111 = vmatpush.msra.mxu0 0.0
    %2112 = vmatpush.msra.mxu0 %v1926
    %2113 = vmatpush.msra.mxu0 %v1925
    %2114 = vmatpush.msra.mxu0 %v1924
    %2115 = vmatpush.msra.mxu0 %v1923
    %2116 = vmatmul.f32.gmra.mxu0 %v1812
    %v2117 = vpop.f32.mrf.mxu0
    %v2118 = vadd.f32 %v1951, %v2117
    %2119 = vdwg.mxu0
    %s2120 = scalar_lea.vmem %s4, 256
    %v2121 = vld [vmem:[%s2120] sm:$0xff]
    %v2122 = vld [vmem:[%s2120 + $0x8] sm:$0xff]
    %v2123 = vld [vmem:[%s2120 + $0x10] sm:$0xff]
    %v2124 = vld [vmem:[%s2120 + $0x18] sm:$0xff]
    %v2125 = vld [vmem:[%s2120 + $0x20] sm:$0xff]
    %v2126 = vld [vmem:[%s2120 + $0x28] sm:$0xff]
    %v2127 = vld [vmem:[%s2120 + $0x30] sm:$0xff]
    %v2128 = vld [vmem:[%s2120 + $0x38] sm:$0xff]
    %v2129 = vld [vmem:[%s2120 + $0x40] sm:$0xff]
    %v2130 = vld [vmem:[%s2120 + $0x48] sm:$0xff]
    %v2131 = vld [vmem:[%s2120 + $0x50] sm:$0xff]
    %v2132 = vld [vmem:[%s2120 + $0x58] sm:$0xff]
    %v2133 = vld [vmem:[%s2120 + $0x60] sm:$0xff]
    %v2134 = vld [vmem:[%s2120 + $0x68] sm:$0xff]
    %v2135 = vld [vmem:[%s2120 + $0x70] sm:$0xff]
    %v2136 = vld [vmem:[%s2120 + $0x78] sm:$0xff]
    %v2137 = vld [vmem:[%s2120 + $0x80] sm:$0xff]
    %v2138 = vld [vmem:[%s2120 + $0x88] sm:$0xff]
    %v2139 = vld [vmem:[%s2120 + $0x90] sm:$0xff]
    %v2140 = vld [vmem:[%s2120 + $0x98] sm:$0xff]
    %v2141 = vld [vmem:[%s2120 + $0xa0] sm:$0xff]
    %v2142 = vld [vmem:[%s2120 + $0xa8] sm:$0xff]
    %v2143 = vld [vmem:[%s2120 + $0xb0] sm:$0xff]
    %v2144 = vld [vmem:[%s2120 + $0xb8] sm:$0xff]
    %v2145 = vld [vmem:[%s2120 + $0xc0] sm:$0xff]
    %v2146 = vld [vmem:[%s2120 + $0xc8] sm:$0xff]
    %v2147 = vld [vmem:[%s2120 + $0xd0] sm:$0xff]
    %v2148 = vld [vmem:[%s2120 + $0xd8] sm:$0xff]
    %v2149 = vld [vmem:[%s2120 + $0xe0] sm:$0xff]
    %v2150 = vld [vmem:[%s2120 + $0xe8] sm:$0xff]
    %v2151 = vld [vmem:[%s2120 + $0xf0] sm:$0xff]
    %v2152 = vld [vmem:[%s2120 + $0xf8] sm:$0xff]
    %s2153 = scalar_lea.vmem %s7, 8
    %v2154 = vld [vmem:[%s2153] sm:$0x1]
    %v2155 = vld [vmem:[%s2153 + $0x1] sm:$0x1]
    %v2156 = vld [vmem:[%s2153 + $0x2] sm:$0x1]
    %v2157 = vld [vmem:[%s2153 + $0x3] sm:$0x1]
    %v2158 = vld [vmem:[%s2153 + $0x4] sm:$0x1]
    %v2159 = vld [vmem:[%s2153 + $0x5] sm:$0x1]
    %v2160 = vld [vmem:[%s2153 + $0x6] sm:$0x1]
    %v2161 = vld [vmem:[%s2153 + $0x7] sm:$0x1]
    %v2170 = vperm.slane %v2154, 0
    %v2171 = vperm.slane %v2155, 0
    %v2172 = vperm.slane %v2156, 0
    %v2173 = vperm.slane %v2157, 0
    %v2174 = vperm.slane %v2158, 0
    %v2175 = vperm.slane %v2159, 0
    %v2176 = vperm.slane %v2160, 0
    %v2177 = vperm.slane %v2161, 0
    %2186 = vmatpush.msra.mxu0 0.0
    %2187 = vmatpush.msra.mxu0 0.0
    %2188 = vmatpush.msra.mxu0 0.0
    %2189 = vmatpush.msra.mxu0 0.0
    %2190 = vmatpush.msra.mxu0 0.0
    %2191 = vmatpush.msra.mxu0 0.0
    %2192 = vmatpush.msra.mxu0 0.0
    %2193 = vmatpush.msra.mxu0 0.0
    %2194 = vmatpush.msra.mxu0 0.0
    %2195 = vmatpush.msra.mxu0 0.0
    %2196 = vmatpush.msra.mxu0 0.0
    %2197 = vmatpush.msra.mxu0 0.0
    %2198 = vmatpush.msra.mxu0 %v2124
    %2199 = vmatpush.msra.mxu0 %v2123
    %2200 = vmatpush.msra.mxu0 %v2122
    %2201 = vmatpush.msra.mxu0 %v2121
    %2202 = vmatmul.f32.gmra.mxu0 %v1729
    %v2203 = vpop.f32.mrf.mxu0
    %v2204 = vadd.f32 %v2170, %v2203
    %2205 = vdwg.mxu0
    %2206 = vmatpush.msra.mxu0 0.0
    %2207 = vmatpush.msra.mxu0 0.0
    %2208 = vmatpush.msra.mxu0 0.0
    %2209 = vmatpush.msra.mxu0 0.0
    %2210 = vmatpush.msra.mxu0 0.0
    %2211 = vmatpush.msra.mxu0 0.0
    %2212 = vmatpush.msra.mxu0 0.0
    %2213 = vmatpush.msra.mxu0 0.0
    %2214 = vmatpush.msra.mxu0 0.0
    %2215 = vmatpush.msra.mxu0 0.0
    %2216 = vmatpush.msra.mxu0 0.0
    %2217 = vmatpush.msra.mxu0 0.0
    %2218 = vmatpush.msra.mxu0 %v2128
    %2219 = vmatpush.msra.mxu0 %v2127
    %2220 = vmatpush.msra.mxu0 %v2126
    %2221 = vmatpush.msra.mxu0 %v2125
    %2222 = vmatmul.f32.gmra.mxu0 %v1729
    %v2223 = vpop.f32.mrf.mxu0
    %v2224 = vadd.f32 %v2171, %v2223
    %2225 = vdwg.mxu0
    %2226 = vmatpush.msra.mxu0 0.0
    %2227 = vmatpush.msra.mxu0 0.0
    %2228 = vmatpush.msra.mxu0 0.0
    %2229 = vmatpush.msra.mxu0 0.0
    %2230 = vmatpush.msra.mxu0 0.0
    %2231 = vmatpush.msra.mxu0 0.0
    %2232 = vmatpush.msra.mxu0 0.0
    %2233 = vmatpush.msra.mxu0 0.0
    %2234 = vmatpush.msra.mxu0 0.0
    %2235 = vmatpush.msra.mxu0 0.0
    %2236 = vmatpush.msra.mxu0 0.0
    %2237 = vmatpush.msra.mxu0 0.0
    %2238 = vmatpush.msra.mxu0 %v2132
    %2239 = vmatpush.msra.mxu0 %v2131
    %2240 = vmatpush.msra.mxu0 %v2130
    %2241 = vmatpush.msra.mxu0 %v2129
    %2242 = vmatmul.f32.gmra.mxu0 %v1729
    %v2243 = vpop.f32.mrf.mxu0
    %v2244 = vadd.f32 %v2172, %v2243
    %2245 = vdwg.mxu0
    %2246 = vmatpush.msra.mxu0 0.0
    %2247 = vmatpush.msra.mxu0 0.0
    %2248 = vmatpush.msra.mxu0 0.0
    %2249 = vmatpush.msra.mxu0 0.0
    %2250 = vmatpush.msra.mxu0 0.0
    %2251 = vmatpush.msra.mxu0 0.0
    %2252 = vmatpush.msra.mxu0 0.0
    %2253 = vmatpush.msra.mxu0 0.0
    %2254 = vmatpush.msra.mxu0 0.0
    %2255 = vmatpush.msra.mxu0 0.0
    %2256 = vmatpush.msra.mxu0 0.0
    %2257 = vmatpush.msra.mxu0 0.0
    %2258 = vmatpush.msra.mxu0 %v2136
    %2259 = vmatpush.msra.mxu0 %v2135
    %2260 = vmatpush.msra.mxu0 %v2134
    %2261 = vmatpush.msra.mxu0 %v2133
    %2262 = vmatmul.f32.gmra.mxu0 %v1729
    %v2263 = vpop.f32.mrf.mxu0
    %v2264 = vadd.f32 %v2173, %v2263
    %2265 = vdwg.mxu0
    %2266 = vmatpush.msra.mxu0 0.0
    %2267 = vmatpush.msra.mxu0 0.0
    %2268 = vmatpush.msra.mxu0 0.0
    %2269 = vmatpush.msra.mxu0 0.0
    %2270 = vmatpush.msra.mxu0 0.0
    %2271 = vmatpush.msra.mxu0 0.0
    %2272 = vmatpush.msra.mxu0 0.0
    %2273 = vmatpush.msra.mxu0 0.0
    %2274 = vmatpush.msra.mxu0 0.0
    %2275 = vmatpush.msra.mxu0 0.0
    %2276 = vmatpush.msra.mxu0 0.0
    %2277 = vmatpush.msra.mxu0 0.0
    %2278 = vmatpush.msra.mxu0 %v2140
    %2279 = vmatpush.msra.mxu0 %v2139
    %2280 = vmatpush.msra.mxu0 %v2138
    %2281 = vmatpush.msra.mxu0 %v2137
    %2282 = vmatmul.f32.gmra.mxu0 %v1812
    %v2283 = vpop.f32.mrf.mxu0
    %v2284 = vadd.f32 %v2174, %v2283
    %2285 = vdwg.mxu0
    %2286 = vmatpush.msra.mxu0 0.0
    %2287 = vmatpush.msra.mxu0 0.0
    %2288 = vmatpush.msra.mxu0 0.0
    %2289 = vmatpush.msra.mxu0 0.0
    %2290 = vmatpush.msra.mxu0 0.0
    %2291 = vmatpush.msra.mxu0 0.0
    %2292 = vmatpush.msra.mxu0 0.0
    %2293 = vmatpush.msra.mxu0 0.0
    %2294 = vmatpush.msra.mxu0 0.0
    %2295 = vmatpush.msra.mxu0 0.0
    %2296 = vmatpush.msra.mxu0 0.0
    %2297 = vmatpush.msra.mxu0 0.0
    %2298 = vmatpush.msra.mxu0 %v2144
    %2299 = vmatpush.msra.mxu0 %v2143
    %2300 = vmatpush.msra.mxu0 %v2142
    %2301 = vmatpush.msra.mxu0 %v2141
    %2302 = vmatmul.f32.gmra.mxu0 %v1812
    %v2303 = vpop.f32.mrf.mxu0
    %v2304 = vadd.f32 %v2175, %v2303
    %2305 = vdwg.mxu0
    %2306 = vmatpush.msra.mxu0 0.0
    %2307 = vmatpush.msra.mxu0 0.0
    %2308 = vmatpush.msra.mxu0 0.0
    %2309 = vmatpush.msra.mxu0 0.0
    %2310 = vmatpush.msra.mxu0 0.0
    %2311 = vmatpush.msra.mxu0 0.0
    %2312 = vmatpush.msra.mxu0 0.0
    %2313 = vmatpush.msra.mxu0 0.0
    %2314 = vmatpush.msra.mxu0 0.0
    %2315 = vmatpush.msra.mxu0 0.0
    %2316 = vmatpush.msra.mxu0 0.0
    %2317 = vmatpush.msra.mxu0 0.0
    %2318 = vmatpush.msra.mxu0 %v2148
    %2319 = vmatpush.msra.mxu0 %v2147
    %2320 = vmatpush.msra.mxu0 %v2146
    %2321 = vmatpush.msra.mxu0 %v2145
    %2322 = vmatmul.f32.gmra.mxu0 %v1812
    %v2323 = vpop.f32.mrf.mxu0
    %v2324 = vadd.f32 %v2176, %v2323
    %2325 = vdwg.mxu0
    %2326 = vmatpush.msra.mxu0 0.0
    %2327 = vmatpush.msra.mxu0 0.0
    %2328 = vmatpush.msra.mxu0 0.0
    %2329 = vmatpush.msra.mxu0 0.0
    %2330 = vmatpush.msra.mxu0 0.0
    %2331 = vmatpush.msra.mxu0 0.0
    %2332 = vmatpush.msra.mxu0 0.0
    %2333 = vmatpush.msra.mxu0 0.0
    %2334 = vmatpush.msra.mxu0 0.0
    %2335 = vmatpush.msra.mxu0 0.0
    %2336 = vmatpush.msra.mxu0 0.0
    %2337 = vmatpush.msra.mxu0 0.0
    %2338 = vmatpush.msra.mxu0 %v2152
    %2339 = vmatpush.msra.mxu0 %v2151
    %2340 = vmatpush.msra.mxu0 %v2150
    %2341 = vmatpush.msra.mxu0 %v2149
    %2342 = vmatmul.f32.gmra.mxu0 %v1812
    %v2343 = vpop.f32.mrf.mxu0
    %v2344 = vadd.f32 %v2177, %v2343
    %2345 = vdwg.mxu0
    %v2347 = vsel %vm757, %v1749, 0
    %v2350 = vsel %vm757, %v1978, 0
    %2352 = vmatpush.xpose.msra.mxu0 0.0
    %2353 = vmatpush.xpose.msra.mxu0 0.0
    %2354 = vmatpush.xpose.msra.mxu0 0.0
    %2355 = vmatpush.xpose.msra.mxu0 0.0
    %2356 = vmatpush.xpose.msra.mxu0 0.0
    %2357 = vmatpush.xpose.msra.mxu0 0.0
    %2358 = vmatpush.xpose.msra.mxu0 0.0
    %2359 = vmatpush.xpose.msra.mxu0 0.0
    %2360 = vmatpush.xpose.msra.mxu0 0.0
    %2361 = vmatpush.xpose.msra.mxu0 0.0
    %2362 = vmatpush.xpose.msra.mxu0 0.0
    %2363 = vmatpush.xpose.msra.mxu0 0.0
    %2364 = vmatpush.xpose.msra.mxu0 0.0
    %2365 = vmatpush.xpose.msra.mxu0 0.0
    %2366 = vmatpush.xpose.msra.mxu0 0.0
    %2367 = vmatpush.xpose.msra.mxu0 %v2350
    %2368 = vmatmul.f32.gmra.mxu0 %v2347
    %v2369 = vpop.f32.mrf.mxu0
    %v2370 = vadd.f32 0.0, %v2369
    %2371 = vdwg.mxu0
    %v2373 = vsel %vm757, %v1769, 0
    %v2376 = vsel %vm757, %v1998, 0
    %2378 = vmatpush.xpose.msra.mxu0 0.0
    %2379 = vmatpush.xpose.msra.mxu0 0.0
    %2380 = vmatpush.xpose.msra.mxu0 0.0
    %2381 = vmatpush.xpose.msra.mxu0 0.0
    %2382 = vmatpush.xpose.msra.mxu0 0.0
    %2383 = vmatpush.xpose.msra.mxu0 0.0
    %2384 = vmatpush.xpose.msra.mxu0 0.0
    %2385 = vmatpush.xpose.msra.mxu0 0.0
    %2386 = vmatpush.xpose.msra.mxu0 0.0
    %2387 = vmatpush.xpose.msra.mxu0 0.0
    %2388 = vmatpush.xpose.msra.mxu0 0.0
    %2389 = vmatpush.xpose.msra.mxu0 0.0
    %2390 = vmatpush.xpose.msra.mxu0 0.0
    %2391 = vmatpush.xpose.msra.mxu0 0.0
    %2392 = vmatpush.xpose.msra.mxu0 0.0
    %2393 = vmatpush.xpose.msra.mxu0 %v2376
    %2394 = vmatmul.f32.gmra.mxu0 %v2373
    %v2395 = vpop.f32.mrf.mxu0
    %v2396 = vadd.f32 0.0, %v2395
    %2397 = vdwg.mxu0
    %v2399 = vsel %vm757, %v1789, 0
    %v2402 = vsel %vm757, %v2018, 0
    %2404 = vmatpush.xpose.msra.mxu0 0.0
    %2405 = vmatpush.xpose.msra.mxu0 0.0
    %2406 = vmatpush.xpose.msra.mxu0 0.0
    %2407 = vmatpush.xpose.msra.mxu0 0.0
    %2408 = vmatpush.xpose.msra.mxu0 0.0
    %2409 = vmatpush.xpose.msra.mxu0 0.0
    %2410 = vmatpush.xpose.msra.mxu0 0.0
    %2411 = vmatpush.xpose.msra.mxu0 0.0
    %2412 = vmatpush.xpose.msra.mxu0 0.0
    %2413 = vmatpush.xpose.msra.mxu0 0.0
    %2414 = vmatpush.xpose.msra.mxu0 0.0
    %2415 = vmatpush.xpose.msra.mxu0 0.0
    %2416 = vmatpush.xpose.msra.mxu0 0.0
    %2417 = vmatpush.xpose.msra.mxu0 0.0
    %2418 = vmatpush.xpose.msra.mxu0 0.0
    %2419 = vmatpush.xpose.msra.mxu0 %v2402
    %2420 = vmatmul.f32.gmra.mxu0 %v2399
    %v2421 = vpop.f32.mrf.mxu0
    %v2422 = vadd.f32 0.0, %v2421
    %2423 = vdwg.mxu0
    %v2425 = vsel %vm757, %v1809, 0
    %v2428 = vsel %vm757, %v2038, 0
    %2430 = vmatpush.xpose.msra.mxu0 0.0
    %2431 = vmatpush.xpose.msra.mxu0 0.0
    %2432 = vmatpush.xpose.msra.mxu0 0.0
    %2433 = vmatpush.xpose.msra.mxu0 0.0
    %2434 = vmatpush.xpose.msra.mxu0 0.0
    %2435 = vmatpush.xpose.msra.mxu0 0.0
    %2436 = vmatpush.xpose.msra.mxu0 0.0
    %2437 = vmatpush.xpose.msra.mxu0 0.0
    %2438 = vmatpush.xpose.msra.mxu0 0.0
    %2439 = vmatpush.xpose.msra.mxu0 0.0
    %2440 = vmatpush.xpose.msra.mxu0 0.0
    %2441 = vmatpush.xpose.msra.mxu0 0.0
    %2442 = vmatpush.xpose.msra.mxu0 0.0
    %2443 = vmatpush.xpose.msra.mxu0 0.0
    %2444 = vmatpush.xpose.msra.mxu0 0.0
    %2445 = vmatpush.xpose.msra.mxu0 %v2428
    %2446 = vmatmul.f32.gmra.mxu0 %v2425
    %v2447 = vpop.f32.mrf.mxu0
    %v2448 = vadd.f32 0.0, %v2447
    %2449 = vdwg.mxu0
    %v2451 = vsel %vm757, %v1832, 0
    %v2454 = vsel %vm757, %v2058, 0
    %2456 = vmatpush.xpose.msra.mxu0 0.0
    %2457 = vmatpush.xpose.msra.mxu0 0.0
    %2458 = vmatpush.xpose.msra.mxu0 0.0
    %2459 = vmatpush.xpose.msra.mxu0 0.0
    %2460 = vmatpush.xpose.msra.mxu0 0.0
    %2461 = vmatpush.xpose.msra.mxu0 0.0
    %2462 = vmatpush.xpose.msra.mxu0 0.0
    %2463 = vmatpush.xpose.msra.mxu0 0.0
    %2464 = vmatpush.xpose.msra.mxu0 0.0
    %2465 = vmatpush.xpose.msra.mxu0 0.0
    %2466 = vmatpush.xpose.msra.mxu0 0.0
    %2467 = vmatpush.xpose.msra.mxu0 0.0
    %2468 = vmatpush.xpose.msra.mxu0 0.0
    %2469 = vmatpush.xpose.msra.mxu0 0.0
    %2470 = vmatpush.xpose.msra.mxu0 0.0
    %2471 = vmatpush.xpose.msra.mxu0 %v2454
    %2472 = vmatmul.f32.gmra.mxu0 %v2451
    %v2473 = vpop.f32.mrf.mxu0
    %v2474 = vadd.f32 0.0, %v2473
    %2475 = vdwg.mxu0
    %v2477 = vsel %vm757, %v1852, 0
    %v2480 = vsel %vm757, %v2078, 0
    %2482 = vmatpush.xpose.msra.mxu0 0.0
    %2483 = vmatpush.xpose.msra.mxu0 0.0
    %2484 = vmatpush.xpose.msra.mxu0 0.0
    %2485 = vmatpush.xpose.msra.mxu0 0.0
    %2486 = vmatpush.xpose.msra.mxu0 0.0
    %2487 = vmatpush.xpose.msra.mxu0 0.0
    %2488 = vmatpush.xpose.msra.mxu0 0.0
    %2489 = vmatpush.xpose.msra.mxu0 0.0
    %2490 = vmatpush.xpose.msra.mxu0 0.0
    %2491 = vmatpush.xpose.msra.mxu0 0.0
    %2492 = vmatpush.xpose.msra.mxu0 0.0
    %2493 = vmatpush.xpose.msra.mxu0 0.0
    %2494 = vmatpush.xpose.msra.mxu0 0.0
    %2495 = vmatpush.xpose.msra.mxu0 0.0
    %2496 = vmatpush.xpose.msra.mxu0 0.0
    %2497 = vmatpush.xpose.msra.mxu0 %v2480
    %2498 = vmatmul.f32.gmra.mxu0 %v2477
    %v2499 = vpop.f32.mrf.mxu0
    %v2500 = vadd.f32 0.0, %v2499
    %2501 = vdwg.mxu0
    %v2503 = vsel %vm757, %v1872, 0
    %v2506 = vsel %vm757, %v2098, 0
    %2508 = vmatpush.xpose.msra.mxu0 0.0
    %2509 = vmatpush.xpose.msra.mxu0 0.0
    %2510 = vmatpush.xpose.msra.mxu0 0.0
    %2511 = vmatpush.xpose.msra.mxu0 0.0
    %2512 = vmatpush.xpose.msra.mxu0 0.0
    %2513 = vmatpush.xpose.msra.mxu0 0.0
    %2514 = vmatpush.xpose.msra.mxu0 0.0
    %2515 = vmatpush.xpose.msra.mxu0 0.0
    %2516 = vmatpush.xpose.msra.mxu0 0.0
    %2517 = vmatpush.xpose.msra.mxu0 0.0
    %2518 = vmatpush.xpose.msra.mxu0 0.0
    %2519 = vmatpush.xpose.msra.mxu0 0.0
    %2520 = vmatpush.xpose.msra.mxu0 0.0
    %2521 = vmatpush.xpose.msra.mxu0 0.0
    %2522 = vmatpush.xpose.msra.mxu0 0.0
    %2523 = vmatpush.xpose.msra.mxu0 %v2506
    %2524 = vmatmul.f32.gmra.mxu0 %v2503
    %v2525 = vpop.f32.mrf.mxu0
    %v2526 = vadd.f32 0.0, %v2525
    %2527 = vdwg.mxu0
    %v2529 = vsel %vm757, %v1892, 0
    %v2532 = vsel %vm757, %v2118, 0
    %2534 = vmatpush.xpose.msra.mxu0 0.0
    %2535 = vmatpush.xpose.msra.mxu0 0.0
    %2536 = vmatpush.xpose.msra.mxu0 0.0
    %2537 = vmatpush.xpose.msra.mxu0 0.0
    %2538 = vmatpush.xpose.msra.mxu0 0.0
    %2539 = vmatpush.xpose.msra.mxu0 0.0
    %2540 = vmatpush.xpose.msra.mxu0 0.0
    %2541 = vmatpush.xpose.msra.mxu0 0.0
    %2542 = vmatpush.xpose.msra.mxu0 0.0
    %2543 = vmatpush.xpose.msra.mxu0 0.0
    %2544 = vmatpush.xpose.msra.mxu0 0.0
    %2545 = vmatpush.xpose.msra.mxu0 0.0
    %2546 = vmatpush.xpose.msra.mxu0 0.0
    %2547 = vmatpush.xpose.msra.mxu0 0.0
    %2548 = vmatpush.xpose.msra.mxu0 0.0
    %2549 = vmatpush.xpose.msra.mxu0 %v2532
    %2550 = vmatmul.f32.gmra.mxu0 %v2529
    %v2551 = vpop.f32.mrf.mxu0
    %v2552 = vadd.f32 0.0, %v2551
    %2553 = vdwg.mxu0
    %v2554 = vmul.f32 %v2370, 0.35355338
    %v2555 = vmul.f32 %v2396, 0.35355338
    %v2556 = vmul.f32 %v2422, 0.35355338
    %v2557 = vmul.f32 %v2448, 0.35355338
    %v2558 = vmul.f32 %v2474, 0.35355338
    %v2559 = vmul.f32 %v2500, 0.35355338
    %v2560 = vmul.f32 %v2526, 0.35355338
    %v2561 = vmul.f32 %v2552, 0.35355338
    %v2562 = vsel %vm757, %v2554, -inf
    %2563 = vmax.xlane.f32.xlu0 %v2562
    %v2564 = vpop.xlane.xlu0 %2563
    %v2565 = vsel %vm757, %v2555, -inf
    %2566 = vmax.xlane.f32.xlu0 %v2565
    %v2567 = vpop.xlane.xlu0 %2566
    %v2568 = vsel %vm757, %v2556, -inf
    %2569 = vmax.xlane.f32.xlu0 %v2568
    %v2570 = vpop.xlane.xlu0 %2569
    %v2571 = vsel %vm757, %v2557, -inf
    %2572 = vmax.xlane.f32.xlu0 %v2571
    %v2573 = vpop.xlane.xlu0 %2572
    %v2574 = vsel %vm757, %v2558, -inf
    %2575 = vmax.xlane.f32.xlu0 %v2574
    %v2576 = vpop.xlane.xlu0 %2575
    %v2577 = vsel %vm757, %v2559, -inf
    %2578 = vmax.xlane.f32.xlu0 %v2577
    %v2579 = vpop.xlane.xlu0 %2578
    %v2580 = vsel %vm757, %v2560, -inf
    %2581 = vmax.xlane.f32.xlu0 %v2580
    %v2582 = vpop.xlane.xlu0 %2581
    %v2583 = vsel %vm757, %v2561, -inf
    %2584 = vmax.xlane.f32.xlu0 %v2583
    %v2585 = vpop.xlane.xlu0 %2584
    %v2586 = vsub.f32 %v2554, %v2564
    %v2587 = vsub.f32 %v2555, %v2567
    %v2588 = vsub.f32 %v2556, %v2570
    %v2589 = vsub.f32 %v2557, %v2573
    %v2590 = vsub.f32 %v2558, %v2576
    %v2591 = vsub.f32 %v2559, %v2579
    %v2592 = vsub.f32 %v2560, %v2582
    %v2593 = vsub.f32 %v2561, %v2585
    %v2594 = vmul.f32 %v2586, 1.442695
    %v2595 = vpow.pop %v2594
    %v2596 = vmul.f32 %v2587, 1.442695
    %v2597 = vpow.pop %v2596
    %v2598 = vmul.f32 %v2588, 1.442695
    %v2599 = vpow.pop %v2598
    %v2600 = vmul.f32 %v2589, 1.442695
    %v2601 = vpow.pop %v2600
    %v2602 = vmul.f32 %v2590, 1.442695
    %v2603 = vpow.pop %v2602
    %v2604 = vmul.f32 %v2591, 1.442695
    %v2605 = vpow.pop %v2604
    %v2606 = vmul.f32 %v2592, 1.442695
    %v2607 = vpow.pop %v2606
    %v2608 = vmul.f32 %v2593, 1.442695
    %v2609 = vpow.pop %v2608
    %v2610 = vsel %vm757, %v2595, 0.0
    %2611 = vadd.xlane.f32.xlu0 %v2610
    %v2612 = vpop.xlane.xlu0 %2611
    %v2613 = vsel %vm757, %v2597, 0.0
    %2614 = vadd.xlane.f32.xlu0 %v2613
    %v2615 = vpop.xlane.xlu0 %2614
    %v2616 = vsel %vm757, %v2599, 0.0
    %2617 = vadd.xlane.f32.xlu0 %v2616
    %v2618 = vpop.xlane.xlu0 %2617
    %v2619 = vsel %vm757, %v2601, 0.0
    %2620 = vadd.xlane.f32.xlu0 %v2619
    %v2621 = vpop.xlane.xlu0 %2620
    %v2622 = vsel %vm757, %v2603, 0.0
    %2623 = vadd.xlane.f32.xlu0 %v2622
    %v2624 = vpop.xlane.xlu0 %2623
    %v2625 = vsel %vm757, %v2605, 0.0
    %2626 = vadd.xlane.f32.xlu0 %v2625
    %v2627 = vpop.xlane.xlu0 %2626
    %v2628 = vsel %vm757, %v2607, 0.0
    %2629 = vadd.xlane.f32.xlu0 %v2628
    %v2630 = vpop.xlane.xlu0 %2629
    %v2631 = vsel %vm757, %v2609, 0.0
    %2632 = vadd.xlane.f32.xlu0 %v2631
    %v2633 = vpop.xlane.xlu0 %2632
    %v2634 = vrcp.pop %v2612
    %v2635 = vrcp.pop %v2615
    %v2636 = vrcp.pop %v2618
    %v2637 = vrcp.pop %v2621
    %v2638 = vrcp.pop %v2624
    %v2639 = vrcp.pop %v2627
    %v2640 = vrcp.pop %v2630
    %v2641 = vrcp.pop %v2633
    %v2642 = vmul.f32 %v2595, %v2634
    %v2643 = vmul.f32 %v2597, %v2635
    %v2644 = vmul.f32 %v2599, %v2636
    %v2645 = vmul.f32 %v2601, %v2637
    %v2646 = vmul.f32 %v2603, %v2638
    %v2647 = vmul.f32 %v2605, %v2639
    %v2648 = vmul.f32 %v2607, %v2640
    %v2649 = vmul.f32 %v2609, %v2641
    %v2651 = vsel %vm757, %v2642, 0
    %2653 = vmatpush.msra.mxu0 0.0
    %2654 = vmatpush.msra.mxu0 0.0
    %2655 = vmatpush.msra.mxu0 0.0
    %2656 = vmatpush.msra.mxu0 0.0
    %2657 = vmatpush.msra.mxu0 0.0
    %2658 = vmatpush.msra.mxu0 0.0
    %2659 = vmatpush.msra.mxu0 0.0
    %2660 = vmatpush.msra.mxu0 0.0
    %2661 = vmatpush.msra.mxu0 0.0
    %2662 = vmatpush.msra.mxu0 0.0
    %2663 = vmatpush.msra.mxu0 0.0
    %2664 = vmatpush.msra.mxu0 0.0
    %2665 = vmatpush.msra.mxu0 0.0
    %2666 = vmatpush.msra.mxu0 0.0
    %2667 = vmatpush.msra.mxu0 0.0
    %2668 = vmatpush.msra.mxu0 %v2204
    %2669 = vmatmul.f32.gmra.mxu0 %v2651
    %v2670 = vpop.f32.mrf.mxu0
    %v2671 = vadd.f32 0.0, %v2670
    %2672 = vdwg.mxu0
    %v2674 = vsel %vm757, %v2643, 0
    %2676 = vmatpush.msra.mxu0 0.0
    %2677 = vmatpush.msra.mxu0 0.0
    %2678 = vmatpush.msra.mxu0 0.0
    %2679 = vmatpush.msra.mxu0 0.0
    %2680 = vmatpush.msra.mxu0 0.0
    %2681 = vmatpush.msra.mxu0 0.0
    %2682 = vmatpush.msra.mxu0 0.0
    %2683 = vmatpush.msra.mxu0 0.0
    %2684 = vmatpush.msra.mxu0 0.0
    %2685 = vmatpush.msra.mxu0 0.0
    %2686 = vmatpush.msra.mxu0 0.0
    %2687 = vmatpush.msra.mxu0 0.0
    %2688 = vmatpush.msra.mxu0 0.0
    %2689 = vmatpush.msra.mxu0 0.0
    %2690 = vmatpush.msra.mxu0 0.0
    %2691 = vmatpush.msra.mxu0 %v2224
    %2692 = vmatmul.f32.gmra.mxu0 %v2674
    %v2693 = vpop.f32.mrf.mxu0
    %v2694 = vadd.f32 0.0, %v2693
    %2695 = vdwg.mxu0
    %v2697 = vsel %vm757, %v2644, 0
    %2699 = vmatpush.msra.mxu0 0.0
    %2700 = vmatpush.msra.mxu0 0.0
    %2701 = vmatpush.msra.mxu0 0.0
    %2702 = vmatpush.msra.mxu0 0.0
    %2703 = vmatpush.msra.mxu0 0.0
    %2704 = vmatpush.msra.mxu0 0.0
    %2705 = vmatpush.msra.mxu0 0.0
    %2706 = vmatpush.msra.mxu0 0.0
    %2707 = vmatpush.msra.mxu0 0.0
    %2708 = vmatpush.msra.mxu0 0.0
    %2709 = vmatpush.msra.mxu0 0.0
    %2710 = vmatpush.msra.mxu0 0.0
    %2711 = vmatpush.msra.mxu0 0.0
    %2712 = vmatpush.msra.mxu0 0.0
    %2713 = vmatpush.msra.mxu0 0.0
    %2714 = vmatpush.msra.mxu0 %v2244
    %2715 = vmatmul.f32.gmra.mxu0 %v2697
    %v2716 = vpop.f32.mrf.mxu0
    %v2717 = vadd.f32 0.0, %v2716
    %2718 = vdwg.mxu0
    %v2720 = vsel %vm757, %v2645, 0
    %2722 = vmatpush.msra.mxu0 0.0
    %2723 = vmatpush.msra.mxu0 0.0
    %2724 = vmatpush.msra.mxu0 0.0
    %2725 = vmatpush.msra.mxu0 0.0
    %2726 = vmatpush.msra.mxu0 0.0
    %2727 = vmatpush.msra.mxu0 0.0
    %2728 = vmatpush.msra.mxu0 0.0
    %2729 = vmatpush.msra.mxu0 0.0
    %2730 = vmatpush.msra.mxu0 0.0
    %2731 = vmatpush.msra.mxu0 0.0
    %2732 = vmatpush.msra.mxu0 0.0
    %2733 = vmatpush.msra.mxu0 0.0
    %2734 = vmatpush.msra.mxu0 0.0
    %2735 = vmatpush.msra.mxu0 0.0
    %2736 = vmatpush.msra.mxu0 0.0
    %2737 = vmatpush.msra.mxu0 %v2264
    %2738 = vmatmul.f32.gmra.mxu0 %v2720
    %v2739 = vpop.f32.mrf.mxu0
    %v2740 = vadd.f32 0.0, %v2739
    %2741 = vdwg.mxu0
    %v2743 = vsel %vm757, %v2646, 0
    %2745 = vmatpush.msra.mxu0 0.0
    %2746 = vmatpush.msra.mxu0 0.0
    %2747 = vmatpush.msra.mxu0 0.0
    %2748 = vmatpush.msra.mxu0 0.0
    %2749 = vmatpush.msra.mxu0 0.0
    %2750 = vmatpush.msra.mxu0 0.0
    %2751 = vmatpush.msra.mxu0 0.0
    %2752 = vmatpush.msra.mxu0 0.0
    %2753 = vmatpush.msra.mxu0 0.0
    %2754 = vmatpush.msra.mxu0 0.0
    %2755 = vmatpush.msra.mxu0 0.0
    %2756 = vmatpush.msra.mxu0 0.0
    %2757 = vmatpush.msra.mxu0 0.0
    %2758 = vmatpush.msra.mxu0 0.0
    %2759 = vmatpush.msra.mxu0 0.0
    %2760 = vmatpush.msra.mxu0 %v2284
    %2761 = vmatmul.f32.gmra.mxu0 %v2743
    %v2762 = vpop.f32.mrf.mxu0
    %v2763 = vadd.f32 0.0, %v2762
    %2764 = vdwg.mxu0
    %v2766 = vsel %vm757, %v2647, 0
    %2768 = vmatpush.msra.mxu0 0.0
    %2769 = vmatpush.msra.mxu0 0.0
    %2770 = vmatpush.msra.mxu0 0.0
    %2771 = vmatpush.msra.mxu0 0.0
    %2772 = vmatpush.msra.mxu0 0.0
    %2773 = vmatpush.msra.mxu0 0.0
    %2774 = vmatpush.msra.mxu0 0.0
    %2775 = vmatpush.msra.mxu0 0.0
    %2776 = vmatpush.msra.mxu0 0.0
    %2777 = vmatpush.msra.mxu0 0.0
    %2778 = vmatpush.msra.mxu0 0.0
    %2779 = vmatpush.msra.mxu0 0.0
    %2780 = vmatpush.msra.mxu0 0.0
    %2781 = vmatpush.msra.mxu0 0.0
    %2782 = vmatpush.msra.mxu0 0.0
    %2783 = vmatpush.msra.mxu0 %v2304
    %2784 = vmatmul.f32.gmra.mxu0 %v2766
    %v2785 = vpop.f32.mrf.mxu0
    %v2786 = vadd.f32 0.0, %v2785
    %2787 = vdwg.mxu0
    %v2789 = vsel %vm757, %v2648, 0
    %2791 = vmatpush.msra.mxu0 0.0
    %2792 = vmatpush.msra.mxu0 0.0
    %2793 = vmatpush.msra.mxu0 0.0
    %2794 = vmatpush.msra.mxu0 0.0
    %2795 = vmatpush.msra.mxu0 0.0
    %2796 = vmatpush.msra.mxu0 0.0
    %2797 = vmatpush.msra.mxu0 0.0
    %2798 = vmatpush.msra.mxu0 0.0
    %2799 = vmatpush.msra.mxu0 0.0
    %2800 = vmatpush.msra.mxu0 0.0
    %2801 = vmatpush.msra.mxu0 0.0
    %2802 = vmatpush.msra.mxu0 0.0
    %2803 = vmatpush.msra.mxu0 0.0
    %2804 = vmatpush.msra.mxu0 0.0
    %2805 = vmatpush.msra.mxu0 0.0
    %2806 = vmatpush.msra.mxu0 %v2324
    %2807 = vmatmul.f32.gmra.mxu0 %v2789
    %v2808 = vpop.f32.mrf.mxu0
    %v2809 = vadd.f32 0.0, %v2808
    %2810 = vdwg.mxu0
    %v2812 = vsel %vm757, %v2649, 0
    %2814 = vmatpush.msra.mxu0 0.0
    %2815 = vmatpush.msra.mxu0 0.0
    %2816 = vmatpush.msra.mxu0 0.0
    %2817 = vmatpush.msra.mxu0 0.0
    %2818 = vmatpush.msra.mxu0 0.0
    %2819 = vmatpush.msra.mxu0 0.0
    %2820 = vmatpush.msra.mxu0 0.0
    %2821 = vmatpush.msra.mxu0 0.0
    %2822 = vmatpush.msra.mxu0 0.0
    %2823 = vmatpush.msra.mxu0 0.0
    %2824 = vmatpush.msra.mxu0 0.0
    %2825 = vmatpush.msra.mxu0 0.0
    %2826 = vmatpush.msra.mxu0 0.0
    %2827 = vmatpush.msra.mxu0 0.0
    %2828 = vmatpush.msra.mxu0 0.0
    %2829 = vmatpush.msra.mxu0 %v2344
    %2830 = vmatmul.f32.gmra.mxu0 %v2812
    %v2831 = vpop.f32.mrf.mxu0
    %v2832 = vadd.f32 0.0, %v2831
    %2833 = vdwg.mxu0
    %s2834 = scalar_lea.vmem %s8, 64
    %v2835 = vld [vmem:[%s2834] sm:$0xff]
    %v2836 = vld [vmem:[%s2834 + $0x8] sm:$0xff]
    %v2837 = vld [vmem:[%s2834 + $0x10] sm:$0xff]
    %v2838 = vld [vmem:[%s2834 + $0x18] sm:$0xff]
    %v2839 = vld [vmem:[%s2834 + $0x20] sm:$0xff]
    %v2840 = vld [vmem:[%s2834 + $0x28] sm:$0xff]
    %v2841 = vld [vmem:[%s2834 + $0x30] sm:$0xff]
    %v2842 = vld [vmem:[%s2834 + $0x38] sm:$0xff]
    %v2844 = vsel %vm757, %v2671, 0
    %2846 = vmatpush.msra.mxu0 0.0
    %2847 = vmatpush.msra.mxu0 0.0
    %2848 = vmatpush.msra.mxu0 0.0
    %2849 = vmatpush.msra.mxu0 0.0
    %2850 = vmatpush.msra.mxu0 0.0
    %2851 = vmatpush.msra.mxu0 0.0
    %2852 = vmatpush.msra.mxu0 0.0
    %2853 = vmatpush.msra.mxu0 0.0
    %2854 = vmatpush.msra.mxu0 0.0
    %2855 = vmatpush.msra.mxu0 0.0
    %2856 = vmatpush.msra.mxu0 0.0
    %2857 = vmatpush.msra.mxu0 0.0
    %2858 = vmatpush.msra.mxu0 0.0
    %2859 = vmatpush.msra.mxu0 0.0
    %2860 = vmatpush.msra.mxu0 0.0
    %2861 = vmatpush.msra.mxu0 %v2835
    %2862 = vmatmul.f32.gmra.mxu0 %v2844
    %v2863 = vpop.f32.mrf.mxu0
    %v2864 = vadd.f32 0.0, %v2863
    %2865 = vdwg.mxu0
    %v2867 = vsel %vm757, %v2694, 0
    %2869 = vmatpush.msra.mxu0 0.0
    %2870 = vmatpush.msra.mxu0 0.0
    %2871 = vmatpush.msra.mxu0 0.0
    %2872 = vmatpush.msra.mxu0 0.0
    %2873 = vmatpush.msra.mxu0 0.0
    %2874 = vmatpush.msra.mxu0 0.0
    %2875 = vmatpush.msra.mxu0 0.0
    %2876 = vmatpush.msra.mxu0 0.0
    %2877 = vmatpush.msra.mxu0 0.0
    %2878 = vmatpush.msra.mxu0 0.0
    %2879 = vmatpush.msra.mxu0 0.0
    %2880 = vmatpush.msra.mxu0 0.0
    %2881 = vmatpush.msra.mxu0 0.0
    %2882 = vmatpush.msra.mxu0 0.0
    %2883 = vmatpush.msra.mxu0 0.0
    %2884 = vmatpush.msra.mxu0 %v2836
    %2885 = vmatmul.f32.gmra.mxu0 %v2867
    %v2886 = vpop.f32.mrf.mxu0
    %v2887 = vadd.f32 0.0, %v2886
    %2888 = vdwg.mxu0
    %v2890 = vsel %vm757, %v2717, 0
    %2892 = vmatpush.msra.mxu0 0.0
    %2893 = vmatpush.msra.mxu0 0.0
    %2894 = vmatpush.msra.mxu0 0.0
    %2895 = vmatpush.msra.mxu0 0.0
    %2896 = vmatpush.msra.mxu0 0.0
    %2897 = vmatpush.msra.mxu0 0.0
    %2898 = vmatpush.msra.mxu0 0.0
    %2899 = vmatpush.msra.mxu0 0.0
    %2900 = vmatpush.msra.mxu0 0.0
    %2901 = vmatpush.msra.mxu0 0.0
    %2902 = vmatpush.msra.mxu0 0.0
    %2903 = vmatpush.msra.mxu0 0.0
    %2904 = vmatpush.msra.mxu0 0.0
    %2905 = vmatpush.msra.mxu0 0.0
    %2906 = vmatpush.msra.mxu0 0.0
    %2907 = vmatpush.msra.mxu0 %v2837
    %2908 = vmatmul.f32.gmra.mxu0 %v2890
    %v2909 = vpop.f32.mrf.mxu0
    %v2910 = vadd.f32 0.0, %v2909
    %2911 = vdwg.mxu0
    %v2913 = vsel %vm757, %v2740, 0
    %2915 = vmatpush.msra.mxu0 0.0
    %2916 = vmatpush.msra.mxu0 0.0
    %2917 = vmatpush.msra.mxu0 0.0
    %2918 = vmatpush.msra.mxu0 0.0
    %2919 = vmatpush.msra.mxu0 0.0
    %2920 = vmatpush.msra.mxu0 0.0
    %2921 = vmatpush.msra.mxu0 0.0
    %2922 = vmatpush.msra.mxu0 0.0
    %2923 = vmatpush.msra.mxu0 0.0
    %2924 = vmatpush.msra.mxu0 0.0
    %2925 = vmatpush.msra.mxu0 0.0
    %2926 = vmatpush.msra.mxu0 0.0
    %2927 = vmatpush.msra.mxu0 0.0
    %2928 = vmatpush.msra.mxu0 0.0
    %2929 = vmatpush.msra.mxu0 0.0
    %2930 = vmatpush.msra.mxu0 %v2838
    %2931 = vmatmul.f32.gmra.mxu0 %v2913
    %v2932 = vpop.f32.mrf.mxu0
    %v2933 = vadd.f32 0.0, %v2932
    %2934 = vdwg.mxu0
    %v2936 = vsel %vm757, %v2763, 0
    %2938 = vmatpush.msra.mxu0 0.0
    %2939 = vmatpush.msra.mxu0 0.0
    %2940 = vmatpush.msra.mxu0 0.0
    %2941 = vmatpush.msra.mxu0 0.0
    %2942 = vmatpush.msra.mxu0 0.0
    %2943 = vmatpush.msra.mxu0 0.0
    %2944 = vmatpush.msra.mxu0 0.0
    %2945 = vmatpush.msra.mxu0 0.0
    %2946 = vmatpush.msra.mxu0 0.0
    %2947 = vmatpush.msra.mxu0 0.0
    %2948 = vmatpush.msra.mxu0 0.0
    %2949 = vmatpush.msra.mxu0 0.0
    %2950 = vmatpush.msra.mxu0 0.0
    %2951 = vmatpush.msra.mxu0 0.0
    %2952 = vmatpush.msra.mxu0 0.0
    %2953 = vmatpush.msra.mxu0 %v2839
    %2954 = vmatmul.f32.gmra.mxu0 %v2936
    %v2955 = vpop.f32.mrf.mxu0
    %v2956 = vadd.f32 0.0, %v2955
    %2957 = vdwg.mxu0
    %v2959 = vsel %vm757, %v2786, 0
    %2961 = vmatpush.msra.mxu0 0.0
    %2962 = vmatpush.msra.mxu0 0.0
    %2963 = vmatpush.msra.mxu0 0.0
    %2964 = vmatpush.msra.mxu0 0.0
    %2965 = vmatpush.msra.mxu0 0.0
    %2966 = vmatpush.msra.mxu0 0.0
    %2967 = vmatpush.msra.mxu0 0.0
    %2968 = vmatpush.msra.mxu0 0.0
    %2969 = vmatpush.msra.mxu0 0.0
    %2970 = vmatpush.msra.mxu0 0.0
    %2971 = vmatpush.msra.mxu0 0.0
    %2972 = vmatpush.msra.mxu0 0.0
    %2973 = vmatpush.msra.mxu0 0.0
    %2974 = vmatpush.msra.mxu0 0.0
    %2975 = vmatpush.msra.mxu0 0.0
    %2976 = vmatpush.msra.mxu0 %v2840
    %2977 = vmatmul.f32.gmra.mxu0 %v2959
    %v2978 = vpop.f32.mrf.mxu0
    %v2979 = vadd.f32 0.0, %v2978
    %2980 = vdwg.mxu0
    %v2982 = vsel %vm757, %v2809, 0
    %2984 = vmatpush.msra.mxu0 0.0
    %2985 = vmatpush.msra.mxu0 0.0
    %2986 = vmatpush.msra.mxu0 0.0
    %2987 = vmatpush.msra.mxu0 0.0
    %2988 = vmatpush.msra.mxu0 0.0
    %2989 = vmatpush.msra.mxu0 0.0
    %2990 = vmatpush.msra.mxu0 0.0
    %2991 = vmatpush.msra.mxu0 0.0
    %2992 = vmatpush.msra.mxu0 0.0
    %2993 = vmatpush.msra.mxu0 0.0
    %2994 = vmatpush.msra.mxu0 0.0
    %2995 = vmatpush.msra.mxu0 0.0
    %2996 = vmatpush.msra.mxu0 0.0
    %2997 = vmatpush.msra.mxu0 0.0
    %2998 = vmatpush.msra.mxu0 0.0
    %2999 = vmatpush.msra.mxu0 %v2841
    %3000 = vmatmul.f32.gmra.mxu0 %v2982
    %v3001 = vpop.f32.mrf.mxu0
    %v3002 = vadd.f32 0.0, %v3001
    %3003 = vdwg.mxu0
    %v3005 = vsel %vm757, %v2832, 0
    %3007 = vmatpush.msra.mxu0 0.0
    %3008 = vmatpush.msra.mxu0 0.0
    %3009 = vmatpush.msra.mxu0 0.0
    %3010 = vmatpush.msra.mxu0 0.0
    %3011 = vmatpush.msra.mxu0 0.0
    %3012 = vmatpush.msra.mxu0 0.0
    %3013 = vmatpush.msra.mxu0 0.0
    %3014 = vmatpush.msra.mxu0 0.0
    %3015 = vmatpush.msra.mxu0 0.0
    %3016 = vmatpush.msra.mxu0 0.0
    %3017 = vmatpush.msra.mxu0 0.0
    %3018 = vmatpush.msra.mxu0 0.0
    %3019 = vmatpush.msra.mxu0 0.0
    %3020 = vmatpush.msra.mxu0 0.0
    %3021 = vmatpush.msra.mxu0 0.0
    %3022 = vmatpush.msra.mxu0 %v2842
    %3023 = vmatmul.f32.gmra.mxu0 %v3005
    %v3024 = vpop.f32.mrf.mxu0
    %v3025 = vadd.f32 0.0, %v3024
    %3026 = vdwg.mxu0
    %v3027 = vsel %vm142, %v2864, 0.0
    %v3028 = vsel %vm142, %v2887, 0.0
    %v3029 = vadd.f32 %v3027, %v3028
    %v3030 = vsel %vm142, %v2910, 0.0
    %v3031 = vadd.f32 %v3029, %v3030
    %v3032 = vsel %vm142, %v2933, 0.0
    %v3033 = vadd.f32 %v3031, %v3032
    %v3034 = vsel %vm142, %v2956, 0.0
    %v3035 = vsel %vm142, %v2979, 0.0
    %v3036 = vadd.f32 %v3034, %v3035
    %v3037 = vsel %vm142, %v3002, 0.0
    %v3038 = vadd.f32 %v3036, %v3037
    %v3039 = vsel %vm142, %v3025, 0.0
    %v3040 = vadd.f32 %v3038, %v3039
    %s3041 = scalar_lea.vmem %s9, 1
    %v3042 = vld [vmem:[%s3041] sm:$0x1]
    %v3044 = vperm.slane %v3042, 0
    %v3046 = vadd.f32 %v3033, %v3044
    %v3047 = vadd.f32 %v3040, %v3044
    %v3048 = vadd.f32 %v1660, %v3046
    %v3049 = vadd.f32 %v1661, %v3047
    %s3050 = scalar_lea.vmem %s10, 1
    %v3051 = vld [vmem:[%s3050] sm:$0x1]
    %s3052 = scalar_lea.vmem %s11, 1
    %v3053 = vld [vmem:[%s3052] sm:$0x1]
    %v3054 = vsel %vm142, %v3048, 0.0
    %3055 = vadd.xlane.f32.xlu0 %v3054
    %v3056 = vpop.xlane.xlu0 %3055
    %v3057 = vsel %vm142, %v3049, 0.0
    %3058 = vadd.xlane.f32.xlu0 %v3057
    %v3059 = vpop.xlane.xlu0 %3058
    %v3060 = vmul.f32 %v3056, %v1474
    %v3061 = vmul.f32 %v3059, %v1474
    %v3062 = vsub.f32 %v3048, %v3060
    %v3063 = vsub.f32 %v3049, %v3061
    %v3064 = vmul.f32 %v3062, %v3062
    %v3065 = vmul.f32 %v3063, %v3063
    %v3066 = vsel %vm142, %v3064, 0.0
    %3067 = vadd.xlane.f32.xlu0 %v3066
    %v3068 = vpop.xlane.xlu0 %3067
    %v3069 = vsel %vm142, %v3065, 0.0
    %3070 = vadd.xlane.f32.xlu0 %v3069
    %v3071 = vpop.xlane.xlu0 %3070
    %v3072 = vmul.f32 %v3068, %v1474
    %v3073 = vmul.f32 %v3071, %v1474
    %v3074 = vadd.f32 %v3072, 1e-05
    %v3075 = vadd.f32 %v3073, 1e-05
    %v3076 = vrsqrt.pop %v3074
    %v3077 = vmul.f32 %v3076, %v3074
    %v3078 = vmul.f32 %v3077, %v3076
    %v3079 = vmul.f32 0.5, %v3078
    %v3080 = vsub.f32 1.5, %v3079
    %v3081 = vmul.f32 %v3076, %v3080
    %vm3082 = vweird.f32 %v3074
    %vm3083 = vweird.f32 %v3076
    %vm3084 = vmor %vm3082, %vm3083
    %v3085 = vsel %vm3084, %v3076, %v3081
    %v3086 = vrsqrt.pop %v3075
    %v3087 = vmul.f32 %v3086, %v3075
    %v3088 = vmul.f32 %v3087, %v3086
    %v3089 = vmul.f32 0.5, %v3088
    %v3090 = vsub.f32 1.5, %v3089
    %v3091 = vmul.f32 %v3086, %v3090
    %vm3092 = vweird.f32 %v3075
    %vm3093 = vweird.f32 %v3086
    %vm3094 = vmor %vm3092, %vm3093
    %v3095 = vsel %vm3094, %v3086, %v3091
    %v3096 = vmul.f32 %v3062, %v3085
    %v3097 = vmul.f32 %v3063, %v3095
    %v3099 = vperm.slane %v3051, 0
    %v3101 = vmul.f32 %v3096, %v3099
    %v3102 = vmul.f32 %v3097, %v3099
    %v3104 = vperm.slane %v3053, 0
    %v3106 = vadd.f32 %v3101, %v3104
    %v3107 = vadd.f32 %v3102, %v3104
    %s3108 = scalar_lea.vmem %s12, 32
    %v3109 = vld [vmem:[%s3108] sm:$0xff]
    %v3110 = vld [vmem:[%s3108 + $0x8] sm:$0xff]
    %v3111 = vld [vmem:[%s3108 + $0x10] sm:$0xff]
    %v3112 = vld [vmem:[%s3108 + $0x18] sm:$0xff]
    %s3113 = scalar_lea.vmem %s13, 1
    %v3114 = vld [vmem:[%s3113] sm:$0x1]
    %v3116 = vperm.slane %v3114, 0
    %v3119 = vsel %vm142, %v3106, 0
    %v3122 = vsel %vm142, %v3107, 0
    %3124 = vmatpush.msra.mxu0 0.0
    %3125 = vmatpush.msra.mxu0 0.0
    %3126 = vmatpush.msra.mxu0 0.0
    %3127 = vmatpush.msra.mxu0 0.0
    %3128 = vmatpush.msra.mxu0 0.0
    %3129 = vmatpush.msra.mxu0 0.0
    %3130 = vmatpush.msra.mxu0 0.0
    %3131 = vmatpush.msra.mxu0 0.0
    %3132 = vmatpush.msra.mxu0 0.0
    %3133 = vmatpush.msra.mxu0 0.0
    %3134 = vmatpush.msra.mxu0 0.0
    %3135 = vmatpush.msra.mxu0 0.0
    %3136 = vmatpush.msra.mxu0 %v3112
    %3137 = vmatpush.msra.mxu0 %v3111
    %3138 = vmatpush.msra.mxu0 %v3110
    %3139 = vmatpush.msra.mxu0 %v3109
    %3140 = vmatmul.f32.gmra.mxu0 %v3119
    %v3141 = vpop.f32.mrf.mxu0
    %v3142 = vadd.f32 %v3116, %v3141
    %3143 = vmatmul.f32.gmra.mxu0 %v3122
    %v3144 = vpop.f32.mrf.mxu0
    %v3145 = vadd.f32 %v3116, %v3144
    %3146 = vdwg.mxu0
    %v3147 = vmax.f32 %v3142, 0.0
    %v3148 = vmax.f32 %v3145, 0.0
    %s3149 = scalar_lea.vmem %s14, 64
    %v3150 = vld [vmem:[%s3149] sm:$0xff]
    %v3151 = vld [vmem:[%s3149 + $0x8] sm:$0xff]
    %v3152 = vld [vmem:[%s3149 + $0x10] sm:$0xff]
    %v3153 = vld [vmem:[%s3149 + $0x18] sm:$0xff]
    %v3154 = vld [vmem:[%s3149 + $0x20] sm:$0xff]
    %v3155 = vld [vmem:[%s3149 + $0x28] sm:$0xff]
    %v3156 = vld [vmem:[%s3149 + $0x30] sm:$0xff]
    %v3157 = vld [vmem:[%s3149 + $0x38] sm:$0xff]
    %s3158 = scalar_lea.vmem %s15, 1
    %v3159 = vld [vmem:[%s3158] sm:$0x1]
    %v3161 = vperm.slane %v3159, 0
    %v3164 = vsel %vm1574, %v3147, 0
    %v3167 = vsel %vm1574, %v3148, 0
    %3169 = vmatpush.msra.mxu0 0.0
    %3170 = vmatpush.msra.mxu0 0.0
    %3171 = vmatpush.msra.mxu0 0.0
    %3172 = vmatpush.msra.mxu0 0.0
    %3173 = vmatpush.msra.mxu0 0.0
    %3174 = vmatpush.msra.mxu0 0.0
    %3175 = vmatpush.msra.mxu0 0.0
    %3176 = vmatpush.msra.mxu0 0.0
    %3177 = vmatpush.msra.mxu0 %v3157
    %3178 = vmatpush.msra.mxu0 %v3156
    %3179 = vmatpush.msra.mxu0 %v3155
    %3180 = vmatpush.msra.mxu0 %v3154
    %3181 = vmatpush.msra.mxu0 %v3153
    %3182 = vmatpush.msra.mxu0 %v3152
    %3183 = vmatpush.msra.mxu0 %v3151
    %3184 = vmatpush.msra.mxu0 %v3150
    %3185 = vmatmul.f32.gmra.mxu0 %v3164
    %v3186 = vpop.f32.mrf.mxu0
    %v3187 = vadd.f32 %v3161, %v3186
    %3188 = vmatmul.f32.gmra.mxu0 %v3167
    %v3189 = vpop.f32.mrf.mxu0
    %v3190 = vadd.f32 %v3161, %v3189
    %3191 = vdwg.mxu0
    %v3192 = vadd.f32 %v3106, %v3187
    %v3193 = vadd.f32 %v3107, %v3190
    %s3194 = scalar_lea.vmem %s16, 1
    %v3195 = vld [vmem:[%s3194] sm:$0x1]
    %s3196 = scalar_lea.vmem %s17, 1
    %v3197 = vld [vmem:[%s3196] sm:$0x1]
    %v3198 = vsel %vm142, %v3192, 0.0
    %3199 = vadd.xlane.f32.xlu0 %v3198
    %v3200 = vpop.xlane.xlu0 %3199
    %v3201 = vsel %vm142, %v3193, 0.0
    %3202 = vadd.xlane.f32.xlu0 %v3201
    %v3203 = vpop.xlane.xlu0 %3202
    %v3204 = vmul.f32 %v3200, %v1474
    %v3205 = vmul.f32 %v3203, %v1474
    %v3206 = vsub.f32 %v3192, %v3204
    %v3207 = vsub.f32 %v3193, %v3205
    %v3208 = vmul.f32 %v3206, %v3206
    %v3209 = vmul.f32 %v3207, %v3207
    %v3210 = vsel %vm142, %v3208, 0.0
    %3211 = vadd.xlane.f32.xlu0 %v3210
    %v3212 = vpop.xlane.xlu0 %3211
    %v3213 = vsel %vm142, %v3209, 0.0
    %3214 = vadd.xlane.f32.xlu0 %v3213
    %v3215 = vpop.xlane.xlu0 %3214
    %v3216 = vmul.f32 %v3212, %v1474
    %v3217 = vmul.f32 %v3215, %v1474
    %v3218 = vadd.f32 %v3216, 1e-05
    %v3219 = vadd.f32 %v3217, 1e-05
    %v3220 = vrsqrt.pop %v3218
    %v3221 = vmul.f32 %v3220, %v3218
    %v3222 = vmul.f32 %v3221, %v3220
    %v3223 = vmul.f32 0.5, %v3222
    %v3224 = vsub.f32 1.5, %v3223
    %v3225 = vmul.f32 %v3220, %v3224
    %vm3226 = vweird.f32 %v3218
    %vm3227 = vweird.f32 %v3220
    %vm3228 = vmor %vm3226, %vm3227
    %v3229 = vsel %vm3228, %v3220, %v3225
    %v3230 = vrsqrt.pop %v3219
    %v3231 = vmul.f32 %v3230, %v3219
    %v3232 = vmul.f32 %v3231, %v3230
    %v3233 = vmul.f32 0.5, %v3232
    %v3234 = vsub.f32 1.5, %v3233
    %v3235 = vmul.f32 %v3230, %v3234
    %vm3236 = vweird.f32 %v3219
    %vm3237 = vweird.f32 %v3230
    %vm3238 = vmor %vm3236, %vm3237
    %v3239 = vsel %vm3238, %v3230, %v3235
    %v3240 = vmul.f32 %v3206, %v3229
    %v3241 = vmul.f32 %v3207, %v3239
    %v3243 = vperm.slane %v3195, 0
    %v3245 = vmul.f32 %v3240, %v3243
    %v3246 = vmul.f32 %v3241, %v3243
    %v3248 = vperm.slane %v3197, 0
    %v3250 = vadd.f32 %v3245, %v3248
    %v3251 = vadd.f32 %v3246, %v3248
    %v3252 = vld [vmem:[%s19] sm:$0x1]
    %v3254 = vperm.slane %v3252, 0
    %v3256 = vadd.f32 %v3254, 0.0
    %v3257 = vld [vmem:[%s18] sm:$0xff]
    %v3258 = vld [vmem:[%s18 + $0x8] sm:$0xff]
    %v3259 = vld [vmem:[%s18 + $0x10] sm:$0xff]
    %v3260 = vld [vmem:[%s18 + $0x18] sm:$0xff]
    %v3263 = vrot.slane %v3251, 7
    %vm3264 = vcmask 1041409
    %v3265 = vsel %vm3264, %v3263, %v3250
    %v3266 = vsel %vm142, %v3265, 0
    %3268 = vmatpush.msra.mxu0 0.0
    %3269 = vmatpush.msra.mxu0 0.0
    %3270 = vmatpush.msra.mxu0 0.0
    %3271 = vmatpush.msra.mxu0 0.0
    %3272 = vmatpush.msra.mxu0 0.0
    %3273 = vmatpush.msra.mxu0 0.0
    %3274 = vmatpush.msra.mxu0 0.0
    %3275 = vmatpush.msra.mxu0 0.0
    %3276 = vmatpush.msra.mxu0 0.0
    %3277 = vmatpush.msra.mxu0 0.0
    %3278 = vmatpush.msra.mxu0 0.0
    %3279 = vmatpush.msra.mxu0 0.0
    %3280 = vmatpush.msra.mxu0 %v3260
    %3281 = vmatpush.msra.mxu0 %v3259
    %3282 = vmatpush.msra.mxu0 %v3258
    %3283 = vmatpush.msra.mxu0 %v3257
    %3284 = vmatmul.f32.gmra.mxu0 %v3266
    %v3285 = vpop.f32.mrf.mxu0
    %v3286 = vadd.f32 0.0, %v3285
    %3287 = vdwg.mxu0
    %v3288 = vadd.f32 %v3256, %v3286
    %s3289 = scalar_lea.vmem %s18, 32
    %v3290 = vld [vmem:[%s3289] sm:$0xff]
    %v3291 = vld [vmem:[%s3289 + $0x8] sm:$0xff]
    %v3292 = vld [vmem:[%s3289 + $0x10] sm:$0xff]
    %v3293 = vld [vmem:[%s3289 + $0x18] sm:$0xff]
    %v3294 = vrot.slane %v3250, 1
    %v3295 = vsel %vm3264, %v3251, %v3294
    %v3296 = vsel %vm142, %v3295, 0
    %3298 = vmatpush.msra.mxu0 0.0
    %3299 = vmatpush.msra.mxu0 0.0
    %3300 = vmatpush.msra.mxu0 0.0
    %3301 = vmatpush.msra.mxu0 0.0
    %3302 = vmatpush.msra.mxu0 0.0
    %3303 = vmatpush.msra.mxu0 0.0
    %3304 = vmatpush.msra.mxu0 0.0
    %3305 = vmatpush.msra.mxu0 0.0
    %3306 = vmatpush.msra.mxu0 0.0
    %3307 = vmatpush.msra.mxu0 0.0
    %3308 = vmatpush.msra.mxu0 0.0
    %3309 = vmatpush.msra.mxu0 0.0
    %3310 = vmatpush.msra.mxu0 %v3293
    %3311 = vmatpush.msra.mxu0 %v3292
    %3312 = vmatpush.msra.mxu0 %v3291
    %3313 = vmatpush.msra.mxu0 %v3290
    %3314 = vmatmul.f32.gmra.mxu0 %v3296
    %v3315 = vpop.f32.mrf.mxu0
    %v3316 = vadd.f32 0.0, %v3315
    %3317 = vdwg.mxu0
    %v3318 = vadd.f32 %v3288, %v3316
    %s3319 = scalar_lea.vmem %s18, 64
    %v3320 = vld [vmem:[%s3319] sm:$0xff]
    %v3321 = vld [vmem:[%s3319 + $0x8] sm:$0xff]
    %v3322 = vld [vmem:[%s3319 + $0x10] sm:$0xff]
    %v3323 = vld [vmem:[%s3319 + $0x18] sm:$0xff]
    %v3324 = vrot.slane %v3250, 2
    %v3325 = vrot.slane %v3251, 1
    %v3326 = vsel %vm3264, %v3325, %v3324
    %v3327 = vsel %vm142, %v3326, 0
    %3329 = vmatpush.msra.mxu0 0.0
    %3330 = vmatpush.msra.mxu0 0.0
    %3331 = vmatpush.msra.mxu0 0.0
    %3332 = vmatpush.msra.mxu0 0.0
    %3333 = vmatpush.msra.mxu0 0.0
    %3334 = vmatpush.msra.mxu0 0.0
    %3335 = vmatpush.msra.mxu0 0.0
    %3336 = vmatpush.msra.mxu0 0.0
    %3337 = vmatpush.msra.mxu0 0.0
    %3338 = vmatpush.msra.mxu0 0.0
    %3339 = vmatpush.msra.mxu0 0.0
    %3340 = vmatpush.msra.mxu0 0.0
    %3341 = vmatpush.msra.mxu0 %v3323
    %3342 = vmatpush.msra.mxu0 %v3322
    %3343 = vmatpush.msra.mxu0 %v3321
    %3344 = vmatpush.msra.mxu0 %v3320
    %3345 = vmatmul.f32.gmra.mxu0 %v3327
    %v3346 = vpop.f32.mrf.mxu0
    %v3347 = vadd.f32 0.0, %v3346
    %3348 = vdwg.mxu0
    %v3349 = vadd.f32 %v3318, %v3347
    %s3350 = scalar_lea.vmem %s18, 96
    %v3351 = vld [vmem:[%s3350] sm:$0xff]
    %v3352 = vld [vmem:[%s3350 + $0x8] sm:$0xff]
    %v3353 = vld [vmem:[%s3350 + $0x10] sm:$0xff]
    %v3354 = vld [vmem:[%s3350 + $0x18] sm:$0xff]
    %v3355 = vrot.slane %v3250, 3
    %v3356 = vrot.slane %v3251, 2
    %v3357 = vsel %vm3264, %v3356, %v3355
    %v3358 = vsel %vm142, %v3357, 0
    %3360 = vmatpush.msra.mxu0 0.0
    %3361 = vmatpush.msra.mxu0 0.0
    %3362 = vmatpush.msra.mxu0 0.0
    %3363 = vmatpush.msra.mxu0 0.0
    %3364 = vmatpush.msra.mxu0 0.0
    %3365 = vmatpush.msra.mxu0 0.0
    %3366 = vmatpush.msra.mxu0 0.0
    %3367 = vmatpush.msra.mxu0 0.0
    %3368 = vmatpush.msra.mxu0 0.0
    %3369 = vmatpush.msra.mxu0 0.0
    %3370 = vmatpush.msra.mxu0 0.0
    %3371 = vmatpush.msra.mxu0 0.0
    %3372 = vmatpush.msra.mxu0 %v3354
    %3373 = vmatpush.msra.mxu0 %v3353
    %3374 = vmatpush.msra.mxu0 %v3352
    %3375 = vmatpush.msra.mxu0 %v3351
    %3376 = vmatmul.f32.gmra.mxu0 %v3358
    %v3377 = vpop.f32.mrf.mxu0
    %v3378 = vadd.f32 0.0, %v3377
    %3379 = vdwg.mxu0
    %v3380 = vadd.f32 %v3349, %v3378
    %s3381 = scalar_lea.vmem %s18, 128
    %v3382 = vld [vmem:[%s3381] sm:$0xff]
    %v3383 = vld [vmem:[%s3381 + $0x8] sm:$0xff]
    %v3384 = vld [vmem:[%s3381 + $0x10] sm:$0xff]
    %v3385 = vld [vmem:[%s3381 + $0x18] sm:$0xff]
    %v3386 = vrot.slane %v3250, 4
    %v3387 = vrot.slane %v3251, 3
    %v3388 = vsel %vm3264, %v3387, %v3386
    %v3389 = vsel %vm142, %v3388, 0
    %3391 = vmatpush.msra.mxu0 0.0
    %3392 = vmatpush.msra.mxu0 0.0
    %3393 = vmatpush.msra.mxu0 0.0
    %3394 = vmatpush.msra.mxu0 0.0
    %3395 = vmatpush.msra.mxu0 0.0
    %3396 = vmatpush.msra.mxu0 0.0
    %3397 = vmatpush.msra.mxu0 0.0
    %3398 = vmatpush.msra.mxu0 0.0
    %3399 = vmatpush.msra.mxu0 0.0
    %3400 = vmatpush.msra.mxu0 0.0
    %3401 = vmatpush.msra.mxu0 0.0
    %3402 = vmatpush.msra.mxu0 0.0
    %3403 = vmatpush.msra.mxu0 %v3385
    %3404 = vmatpush.msra.mxu0 %v3384
    %3405 = vmatpush.msra.mxu0 %v3383
    %3406 = vmatpush.msra.mxu0 %v3382
    %3407 = vmatmul.f32.gmra.mxu0 %v3389
    %v3408 = vpop.f32.mrf.mxu0
    %v3409 = vadd.f32 0.0, %v3408
    %3410 = vdwg.mxu0
    %v3411 = vadd.f32 %v3380, %v3409
    %s3412 = scalar_lea.vmem %s18, 160
    %v3413 = vld [vmem:[%s3412] sm:$0xff]
    %v3414 = vld [vmem:[%s3412 + $0x8] sm:$0xff]
    %v3415 = vld [vmem:[%s3412 + $0x10] sm:$0xff]
    %v3416 = vld [vmem:[%s3412 + $0x18] sm:$0xff]
    %v3417 = vrot.slane %v3250, 5
    %v3418 = vrot.slane %v3251, 4
    %v3419 = vsel %vm3264, %v3418, %v3417
    %v3420 = vsel %vm142, %v3419, 0
    %3422 = vmatpush.msra.mxu0 0.0
    %3423 = vmatpush.msra.mxu0 0.0
    %3424 = vmatpush.msra.mxu0 0.0
    %3425 = vmatpush.msra.mxu0 0.0
    %3426 = vmatpush.msra.mxu0 0.0
    %3427 = vmatpush.msra.mxu0 0.0
    %3428 = vmatpush.msra.mxu0 0.0
    %3429 = vmatpush.msra.mxu0 0.0
    %3430 = vmatpush.msra.mxu0 0.0
    %3431 = vmatpush.msra.mxu0 0.0
    %3432 = vmatpush.msra.mxu0 0.0
    %3433 = vmatpush.msra.mxu0 0.0
    %3434 = vmatpush.msra.mxu0 %v3416
    %3435 = vmatpush.msra.mxu0 %v3415
    %3436 = vmatpush.msra.mxu0 %v3414
    %3437 = vmatpush.msra.mxu0 %v3413
    %3438 = vmatmul.f32.gmra.mxu0 %v3420
    %v3439 = vpop.f32.mrf.mxu0
    %v3440 = vadd.f32 0.0, %v3439
    %3441 = vdwg.mxu0
    %v3442 = vadd.f32 %v3411, %v3440
    %s3443 = scalar_lea.vmem %s18, 192
    %v3444 = vld [vmem:[%s3443] sm:$0xff]
    %v3445 = vld [vmem:[%s3443 + $0x8] sm:$0xff]
    %v3446 = vld [vmem:[%s3443 + $0x10] sm:$0xff]
    %v3447 = vld [vmem:[%s3443 + $0x18] sm:$0xff]
    %v3448 = vrot.slane %v3250, 6
    %v3449 = vrot.slane %v3251, 5
    %v3450 = vsel %vm3264, %v3449, %v3448
    %v3451 = vsel %vm142, %v3450, 0
    %3453 = vmatpush.msra.mxu0 0.0
    %3454 = vmatpush.msra.mxu0 0.0
    %3455 = vmatpush.msra.mxu0 0.0
    %3456 = vmatpush.msra.mxu0 0.0
    %3457 = vmatpush.msra.mxu0 0.0
    %3458 = vmatpush.msra.mxu0 0.0
    %3459 = vmatpush.msra.mxu0 0.0
    %3460 = vmatpush.msra.mxu0 0.0
    %3461 = vmatpush.msra.mxu0 0.0
    %3462 = vmatpush.msra.mxu0 0.0
    %3463 = vmatpush.msra.mxu0 0.0
    %3464 = vmatpush.msra.mxu0 0.0
    %3465 = vmatpush.msra.mxu0 %v3447
    %3466 = vmatpush.msra.mxu0 %v3446
    %3467 = vmatpush.msra.mxu0 %v3445
    %3468 = vmatpush.msra.mxu0 %v3444
    %3469 = vmatmul.f32.gmra.mxu0 %v3451
    %v3470 = vpop.f32.mrf.mxu0
    %v3471 = vadd.f32 0.0, %v3470
    %3472 = vdwg.mxu0
    %v3473 = vadd.f32 %v3442, %v3471
    %s3474 = scalar_lea.vmem %s18, 224
    %v3475 = vld [vmem:[%s3474] sm:$0xff]
    %v3476 = vld [vmem:[%s3474 + $0x8] sm:$0xff]
    %v3477 = vld [vmem:[%s3474 + $0x10] sm:$0xff]
    %v3478 = vld [vmem:[%s3474 + $0x18] sm:$0xff]
    %v3479 = vrot.slane %v3250, 7
    %v3480 = vrot.slane %v3251, 6
    %v3481 = vsel %vm3264, %v3480, %v3479
    %v3482 = vsel %vm142, %v3481, 0
    %3484 = vmatpush.msra.mxu0 0.0
    %3485 = vmatpush.msra.mxu0 0.0
    %3486 = vmatpush.msra.mxu0 0.0
    %3487 = vmatpush.msra.mxu0 0.0
    %3488 = vmatpush.msra.mxu0 0.0
    %3489 = vmatpush.msra.mxu0 0.0
    %3490 = vmatpush.msra.mxu0 0.0
    %3491 = vmatpush.msra.mxu0 0.0
    %3492 = vmatpush.msra.mxu0 0.0
    %3493 = vmatpush.msra.mxu0 0.0
    %3494 = vmatpush.msra.mxu0 0.0
    %3495 = vmatpush.msra.mxu0 0.0
    %3496 = vmatpush.msra.mxu0 %v3478
    %3497 = vmatpush.msra.mxu0 %v3477
    %3498 = vmatpush.msra.mxu0 %v3476
    %3499 = vmatpush.msra.mxu0 %v3475
    %3500 = vmatmul.f32.gmra.mxu0 %v3482
    %v3501 = vpop.f32.mrf.mxu0
    %v3502 = vadd.f32 0.0, %v3501
    %3503 = vdwg.mxu0
    %v3504 = vadd.f32 %v3473, %v3502
    %v3505 = vmax.f32 %v3504, 0.0
    %v3506 = vld [vmem:[%s20] sm:$0xff]
    %v3507 = vld [vmem:[%s20 + $0x8] sm:$0xff]
    %v3508 = vld [vmem:[%s21] sm:$0x1]
    %v3510 = vperm.slane %v3508, 0
    %vm3512 = vcmask 130048
    %v3514 = vsel %vm3512, %v3505, 0
    %3516 = vmatpush.msra.mxu0 0.0
    %3517 = vmatpush.msra.mxu0 0.0
    %3518 = vmatpush.msra.mxu0 0.0
    %3519 = vmatpush.msra.mxu0 0.0
    %3520 = vmatpush.msra.mxu0 0.0
    %3521 = vmatpush.msra.mxu0 0.0
    %3522 = vmatpush.msra.mxu0 0.0
    %3523 = vmatpush.msra.mxu0 0.0
    %3524 = vmatpush.msra.mxu0 0.0
    %3525 = vmatpush.msra.mxu0 0.0
    %3526 = vmatpush.msra.mxu0 0.0
    %3527 = vmatpush.msra.mxu0 0.0
    %3528 = vmatpush.msra.mxu0 0.0
    %3529 = vmatpush.msra.mxu0 0.0
    %3530 = vmatpush.msra.mxu0 %v3507
    %3531 = vmatpush.msra.mxu0 %v3506
    %3532 = vmatmul.f32.gmra.mxu0 %v3514
    %v3533 = vpop.f32.mrf.mxu0
    %v3534 = vadd.f32 %v3510, %v3533
    %3535 = vdwg.mxu0
    %vm3536 = vcmask 123904
    %3537 = vst.msk [vmem:[#allocation2] sm:$0x3] %vm3536, %v3534
    // Predicated region
    $region90: #{attention_transformer_encoder.1} parent=1 // pred_check
      _
    $region91: #{attention_transformer_encoder.1} parent=1 // pred_check_branch
      %3539 = sbr.rel (0) target = $region93
    $region92: #{attention_transformer_encoder.1} parent=1 // pred_region
      %3541 = vsyncadd [#allocation3], 0
      %s3543 = sshll.u32 [#allocation2], 4
      %s3544 = int_to_ptr.vmem [resolvable:$true] %s3543
      %s3545 = sshll.u32 %s22, 4
      %s3546 = int_to_ptr.hbm [resolvable:$true] %s3545
      %3548 = dma.vmem_to_hbm [thread:$0]  %s3544, 32, %s3546, [#allocation3]
    $region93: #{attention_transformer_encoder.1} parent=1 // pred_fallthru
      _
    // Predicated region
    $region94: #{attention_transformer_encoder.1} parent=1 // pred_check
      _
    $region95: #{attention_transformer_encoder.1} parent=1 // pred_check_branch
      %3550 = sbr.rel (0) target = $region97
    $region96: #{attention_transformer_encoder.1} parent=1 // pred_region
      %3552 = dma.done [#allocation3], 32
    $region97: #{attention_transformer_encoder.1} parent=1 // pred_fallthru
      _
    %3553 = vsyncpa [#allocation3], 1

</llo_original>
